<compile_context>
chip_gen: v6e
topology: v6e:2x2x1
jax: 0.10.0
libtpu: 0.0.40
codegen_flags: <defaults>
</compile_context>

<pallas_src>
import functools

import jax
import jax.numpy as jnp
from jax.experimental import pallas as pl
from jax.experimental.pallas import tpu as pltpu

VGG_types = {
    "simple": [16, "M", 32, "M", 128],
    "VGG11": [64, "M", 128, "M", 256, 256, "M", 512, 512, "M", 512, 512, "M"],
    "VGG13": [64, 64, "M", 128, 128, "M", 256, 256, "M", 512, 512, "M", 512, 512, "M"],
    "VGG16": [64, 64, "M", 128, 128, "M", 256, 256, 256, "M", 512, 512, 512, "M",
              512, 512, 512, "M"],
    "VGG19": [64, 64, "M", 128, 128, "M", 256, 256, 256, 256, "M",
              512, 512, 512, 512, "M", 512, 512, 512, 512, "M"],
}


# --------------------------------------------------------------------------
# Fused feature extractor: every conv(3x3, s=1, p=1)+ReLU[+maxpool 2x2] of
# the config runs inside one kernel invocation per batch element.
# --------------------------------------------------------------------------
def _features_kernel(x_ref, *refs, cfg):
    convs = [v for v in cfg if v != "M"]
    n_conv = len(convs)
    wb_refs = refs[:2 * n_conv]            # interleaved (w, b) per conv
    o_ref = refs[2 * n_conv]
    pad_refs = refs[2 * n_conv + 1:]       # one padded-activation scratch per conv

    def _pool4(r):
        # r: (Ho, 2, Wo, 2, C) -> (Ho, Wo, C)
        return jnp.maximum(jnp.maximum(r[:, 0, :, 0, :], r[:, 0, :, 1, :]),
                           jnp.maximum(r[:, 1, :, 0, :], r[:, 1, :, 1, :]))

    cur = x_ref[0].astype(jnp.float32)     # (H, W, Cin)
    ci = 0
    i = 0
    while i < len(cfg):
        v = cfg[i]
        if v == "M":                       # standalone pool (not hit by 'simple')
            H, W, C = cur.shape
            cur = _pool4(cur.reshape(H // 2, 2, W // 2, 2, C))
            i += 1
            continue

        w_ref = wb_refs[2 * ci]
        b_ref = wb_refs[2 * ci + 1]
        pad_ref = pad_refs[ci]
        H, W, C = cur.shape
        Cp = pad_ref.shape[-1]
        Cout = v

        # Zero-padded activation in VMEM scratch (pad=1 border + channel pad).
        pad_ref[...] = jnp.zeros_like(pad_ref)
        pad_ref[1:H + 1, 1:W + 1, 0:C] = cur
        xp = pad_ref[...]                                  # (H+2, W+2, Cp)

        # im2col: one (H*W, 9*Cp) patch matrix -> single MXU push.
        taps = [xp[dy:dy + H, dx:dx + W, :].reshape(H * W, Cp)
                for dy in range(3) for dx in range(3)]
        patches = jnp.concatenate(taps, axis=-1)           # (H*W, 9*Cp)
        acc = jnp.dot(patches, w_ref[...],
                      preferred_element_type=jnp.float32)  # (H*W, Cout)
        acc = jnp.maximum(acc + b_ref[...], 0.0)           # bias + ReLU

        if i + 1 < len(cfg) and cfg[i + 1] == "M":
            # Fused 2x2 maxpool on the f32 accumulator.
            cur = _pool4(acc.reshape(H // 2, 2, W // 2, 2, Cout))
            i += 2
        else:
            cur = acc.reshape(H, W, Cout)
            i += 1
        ci += 1

    Hf, Wf, Cf = cur.shape
    o_ref[0] = cur.reshape(Hf * Wf, Cf).astype(o_ref.dtype)   # lane-dense store


def vgg_features(x_nhwc, conv_params, cfg):
    """x: (N,H,W,Cin); conv_params: [(w (9*Cp,Cout), b (1,Cout)), ...].

    Returns (N, Hf*Wf, Cf) features flattened in (H, W, C) order."""
    N, H, W, Cin = x_nhwc.shape

    in_specs = [pl.BlockSpec((1, H, W, Cin), lambda n: (n, 0, 0, 0))]
    inputs = [x_nhwc]
    scratch_shapes = []
    h, w, c = H, W, Cin
    pi = 0
    for v in cfg:
        if v == "M":
            h, w = h // 2, w // 2
        else:
            wk, bias = conv_params[pi]
            cp = wk.shape[0] // 9
            scratch_shapes.append(pltpu.VMEM((h + 2, w + 2, cp), jnp.float32))
            in_specs.append(pl.BlockSpec(wk.shape, lambda n: (0, 0)))
            in_specs.append(pl.BlockSpec(bias.shape, lambda n: (0, 0)))
            inputs.extend([wk, bias])
            c = v
            pi += 1
    hf, wf, cf = h, w, c

    return pl.pallas_call(
        functools.partial(_features_kernel, cfg=tuple(cfg)),
        out_shape=jax.ShapeDtypeStruct((N, hf * wf, cf), x_nhwc.dtype),
        grid_spec=pltpu.PrefetchScalarGridSpec(
            num_scalar_prefetch=0,
            grid=(N,),
            in_specs=in_specs,
            out_specs=pl.BlockSpec((1, hf * wf, cf), lambda n: (n, 0, 0)),
            scratch_shapes=scratch_shapes,
        ),
        compiler_params=pltpu.CompilerParams(
            dimension_semantics=("parallel",)),
    )(*inputs)


# --------------------------------------------------------------------------
# Linear (+ optional ReLU): y = x @ W + b, tiled over N ("parallel", v7x dual
# TC) and K ("arbitrary" reduction) with a resident f32 accumulator.
# Weights are streamed in bf16, accumulation is f32.
# --------------------------------------------------------------------------
def _linear_kernel(x_ref, w_ref, b_ref, o_ref, acc_ref, *, apply_relu):
    k = pl.program_id(1)

    @pl.when(k == 0)
    def _():
        acc_ref[...] = jnp.zeros_like(acc_ref)

    acc_ref[...] += jnp.dot(x_ref[...].astype(w_ref.dtype), w_ref[...],
                            preferred_element_type=jnp.float32)

    @pl.when(k == pl.num_programs(1) - 1)
    def _():
        y = acc_ref[...] + b_ref[...]
        if apply_relu:
            y = jnp.maximum(y, 0.0)
        o_ref[...] = y.astype(o_ref.dtype)


def _pick_tile(dim, tile):
    t = max(1, min(tile, dim))
    while t > 1 and dim % t:
        t //= 2
    return t


def linear(x, w, b, *, apply_relu, bk=512, bn=2048):
    """x: (M,K) f32, w: (K,N) bf16/f32, b: (N,) -> (M,N) f32."""
    M, K = x.shape
    N = w.shape[1]
    bk = _pick_tile(K, bk)
    bn = _pick_tile(N, bn)
    return pl.pallas_call(
        functools.partial(_linear_kernel, apply_relu=apply_relu),
        out_shape=jax.ShapeDtypeStruct((M, N), jnp.float32),
        grid_spec=pltpu.PrefetchScalarGridSpec(
            num_scalar_prefetch=0,
            grid=(N // bn, K // bk),
            in_specs=[
                pl.BlockSpec((M, bk), lambda j, k: (0, k)),
                pl.BlockSpec((bk, bn), lambda j, k: (k, j)),
                pl.BlockSpec((1, bn), lambda j, k: (0, j)),
            ],
            out_specs=pl.BlockSpec((M, bn), lambda j, k: (0, j)),
            scratch_shapes=[pltpu.VMEM((M, bn), jnp.float32)],
        ),
        compiler_params=pltpu.CompilerParams(
            dimension_semantics=("parallel", "arbitrary")),
    )(x, w, b.reshape(1, N).astype(jnp.float32))


# --------------------------------------------------------------------------
# Fused fc2 + ReLU + fc3: logits_partial[j] = relu(x @ W2[:, j] + b2[j]) @ W3[j].
# The (M, 4096) hidden never leaves VMEM; fc3's weight tile stays resident
# per N-tile. Partials are summed (tiny) in the wrapper and b3 is added.
# --------------------------------------------------------------------------
def _linear_relu_linear_kernel(x_ref, w2_ref, b2_ref, w3_ref, o_ref, acc_ref):
    k = pl.program_id(1)

    @pl.when(k == 0)
    def _():
        acc_ref[...] = jnp.zeros_like(acc_ref)

    acc_ref[...] += jnp.dot(x_ref[...].astype(w2_ref.dtype), w2_ref[...],
                            preferred_element_type=jnp.float32)

    @pl.when(k == pl.num_programs(1) - 1)
    def _():
        y = jnp.maximum(acc_ref[...] + b2_ref[...], 0.0)          # (M, bn) f32
        o_ref[0] = jnp.dot(y, w3_ref[...],
                           preferred_element_type=jnp.float32).astype(o_ref.dtype)


def linear_relu_linear(x, w2, b2, w3, b3, *, bk=512, bn=2048):
    """relu(x @ w2 + b2) @ w3 + b3 without materialising the hidden in HBM."""
    M, K = x.shape
    N = w2.shape[1]
    C = w3.shape[1]
    bk = _pick_tile(K, bk)
    bn = _pick_tile(N, bn)
    nt = N // bn
    partials = pl.pallas_call(
        _linear_relu_linear_kernel,
        out_shape=jax.ShapeDtypeStruct((nt, M, C), jnp.float32),
        grid_spec=pltpu.PrefetchScalarGridSpec(
            num_scalar_prefetch=0,
            grid=(nt, K // bk),
            in_specs=[
                pl.BlockSpec((M, bk), lambda j, k: (0, k)),
                pl.BlockSpec((bk, bn), lambda j, k: (k, j)),
                pl.BlockSpec((1, bn), lambda j, k: (0, j)),
                pl.BlockSpec((bn, C), lambda j, k: (j, 0)),
            ],
            out_specs=pl.BlockSpec((1, M, C), lambda j, k: (j, 0, 0)),
            scratch_shapes=[pltpu.VMEM((M, bn), jnp.float32)],
        ),
        compiler_params=pltpu.CompilerParams(
            dimension_semantics=("parallel", "arbitrary")),
    )(x, w2, b2.reshape(1, N).astype(jnp.float32), w3.astype(jnp.float32))
    return jnp.sum(partials, axis=0) + b3.reshape(1, C)


# --------------------------------------------------------------------------
# VGGNet wrapper (quat=False path; dropout = identity at inference).
# --------------------------------------------------------------------------
class VGGNetPallas:
    def __init__(self, key, architecture="simple", classifier_dropout=0.5,
                 flatten_dim=2048, num_classes=4, quat=False, input_hw=(16, 16)):
        # TODO(synk): quat=True (QuaternionConv / QuaternionLinear) path not
        # implemented; only the standard Conv2d/Linear path (quat=False) is.
        assert not quat, "quat=True path not implemented"
        cfg = VGG_types[architecture]
        self.cfg = cfg
        in_channels = 1  # quat=False

        n_conv = sum(1 for v in cfg if v != "M")
        keys = list(jax.random.split(key, n_conv + 3))
        ki = iter(keys)

        # Conv weights: created in PyTorch layout (Cout, Cin, 3, 3), then
        # converted to the im2col kernel layout (9*Cp, Cout) with the Cin
        # dimension zero-padded to Cp (multiple of 8).
        self.conv_params = []
        c_in = in_channels
        h, w = input_hw
        for v in cfg:
            if v == "M":
                h, w = h // 2, w // 2
                continue
            c_out = v
            kw, kb = jax.random.split(next(ki))
            w_t = 0.05 * jax.random.normal(kw, (c_out, c_in, 3, 3), jnp.float32)
            b_t = 0.05 * jax.random.normal(kb, (c_out,), jnp.float32)
            cp = max(8, ((c_in + 7) // 8) * 8)
            w_k = jnp.transpose(w_t, (2, 3, 1, 0))            # (3,3,Cin,Cout)
            w_k = jnp.pad(w_k, ((0, 0), (0, 0), (0, cp - c_in), (0, 0)))
            w_k = w_k.reshape(9 * cp, c_out)
            self.conv_params.append((w_k, b_t.reshape(1, c_out)))
            c_in = c_out
        self.feat_hw = (h, w)
        self.feat_c = c_in
        assert flatten_dim == h * w * c_in, (flatten_dim, h, w, c_in)

        def lin_init(k, din, dout):
            kw_, kb_ = jax.random.split(k)
            w_ = jax.random.normal(kw_, (din, dout), jnp.float32) / jnp.sqrt(
                jnp.float32(din))
            b_ = 0.01 * jax.random.normal(kb_, (dout,), jnp.float32)
            return w_, b_

        # fc1: rows indexed in torch's NCHW-flatten (C,H,W) order; the feature
        # kernel emits (H,W,C) order -> permute the rows once at init.
        w1, b1 = lin_init(next(ki), flatten_dim, 4096)
        w1 = (w1.reshape(self.feat_c, h, w, 4096)
                .transpose(1, 2, 0, 3)
                .reshape(flatten_dim, 4096))
        self.fc1 = (w1.astype(jnp.bfloat16), b1)          # bf16 weight stream
        w2, b2 = lin_init(next(ki), 4096, 4096)
        self.fc2 = (w2.astype(jnp.bfloat16), b2)          # bf16 weight stream
        w3, b3 = lin_init(next(ki), 4096, num_classes)
        self.fc3 = (w3, b3)                               # tiny, kept f32

    def __call__(self, x_nchw):
        # NCHW (PyTorch) -> NHWC (kernel layout)
        x = jnp.transpose(x_nchw, (0, 2, 3, 1))
        feats = vgg_features(x, self.conv_params, self.cfg)   # (N, Hf*Wf, Cf)
        flat = feats.reshape(feats.shape[0], -1)              # (H,W,C) order
        h = linear(flat, *self.fc1, apply_relu=True)          # fc1 + ReLU
        # nn.Dropout(p=0.5): identity at inference time.
        logits = linear_relu_linear(h, *self.fc2, *self.fc3)  # fc2+ReLU+fc3
        # nn.Dropout(p=0.5) between fc2 and fc3: identity at inference time.
        return logits


if __name__ == "__main__":
    key = jax.random.PRNGKey(0)
    k_in, k_par = jax.random.split(key)

    # quat=False -> in_channels=1; 'simple' arch on a 16x16 input:
    # 16x16 -> pool -> 8x8 -> pool -> 4x4 with 128 channels => flatten 2048.
    x = jax.random.normal(k_in, (2, 1, 16, 16), jnp.float32)
    model = VGGNetPallas(k_par, architecture="simple", flatten_dim=2048,
                         num_classes=4)

    out = jax.block_until_ready(model(x))
    assert out.shape == (2, 4), out.shape
    assert bool(jnp.all(jnp.isfinite(out)))
    print("KERNEL_OK")
</pallas_src>

<mosaic_0001>
module attributes {stable_mosaic.version = 11 : i64} {
  func.func @_features_kernel(%arg0: i32, %arg1: memref<1x16x16x1xf32, #tpu.memory_space<vmem>>, %arg2: memref<72x16xf32, #tpu.memory_space<vmem>>, %arg3: memref<1x16xf32, #tpu.memory_space<vmem>>, %arg4: memref<144x32xf32, #tpu.memory_space<vmem>>, %arg5: memref<1x32xf32, #tpu.memory_space<vmem>>, %arg6: memref<288x128xf32, #tpu.memory_space<vmem>>, %arg7: memref<1x128xf32, #tpu.memory_space<vmem>>, %arg8: memref<1x16x128xf32, #tpu.memory_space<vmem>>, %arg9: memref<18x18x8xf32, #tpu.memory_space<vmem>>, %arg10: memref<10x10x16xf32, #tpu.memory_space<vmem>>, %arg11: memref<6x6x32xf32, #tpu.memory_space<vmem>>) attributes {dimension_semantics = [#tpu.dimension_semantics<parallel>], iteration_bounds = array<i64: 2>, scalar_prefetch = 0 : i64, scratch_operands = 3 : i64, tpu.core_type = #tpu.core_type<tc>, window_params = [{transform_indices = @transform_0, window_bounds = array<i64: 1, 16, 16, 1>}, {pipeline_mode = #tpu.pipeline_mode<synchronous>, transform_indices = @transform_1, window_bounds = array<i64: 72, 16>}, {pipeline_mode = #tpu.pipeline_mode<synchronous>, transform_indices = @transform_2, window_bounds = array<i64: 1, 16>}, {pipeline_mode = #tpu.pipeline_mode<synchronous>, transform_indices = @transform_3, window_bounds = array<i64: 144, 32>}, {pipeline_mode = #tpu.pipeline_mode<synchronous>, transform_indices = @transform_4, window_bounds = array<i64: 1, 32>}, {pipeline_mode = #tpu.pipeline_mode<synchronous>, transform_indices = @transform_5, window_bounds = array<i64: 288, 128>}, {pipeline_mode = #tpu.pipeline_mode<synchronous>, transform_indices = @transform_6, window_bounds = array<i64: 1, 128>}, {transform_indices = @transform_7, window_bounds = array<i64: 1, 16, 128>}]} {
    %c0 = arith.constant 0 : index
    %c0_0 = arith.constant 0 : index
    %c0_1 = arith.constant 0 : index
    %c0_2 = arith.constant 0 : index
    %0 = vector.load %arg1[%c0, %c0_0, %c0_1, %c0_2] : memref<1x16x16x1xf32, #tpu.memory_space<vmem>>, vector<1x16x16x1xf32>
    %1 = vector.shape_cast %0 : vector<1x16x16x1xf32> to vector<16x16x1xf32>
    %cst = arith.constant 0.000000e+00 : f32
    %2 = vector.broadcast %cst : f32 to vector<18x18x8xf32>
    %c0_3 = arith.constant 0 : index
    %c0_4 = arith.constant 0 : index
    %c0_5 = arith.constant 0 : index
    %3 = vector.load %arg9[%c0_3, %c0_4, %c0_5] : memref<18x18x8xf32, #tpu.memory_space<vmem>>, vector<18x18x8xf32>
    tpu.vector_store %arg9[%c0_3, %c0_4, %c0_5], %2 {strides = array<i32>} : memref<18x18x8xf32, #tpu.memory_space<vmem>>, vector<18x18x8xf32>,
    %c1 = arith.constant 1 : index
    %c1_6 = arith.constant 1 : index
    %c0_7 = arith.constant 0 : index
    %4 = vector.load %arg9[%c1, %c1_6, %c0_7] : memref<18x18x8xf32, #tpu.memory_space<vmem>>, vector<16x16x1xf32>
    tpu.vector_store %arg9[%c1, %c1_6, %c0_7], %1 {strides = array<i32>} : memref<18x18x8xf32, #tpu.memory_space<vmem>>, vector<16x16x1xf32>,
    %c0_8 = arith.constant 0 : index
    %c0_9 = arith.constant 0 : index
    %c0_10 = arith.constant 0 : index
    %5 = vector.load %arg9[%c0_8, %c0_9, %c0_10] : memref<18x18x8xf32, #tpu.memory_space<vmem>>, vector<18x18x8xf32>
    %6 = vector.extract_strided_slice %5 {offsets = [0, 0, 0], sizes = [16, 16, 8], strides = [1, 1, 1]} : vector<18x18x8xf32> to vector<16x16x8xf32>
    %7 = vector.shape_cast %6 : vector<16x16x8xf32> to vector<256x8xf32>
    %8 = vector.extract_strided_slice %5 {offsets = [0, 1, 0], sizes = [16, 16, 8], strides = [1, 1, 1]} : vector<18x18x8xf32> to vector<16x16x8xf32>
    %9 = vector.shape_cast %8 : vector<16x16x8xf32> to vector<256x8xf32>
    %10 = vector.extract_strided_slice %5 {offsets = [0, 2, 0], sizes = [16, 16, 8], strides = [1, 1, 1]} : vector<18x18x8xf32> to vector<16x16x8xf32>
    %11 = vector.shape_cast %10 : vector<16x16x8xf32> to vector<256x8xf32>
    %12 = vector.extract_strided_slice %5 {offsets = [1, 0, 0], sizes = [16, 16, 8], strides = [1, 1, 1]} : vector<18x18x8xf32> to vector<16x16x8xf32>
    %13 = vector.shape_cast %12 : vector<16x16x8xf32> to vector<256x8xf32>
    %14 = vector.extract_strided_slice %5 {offsets = [1, 1, 0], sizes = [16, 16, 8], strides = [1, 1, 1]} : vector<18x18x8xf32> to vector<16x16x8xf32>
    %15 = vector.shape_cast %14 : vector<16x16x8xf32> to vector<256x8xf32>
    %16 = vector.extract_strided_slice %5 {offsets = [1, 2, 0], sizes = [16, 16, 8], strides = [1, 1, 1]} : vector<18x18x8xf32> to vector<16x16x8xf32>
    %17 = vector.shape_cast %16 : vector<16x16x8xf32> to vector<256x8xf32>
    %18 = vector.extract_strided_slice %5 {offsets = [2, 0, 0], sizes = [16, 16, 8], strides = [1, 1, 1]} : vector<18x18x8xf32> to vector<16x16x8xf32>
    %19 = vector.shape_cast %18 : vector<16x16x8xf32> to vector<256x8xf32>
    %20 = vector.extract_strided_slice %5 {offsets = [2, 1, 0], sizes = [16, 16, 8], strides = [1, 1, 1]} : vector<18x18x8xf32> to vector<16x16x8xf32>
    %21 = vector.shape_cast %20 : vector<16x16x8xf32> to vector<256x8xf32>
    %22 = vector.extract_strided_slice %5 {offsets = [2, 2, 0], sizes = [16, 16, 8], strides = [1, 1, 1]} : vector<18x18x8xf32> to vector<16x16x8xf32>
    %23 = vector.shape_cast %22 : vector<16x16x8xf32> to vector<256x8xf32>
    %24 = tpu.concatenate %7, %9, %11, %13, %15, %17, %19, %21, %23 in 1 : vector<256x8xf32>, vector<256x8xf32>, vector<256x8xf32>, vector<256x8xf32>, vector<256x8xf32>, vector<256x8xf32>, vector<256x8xf32>, vector<256x8xf32>, vector<256x8xf32> -> vector<256x72xf32>
    %c0_11 = arith.constant 0 : index
    %c0_12 = arith.constant 0 : index
    %25 = vector.load %arg2[%c0_11, %c0_12] : memref<72x16xf32, #tpu.memory_space<vmem>>, vector<72x16xf32>
    %cst_13 = arith.constant dense<0.000000e+00> : vector<256x16xf32>
    %26 = tpu.matmul %24, %25, %cst_13 {dimension_numbers = #tpu.dot_dimension_numbers<[1], [0], [0], [1], [0, 0, 1, 1], [], []>} : vector<256x72xf32>, vector<72x16xf32>, vector<256x16xf32> -> vector<256x16xf32>
    %c0_14 = arith.constant 0 : index
    %c0_15 = arith.constant 0 : index
    %27 = vector.load %arg3[%c0_14, %c0_15] : memref<1x16xf32, #tpu.memory_space<vmem>>, vector<1x16xf32>
    %28 = vector.broadcast %27 : vector<1x16xf32> to vector<256x16xf32>
    %29 = arith.addf %26, %28 : vector<256x16xf32>
    %cst_16 = arith.constant 0.000000e+00 : f32
    %30 = vector.broadcast %cst_16 : f32 to vector<256x16xf32>
    %31 = arith.maximumf %29, %30 : vector<256x16xf32>
    %32 = vector.shape_cast %31 : vector<256x16xf32> to vector<8x2x8x2x16xf32>
    %33 = vector.extract_strided_slice %32 {offsets = [0, 0, 0, 0, 0], sizes = [8, 1, 8, 1, 16], strides = [1, 1, 1, 1, 1]} : vector<8x2x8x2x16xf32> to vector<8x1x8x1x16xf32>
    %34 = vector.shape_cast %33 : vector<8x1x8x1x16xf32> to vector<8x8x16xf32>
    %35 = vector.extract_strided_slice %32 {offsets = [0, 0, 0, 1, 0], sizes = [8, 1, 8, 1, 16], strides = [1, 1, 1, 1, 1]} : vector<8x2x8x2x16xf32> to vector<8x1x8x1x16xf32>
    %36 = vector.shape_cast %35 : vector<8x1x8x1x16xf32> to vector<8x8x16xf32>
    %37 = arith.maximumf %34, %36 : vector<8x8x16xf32>
    %38 = vector.extract_strided_slice %32 {offsets = [0, 1, 0, 0, 0], sizes = [8, 1, 8, 1, 16], strides = [1, 1, 1, 1, 1]} : vector<8x2x8x2x16xf32> to vector<8x1x8x1x16xf32>
    %39 = vector.shape_cast %38 : vector<8x1x8x1x16xf32> to vector<8x8x16xf32>
    %40 = vector.extract_strided_slice %32 {offsets = [0, 1, 0, 1, 0], sizes = [8, 1, 8, 1, 16], strides = [1, 1, 1, 1, 1]} : vector<8x2x8x2x16xf32> to vector<8x1x8x1x16xf32>
    %41 = vector.shape_cast %40 : vector<8x1x8x1x16xf32> to vector<8x8x16xf32>
    %42 = arith.maximumf %39, %41 : vector<8x8x16xf32>
    %43 = arith.maximumf %37, %42 : vector<8x8x16xf32>
    %cst_17 = arith.constant 0.000000e+00 : f32
    %44 = vector.broadcast %cst_17 : f32 to vector<10x10x16xf32>
    %c0_18 = arith.constant 0 : index
    %c0_19 = arith.constant 0 : index
    %c0_20 = arith.constant 0 : index
    %45 = vector.load %arg10[%c0_18, %c0_19, %c0_20] : memref<10x10x16xf32, #tpu.memory_space<vmem>>, vector<10x10x16xf32>
    tpu.vector_store %arg10[%c0_18, %c0_19, %c0_20], %44 {strides = array<i32>} : memref<10x10x16xf32, #tpu.memory_space<vmem>>, vector<10x10x16xf32>,
    %c1_21 = arith.constant 1 : index
    %c1_22 = arith.constant 1 : index
    %c0_23 = arith.constant 0 : index
    %46 = vector.load %arg10[%c1_21, %c1_22, %c0_23] : memref<10x10x16xf32, #tpu.memory_space<vmem>>, vector<8x8x16xf32>
    tpu.vector_store %arg10[%c1_21, %c1_22, %c0_23], %43 {strides = array<i32>} : memref<10x10x16xf32, #tpu.memory_space<vmem>>, vector<8x8x16xf32>,
    %c0_24 = arith.constant 0 : index
    %c0_25 = arith.constant 0 : index
    %c0_26 = arith.constant 0 : index
    %47 = vector.load %arg10[%c0_24, %c0_25, %c0_26] : memref<10x10x16xf32, #tpu.memory_space<vmem>>, vector<10x10x16xf32>
    %48 = vector.extract_strided_slice %47 {offsets = [0, 0, 0], sizes = [8, 8, 16], strides = [1, 1, 1]} : vector<10x10x16xf32> to vector<8x8x16xf32>
    %49 = vector.shape_cast %48 : vector<8x8x16xf32> to vector<64x16xf32>
    %50 = vector.extract_strided_slice %47 {offsets = [0, 1, 0], sizes = [8, 8, 16], strides = [1, 1, 1]} : vector<10x10x16xf32> to vector<8x8x16xf32>
    %51 = vector.shape_cast %50 : vector<8x8x16xf32> to vector<64x16xf32>
    %52 = vector.extract_strided_slice %47 {offsets = [0, 2, 0], sizes = [8, 8, 16], strides = [1, 1, 1]} : vector<10x10x16xf32> to vector<8x8x16xf32>
    %53 = vector.shape_cast %52 : vector<8x8x16xf32> to vector<64x16xf32>
    %54 = vector.extract_strided_slice %47 {offsets = [1, 0, 0], sizes = [8, 8, 16], strides = [1, 1, 1]} : vector<10x10x16xf32> to vector<8x8x16xf32>
    %55 = vector.shape_cast %54 : vector<8x8x16xf32> to vector<64x16xf32>
    %56 = vector.extract_strided_slice %47 {offsets = [1, 1, 0], sizes = [8, 8, 16], strides = [1, 1, 1]} : vector<10x10x16xf32> to vector<8x8x16xf32>
    %57 = vector.shape_cast %56 : vector<8x8x16xf32> to vector<64x16xf32>
    %58 = vector.extract_strided_slice %47 {offsets = [1, 2, 0], sizes = [8, 8, 16], strides = [1, 1, 1]} : vector<10x10x16xf32> to vector<8x8x16xf32>
    %59 = vector.shape_cast %58 : vector<8x8x16xf32> to vector<64x16xf32>
    %60 = vector.extract_strided_slice %47 {offsets = [2, 0, 0], sizes = [8, 8, 16], strides = [1, 1, 1]} : vector<10x10x16xf32> to vector<8x8x16xf32>
    %61 = vector.shape_cast %60 : vector<8x8x16xf32> to vector<64x16xf32>
    %62 = vector.extract_strided_slice %47 {offsets = [2, 1, 0], sizes = [8, 8, 16], strides = [1, 1, 1]} : vector<10x10x16xf32> to vector<8x8x16xf32>
    %63 = vector.shape_cast %62 : vector<8x8x16xf32> to vector<64x16xf32>
    %64 = vector.extract_strided_slice %47 {offsets = [2, 2, 0], sizes = [8, 8, 16], strides = [1, 1, 1]} : vector<10x10x16xf32> to vector<8x8x16xf32>
    %65 = vector.shape_cast %64 : vector<8x8x16xf32> to vector<64x16xf32>
    %66 = tpu.concatenate %49, %51, %53, %55, %57, %59, %61, %63, %65 in 1 : vector<64x16xf32>, vector<64x16xf32>, vector<64x16xf32>, vector<64x16xf32>, vector<64x16xf32>, vector<64x16xf32>, vector<64x16xf32>, vector<64x16xf32>, vector<64x16xf32> -> vector<64x144xf32>
    %c0_27 = arith.constant 0 : index
    %c0_28 = arith.constant 0 : index
    %67 = vector.load %arg4[%c0_27, %c0_28] : memref<144x32xf32, #tpu.memory_space<vmem>>, vector<144x32xf32>
    %cst_29 = arith.constant dense<0.000000e+00> : vector<64x32xf32>
    %68 = tpu.matmul %66, %67, %cst_29 {dimension_numbers = #tpu.dot_dimension_numbers<[1], [0], [0], [1], [0, 0, 1, 1], [], []>} : vector<64x144xf32>, vector<144x32xf32>, vector<64x32xf32> -> vector<64x32xf32>
    %c0_30 = arith.constant 0 : index
    %c0_31 = arith.constant 0 : index
    %69 = vector.load %arg5[%c0_30, %c0_31] : memref<1x32xf32, #tpu.memory_space<vmem>>, vector<1x32xf32>
    %70 = vector.broadcast %69 : vector<1x32xf32> to vector<64x32xf32>
    %71 = arith.addf %68, %70 : vector<64x32xf32>
    %cst_32 = arith.constant 0.000000e+00 : f32
    %72 = vector.broadcast %cst_32 : f32 to vector<64x32xf32>
    %73 = arith.maximumf %71, %72 : vector<64x32xf32>
    %74 = vector.shape_cast %73 : vector<64x32xf32> to vector<4x2x4x2x32xf32>
    %75 = vector.extract_strided_slice %74 {offsets = [0, 0, 0, 0, 0], sizes = [4, 1, 4, 1, 32], strides = [1, 1, 1, 1, 1]} : vector<4x2x4x2x32xf32> to vector<4x1x4x1x32xf32>
    %76 = vector.shape_cast %75 : vector<4x1x4x1x32xf32> to vector<4x4x32xf32>
    %77 = vector.extract_strided_slice %74 {offsets = [0, 0, 0, 1, 0], sizes = [4, 1, 4, 1, 32], strides = [1, 1, 1, 1, 1]} : vector<4x2x4x2x32xf32> to vector<4x1x4x1x32xf32>
    %78 = vector.shape_cast %77 : vector<4x1x4x1x32xf32> to vector<4x4x32xf32>
    %79 = arith.maximumf %76, %78 : vector<4x4x32xf32>
    %80 = vector.extract_strided_slice %74 {offsets = [0, 1, 0, 0, 0], sizes = [4, 1, 4, 1, 32], strides = [1, 1, 1, 1, 1]} : vector<4x2x4x2x32xf32> to vector<4x1x4x1x32xf32>
    %81 = vector.shape_cast %80 : vector<4x1x4x1x32xf32> to vector<4x4x32xf32>
    %82 = vector.extract_strided_slice %74 {offsets = [0, 1, 0, 1, 0], sizes = [4, 1, 4, 1, 32], strides = [1, 1, 1, 1, 1]} : vector<4x2x4x2x32xf32> to vector<4x1x4x1x32xf32>
    %83 = vector.shape_cast %82 : vector<4x1x4x1x32xf32> to vector<4x4x32xf32>
    %84 = arith.maximumf %81, %83 : vector<4x4x32xf32>
    %85 = arith.maximumf %79, %84 : vector<4x4x32xf32>
    %cst_33 = arith.constant 0.000000e+00 : f32
    %86 = vector.broadcast %cst_33 : f32 to vector<6x6x32xf32>
    %c0_34 = arith.constant 0 : index
    %c0_35 = arith.constant 0 : index
    %c0_36 = arith.constant 0 : index
    %87 = vector.load %arg11[%c0_34, %c0_35, %c0_36] : memref<6x6x32xf32, #tpu.memory_space<vmem>>, vector<6x6x32xf32>
    tpu.vector_store %arg11[%c0_34, %c0_35, %c0_36], %86 {strides = array<i32>} : memref<6x6x32xf32, #tpu.memory_space<vmem>>, vector<6x6x32xf32>,
    %c1_37 = arith.constant 1 : index
    %c1_38 = arith.constant 1 : index
    %c0_39 = arith.constant 0 : index
    %88 = vector.load %arg11[%c1_37, %c1_38, %c0_39] : memref<6x6x32xf32, #tpu.memory_space<vmem>>, vector<4x4x32xf32>
    tpu.vector_store %arg11[%c1_37, %c1_38, %c0_39], %85 {strides = array<i32>} : memref<6x6x32xf32, #tpu.memory_space<vmem>>, vector<4x4x32xf32>,
    %c0_40 = arith.constant 0 : index
    %c0_41 = arith.constant 0 : index
    %c0_42 = arith.constant 0 : index
    %89 = vector.load %arg11[%c0_40, %c0_41, %c0_42] : memref<6x6x32xf32, #tpu.memory_space<vmem>>, vector<6x6x32xf32>
    %90 = vector.extract_strided_slice %89 {offsets = [0, 0, 0], sizes = [4, 4, 32], strides = [1, 1, 1]} : vector<6x6x32xf32> to vector<4x4x32xf32>
    %91 = vector.shape_cast %90 : vector<4x4x32xf32> to vector<16x32xf32>
    %92 = vector.extract_strided_slice %89 {offsets = [0, 1, 0], sizes = [4, 4, 32], strides = [1, 1, 1]} : vector<6x6x32xf32> to vector<4x4x32xf32>
    %93 = vector.shape_cast %92 : vector<4x4x32xf32> to vector<16x32xf32>
    %94 = vector.extract_strided_slice %89 {offsets = [0, 2, 0], sizes = [4, 4, 32], strides = [1, 1, 1]} : vector<6x6x32xf32> to vector<4x4x32xf32>
    %95 = vector.shape_cast %94 : vector<4x4x32xf32> to vector<16x32xf32>
    %96 = vector.extract_strided_slice %89 {offsets = [1, 0, 0], sizes = [4, 4, 32], strides = [1, 1, 1]} : vector<6x6x32xf32> to vector<4x4x32xf32>
    %97 = vector.shape_cast %96 : vector<4x4x32xf32> to vector<16x32xf32>
    %98 = vector.extract_strided_slice %89 {offsets = [1, 1, 0], sizes = [4, 4, 32], strides = [1, 1, 1]} : vector<6x6x32xf32> to vector<4x4x32xf32>
    %99 = vector.shape_cast %98 : vector<4x4x32xf32> to vector<16x32xf32>
    %100 = vector.extract_strided_slice %89 {offsets = [1, 2, 0], sizes = [4, 4, 32], strides = [1, 1, 1]} : vector<6x6x32xf32> to vector<4x4x32xf32>
    %101 = vector.shape_cast %100 : vector<4x4x32xf32> to vector<16x32xf32>
    %102 = vector.extract_strided_slice %89 {offsets = [2, 0, 0], sizes = [4, 4, 32], strides = [1, 1, 1]} : vector<6x6x32xf32> to vector<4x4x32xf32>
    %103 = vector.shape_cast %102 : vector<4x4x32xf32> to vector<16x32xf32>
    %104 = vector.extract_strided_slice %89 {offsets = [2, 1, 0], sizes = [4, 4, 32], strides = [1, 1, 1]} : vector<6x6x32xf32> to vector<4x4x32xf32>
    %105 = vector.shape_cast %104 : vector<4x4x32xf32> to vector<16x32xf32>
    %106 = vector.extract_strided_slice %89 {offsets = [2, 2, 0], sizes = [4, 4, 32], strides = [1, 1, 1]} : vector<6x6x32xf32> to vector<4x4x32xf32>
    %107 = vector.shape_cast %106 : vector<4x4x32xf32> to vector<16x32xf32>
    %108 = tpu.concatenate %91, %93, %95, %97, %99, %101, %103, %105, %107 in 1 : vector<16x32xf32>, vector<16x32xf32>, vector<16x32xf32>, vector<16x32xf32>, vector<16x32xf32>, vector<16x32xf32>, vector<16x32xf32>, vector<16x32xf32>, vector<16x32xf32> -> vector<16x288xf32>
    %c0_43 = arith.constant 0 : index
    %c0_44 = arith.constant 0 : index
    %109 = vector.load %arg6[%c0_43, %c0_44] : memref<288x128xf32, #tpu.memory_space<vmem>>, vector<288x128xf32>
    %cst_45 = arith.constant dense<0.000000e+00> : vector<16x128xf32>
    %110 = tpu.matmul %108, %109, %cst_45 {dimension_numbers = #tpu.dot_dimension_numbers<[1], [0], [0], [1], [0, 0, 1, 1], [], []>} : vector<16x288xf32>, vector<288x128xf32>, vector<16x128xf32> -> vector<16x128xf32>
    %c0_46 = arith.constant 0 : index
    %c0_47 = arith.constant 0 : index
    %111 = vector.load %arg7[%c0_46, %c0_47] : memref<1x128xf32, #tpu.memory_space<vmem>>, vector<1x128xf32>
    %112 = vector.broadcast %111 : vector<1x128xf32> to vector<16x128xf32>
    %113 = arith.addf %110, %112 : vector<16x128xf32>
    %cst_48 = arith.constant 0.000000e+00 : f32
    %114 = vector.broadcast %cst_48 : f32 to vector<16x128xf32>
    %115 = arith.maximumf %113, %114 : vector<16x128xf32>
    %116 = vector.shape_cast %115 : vector<16x128xf32> to vector<4x4x128xf32>
    %117 = vector.shape_cast %116 : vector<4x4x128xf32> to vector<16x128xf32>
    %c0_49 = arith.constant 0 : index
    %c0_50 = arith.constant 0 : index
    %c0_51 = arith.constant 0 : index
    %118 = vector.load %arg8[%c0_49, %c0_50, %c0_51] : memref<1x16x128xf32, #tpu.memory_space<vmem>>, vector<1x16x128xf32>
    %119 = vector.shape_cast %118 : vector<1x16x128xf32> to vector<16x128xf32>
    %120 = vector.shape_cast %117 : vector<16x128xf32> to vector<1x16x128xf32>
    tpu.vector_store %arg8[%c0_49, %c0_50, %c0_51], %120 {strides = array<i32>} : memref<1x16x128xf32, #tpu.memory_space<vmem>>, vector<1x16x128xf32>,
    return
  }
  func.func @transform_0(%arg0: i32) -> (i32, i32, i32, i32) {
    %c0_i32 = arith.constant 0 : i32
    %c0_i32_0 = arith.constant 0 : i32
    %c0_i32_1 = arith.constant 0 : i32
    %c0_i32_2 = arith.constant 0 : i32
    return %arg0, %c0_i32, %c0_i32_0, %c0_i32_1 : i32, i32, i32, i32
  }
  func.func @transform_1(%arg0: i32) -> (i32, i32) {
    %c0_i32 = arith.constant 0 : i32
    %c0_i32_0 = arith.constant 0 : i32
    %c0_i32_1 = arith.constant 0 : i32
    return %c0_i32, %c0_i32_0 : i32, i32
  }
  func.func @transform_2(%arg0: i32) -> (i32, i32) {
    %c0_i32 = arith.constant 0 : i32
    %c0_i32_0 = arith.constant 0 : i32
    %c0_i32_1 = arith.constant 0 : i32
    return %c0_i32, %c0_i32_0 : i32, i32
  }
  func.func @transform_3(%arg0: i32) -> (i32, i32) {
    %c0_i32 = arith.constant 0 : i32
    %c0_i32_0 = arith.constant 0 : i32
    %c0_i32_1 = arith.constant 0 : i32
    return %c0_i32, %c0_i32_0 : i32, i32
  }
  func.func @transform_4(%arg0: i32) -> (i32, i32) {
    %c0_i32 = arith.constant 0 : i32
    %c0_i32_0 = arith.constant 0 : i32
    %c0_i32_1 = arith.constant 0 : i32
    return %c0_i32, %c0_i32_0 : i32, i32
  }
  func.func @transform_5(%arg0: i32) -> (i32, i32) {
    %c0_i32 = arith.constant 0 : i32
    %c0_i32_0 = arith.constant 0 : i32
    %c0_i32_1 = arith.constant 0 : i32
    return %c0_i32, %c0_i32_0 : i32, i32
  }
  func.func @transform_6(%arg0: i32) -> (i32, i32) {
    %c0_i32 = arith.constant 0 : i32
    %c0_i32_0 = arith.constant 0 : i32
    %c0_i32_1 = arith.constant 0 : i32
    return %c0_i32, %c0_i32_0 : i32, i32
  }
  func.func @transform_7(%arg0: i32) -> (i32, i32, i32) {
    %c0_i32 = arith.constant 0 : i32
    %c0_i32_0 = arith.constant 0 : i32
    %c0_i32_1 = arith.constant 0 : i32
    return %arg0, %c0_i32, %c0_i32_0 : i32, i32, i32
  }
}

</mosaic_0001>

<llo_original>
// kernel: tpu_custom_call.1
$region0: #{tpu_custom_call.1}
  #allocation0 [shape = 'u32[]', space=smem, size = 0x4, offset = 0x4, fixed_abs, tag = 'smem constant byte address 0x4 - core index']
  #allocation1 [shape = 'u32[144,128]{1,0:T(1,128)}', space=vmem, size = 0x12000, scoped, tag = 'internal scratch']
  #allocation2 [shape = 'f32[18,18,8]{2,1,0:T(8,128)}', space=vmem, size = 0x36000, scoped, tag = 'scratch operand']
  #allocation3 [shape = 'f32[10,10,16]{2,1,0:T(8,128)}', space=vmem, size = 0x14000, scoped, tag = 'scratch operand']
  #allocation4 [shape = 'f32[6,6,32]{2,1,0:T(8,128)}', space=vmem, size = 0x6000, scoped, tag = 'scratch operand']
  %s0 = inlined_call_operand.vmem [shape: f32[2,16,16,1], index: 0, kind: input, shape index: {}]
  %s1 = inlined_call_operand.vmem [shape: f32[72,16], index: 1, kind: input, shape index: {}]
  %s2 = inlined_call_operand.vmem [shape: f32[1,16], index: 2, kind: input, shape index: {}]
  %s3 = inlined_call_operand.vmem [shape: f32[144,32], index: 3, kind: input, shape index: {}]
  %s4 = inlined_call_operand.vmem [shape: f32[1,32], index: 4, kind: input, shape index: {}]
  %s5 = inlined_call_operand.vmem [shape: f32[288,128], index: 5, kind: input, shape index: {}]
  %s6 = inlined_call_operand.vmem [shape: f32[1,128], index: 6, kind: input, shape index: {}]
  %s7 = inlined_call_operand.hbm [shape: f32[2,16,128], index: 7, kind: output, shape index: {}]
  %s8 = sld [smem:[#allocation0]]
  $region61: #{tpu_custom_call.1} parent=0
    _
  %s10 = ssub.s32 1, %s8
  %s11 = scalar_select 0, %s10, %s8
  $region1: #{tpu_custom_call.1} parent=0
    #allocation5 [shape = 'u8[16384]{0}', space=vmem, size = 0x4000, scoped, tag = 'output window, operand 0']
    #allocation6 [shape = 's32[2]{0}', space=sflag, size = 0x8, scoped, tag = 'scoped memory for tpu_custom_call.1']
    %12 = vsyncpa [#allocation6], 0
    %s13 = scalar_lea.sflag [#allocation6], 1
    %14 = vsyncpa %s13, 0
    loop: start=0, step=1, limit=4
    $region2: #{tpu_custom_call.1} parent=1 // loop_pre_header
      _
    $region3: #{tpu_custom_call.1} parent=1 // loop_header
      %s16 = sphi 0, %s20
      %p17 = scmp.ge.s32.totalorder %s16, 4
      %s26 = sphi 0, %s28
      %s29 = sphi 0, %s26
      %s30 = sphi 0, %s29
      %s46 = sphi 0, %s30
      %s50 = sphi 0, %s50
      %s52 = sphi 0, %s50
      %s53 = sphi 0, %s52
      %s67 = sphi 0, %s53
      %s71 = sphi 0, %s71
      %s73 = sphi 0, %s71
      %s74 = sphi 0, %s73
      %s88 = sphi 0, %s74
      %s92 = sphi 0, %s92
      %s94 = sphi 0, %s92
      %s95 = sphi 0, %s94
      %s109 = sphi 0, %s95
      %s113 = sphi 0, %s113
      %s115 = sphi 0, %s113
      %s116 = sphi 0, %s115
      %s130 = sphi 0, %s116
      %s134 = sphi 0, %s134
      %s136 = sphi 0, %s134
      %s137 = sphi 0, %s136
      %s151 = sphi 0, %s137
      %s155 = sphi 0, %s155
      %s157 = sphi 0, %s155
      %s158 = sphi 0, %s157
      %s172 = sphi 0, %s158
      %s178 = sphi 0, %s180
      %s181 = sphi 0, %s178
      %s182 = sphi 0, %s181
      %s198 = sphi 0, %s182
    $region4: #{tpu_custom_call.1} parent=1 // loop_header_branch
      %19 = sbr.rel (%p17) target = $region8
    $region5: #{tpu_custom_call.1} parent=1 // loop_body
      %s21 = ssub.s32 %s16, 1
      %s22 = ssub.s32 %s16, 2
      %s23 = sadd.s32 %s16, 1
      %s24 = ssub.s32 %s16, %s23
      %p25 = scmp.eq.s32.totalorder %s24, 0
      %s27 = sadd.s32 %s26, 1
      %s28 = scalar_select %p25, %s26, %s27
      %p31 = pneg %p25
      %p32 = scmp.eq.s32.totalorder %s16, 1
      %p33 = por %p31, %p32
      %p34 = scmp.ne.s32.totalorder %s26, %s29
      %p35 = scmp.eq.s32.totalorder %s16, 0
      %p36 = por %p34, %p35
      %p37 = scmp.ne.s32.totalorder %s26, %s29
      %p38 = scmp.eq.s32.totalorder %s21, 1
      %p39 = por %p37, %p38
      %p40 = scmp.ne.s32.totalorder %s29, %s30
      %p41 = scmp.eq.s32.totalorder %s21, 0
      %p42 = por %p40, %p41
      %p43 = scmp.ne.s32.totalorder %s29, %s30
      %p44 = scmp.eq.s32.totalorder %s22, 1
      %p45 = por %p43, %p44
      %p47 = scmp.ne.s32.totalorder %s30, %s46
      %p48 = scmp.eq.s32.totalorder %s22, 0
      %p49 = por %p47, %p48
      %s51 = sadd.s32 %s50, 1
      %p54 = scmp.eq.s32.totalorder %s16, 1
      %p55 = scmp.ne.s32.totalorder %s50, %s52
      %p56 = scmp.eq.s32.totalorder %s16, 0
      %p57 = por %p55, %p56
      %p58 = scmp.ne.s32.totalorder %s50, %s52
      %p59 = scmp.eq.s32.totalorder %s21, 1
      %p60 = por %p58, %p59
      %p61 = scmp.ne.s32.totalorder %s52, %s53
      %p62 = scmp.eq.s32.totalorder %s21, 0
      %p63 = por %p61, %p62
      %p64 = scmp.ne.s32.totalorder %s52, %s53
      %p65 = scmp.eq.s32.totalorder %s22, 1
      %p66 = por %p64, %p65
      %p68 = scmp.ne.s32.totalorder %s53, %s67
      %p69 = scmp.eq.s32.totalorder %s22, 0
      %p70 = por %p68, %p69
      %s72 = sadd.s32 %s71, 1
      %p75 = scmp.eq.s32.totalorder %s16, 1
      %p76 = scmp.ne.s32.totalorder %s71, %s73
      %p77 = scmp.eq.s32.totalorder %s16, 0
      %p78 = por %p76, %p77
      %p79 = scmp.ne.s32.totalorder %s71, %s73
      %p80 = scmp.eq.s32.totalorder %s21, 1
      %p81 = por %p79, %p80
      %p82 = scmp.ne.s32.totalorder %s73, %s74
      %p83 = scmp.eq.s32.totalorder %s21, 0
      %p84 = por %p82, %p83
      %p85 = scmp.ne.s32.totalorder %s73, %s74
      %p86 = scmp.eq.s32.totalorder %s22, 1
      %p87 = por %p85, %p86
      %p89 = scmp.ne.s32.totalorder %s74, %s88
      %p90 = scmp.eq.s32.totalorder %s22, 0
      %p91 = por %p89, %p90
      %s93 = sadd.s32 %s92, 1
      %p96 = scmp.eq.s32.totalorder %s16, 1
      %p97 = scmp.ne.s32.totalorder %s92, %s94
      %p98 = scmp.eq.s32.totalorder %s16, 0
      %p99 = por %p97, %p98
      %p100 = scmp.ne.s32.totalorder %s92, %s94
      %p101 = scmp.eq.s32.totalorder %s21, 1
      %p102 = por %p100, %p101
      %p103 = scmp.ne.s32.totalorder %s94, %s95
      %p104 = scmp.eq.s32.totalorder %s21, 0
      %p105 = por %p103, %p104
      %p106 = scmp.ne.s32.totalorder %s94, %s95
      %p107 = scmp.eq.s32.totalorder %s22, 1
      %p108 = por %p106, %p107
      %p110 = scmp.ne.s32.totalorder %s95, %s109
      %p111 = scmp.eq.s32.totalorder %s22, 0
      %p112 = por %p110, %p111
      %s114 = sadd.s32 %s113, 1
      %p117 = scmp.eq.s32.totalorder %s16, 1
      %p118 = scmp.ne.s32.totalorder %s113, %s115
      %p119 = scmp.eq.s32.totalorder %s16, 0
      %p120 = por %p118, %p119
      %p121 = scmp.ne.s32.totalorder %s113, %s115
      %p122 = scmp.eq.s32.totalorder %s21, 1
      %p123 = por %p121, %p122
      %p124 = scmp.ne.s32.totalorder %s115, %s116
      %p125 = scmp.eq.s32.totalorder %s21, 0
      %p126 = por %p124, %p125
      %p127 = scmp.ne.s32.totalorder %s115, %s116
      %p128 = scmp.eq.s32.totalorder %s22, 1
      %p129 = por %p127, %p128
      %p131 = scmp.ne.s32.totalorder %s116, %s130
      %p132 = scmp.eq.s32.totalorder %s22, 0
      %p133 = por %p131, %p132
      %s135 = sadd.s32 %s134, 1
      %p138 = scmp.eq.s32.totalorder %s16, 1
      %p139 = scmp.ne.s32.totalorder %s134, %s136
      %p140 = scmp.eq.s32.totalorder %s16, 0
      %p141 = por %p139, %p140
      %p142 = scmp.ne.s32.totalorder %s134, %s136
      %p143 = scmp.eq.s32.totalorder %s21, 1
      %p144 = por %p142, %p143
      %p145 = scmp.ne.s32.totalorder %s136, %s137
      %p146 = scmp.eq.s32.totalorder %s21, 0
      %p147 = por %p145, %p146
      %p148 = scmp.ne.s32.totalorder %s136, %s137
      %p149 = scmp.eq.s32.totalorder %s22, 1
      %p150 = por %p148, %p149
      %p152 = scmp.ne.s32.totalorder %s137, %s151
      %p153 = scmp.eq.s32.totalorder %s22, 0
      %p154 = por %p152, %p153
      %s156 = sadd.s32 %s155, 1
      %p159 = scmp.eq.s32.totalorder %s16, 1
      %p160 = scmp.ne.s32.totalorder %s155, %s157
      %p161 = scmp.eq.s32.totalorder %s16, 0
      %p162 = por %p160, %p161
      %p163 = scmp.ne.s32.totalorder %s155, %s157
      %p164 = scmp.eq.s32.totalorder %s21, 1
      %p165 = por %p163, %p164
      %p166 = scmp.ne.s32.totalorder %s157, %s158
      %p167 = scmp.eq.s32.totalorder %s21, 0
      %p168 = por %p166, %p167
      %p169 = scmp.ne.s32.totalorder %s157, %s158
      %p170 = scmp.eq.s32.totalorder %s22, 1
      %p171 = por %p169, %p170
      %p173 = scmp.ne.s32.totalorder %s158, %s172
      %p174 = scmp.eq.s32.totalorder %s22, 0
      %p175 = por %p173, %p174
      %s176 = ssub.s32 %s16, %s23
      %p177 = scmp.eq.s32.totalorder %s176, 0
      %s179 = sadd.s32 %s178, 1
      %s180 = scalar_select %p177, %s178, %s179
      %p183 = pneg %p177
      %p184 = scmp.eq.s32.totalorder %s16, 1
      %p185 = por %p183, %p184
      %p186 = scmp.ne.s32.totalorder %s178, %s181
      %p187 = scmp.eq.s32.totalorder %s16, 0
      %p188 = por %p186, %p187
      %p189 = scmp.ne.s32.totalorder %s178, %s181
      %p190 = scmp.eq.s32.totalorder %s21, 1
      %p191 = por %p189, %p190
      %p192 = scmp.ne.s32.totalorder %s181, %s182
      %p193 = scmp.eq.s32.totalorder %s21, 0
      %p194 = por %p192, %p193
      %p195 = scmp.ne.s32.totalorder %s181, %s182
      %p196 = scmp.eq.s32.totalorder %s22, 1
      %p197 = por %p195, %p196
      %p199 = scmp.ne.s32.totalorder %s182, %s198
      %p200 = scmp.eq.s32.totalorder %s22, 0
      %p201 = por %p199, %p200
      %p202 = scmp.le.s32.totalorder 1, %s16
      %p203 = scmp.lt.s32.totalorder %s16, 3
      %p204 = pnand %p202, %p203
      %p205 = pneg %p204
      // Predicated region
      $region9: #{tpu_custom_call.1} parent=5 // pred_check
        _
      $region10: #{tpu_custom_call.1} parent=5 // pred_check_branch
        %207 = sbr.rel (%p204) target = $region12
      $region11: #{tpu_custom_call.1} parent=5 // pred_region
        %s208 = ssub.s32 %s16, 1
        // Predicated region
        $region13: #{tpu_custom_call.1} parent=11 // pred_check
          %p209 = pneg %p63
        $region14: #{tpu_custom_call.1} parent=11 // pred_check_branch
          %211 = sbr.rel (%p209) target = $region16
        $region15: #{tpu_custom_call.1} parent=11 // pred_region
          _
        $region16: #{tpu_custom_call.1} parent=11 // pred_fallthru
          _
        // Predicated region
        $region17: #{tpu_custom_call.1} parent=11 // pred_check
          %p212 = pneg %p84
        $region18: #{tpu_custom_call.1} parent=11 // pred_check_branch
          %214 = sbr.rel (%p212) target = $region20
        $region19: #{tpu_custom_call.1} parent=11 // pred_region
          _
        $region20: #{tpu_custom_call.1} parent=11 // pred_fallthru
          _
        // Predicated region
        $region21: #{tpu_custom_call.1} parent=11 // pred_check
          %p215 = pneg %p105
        $region22: #{tpu_custom_call.1} parent=11 // pred_check_branch
          %217 = sbr.rel (%p215) target = $region24
        $region23: #{tpu_custom_call.1} parent=11 // pred_region
          _
        $region24: #{tpu_custom_call.1} parent=11 // pred_fallthru
          _
        // Predicated region
        $region25: #{tpu_custom_call.1} parent=11 // pred_check
          %p218 = pneg %p126
        $region26: #{tpu_custom_call.1} parent=11 // pred_check_branch
          %220 = sbr.rel (%p218) target = $region28
        $region27: #{tpu_custom_call.1} parent=11 // pred_region
          _
        $region28: #{tpu_custom_call.1} parent=11 // pred_fallthru
          _
        // Predicated region
        $region29: #{tpu_custom_call.1} parent=11 // pred_check
          %p221 = pneg %p147
        $region30: #{tpu_custom_call.1} parent=11 // pred_check_branch
          %223 = sbr.rel (%p221) target = $region32
        $region31: #{tpu_custom_call.1} parent=11 // pred_region
          _
        $region32: #{tpu_custom_call.1} parent=11 // pred_fallthru
          _
        // Predicated region
        $region33: #{tpu_custom_call.1} parent=11 // pred_check
          %p224 = pneg %p168
        $region34: #{tpu_custom_call.1} parent=11 // pred_check_branch
          %226 = sbr.rel (%p224) target = $region36
        $region35: #{tpu_custom_call.1} parent=11 // pred_region
          _
        $region36: #{tpu_custom_call.1} parent=11 // pred_fallthru
          _
      $region12: #{tpu_custom_call.1} parent=5 // pred_fallthru
        _
      %p227 = scmp.lt.s32.totalorder %s16, 2
      // Predicated region
      $region37: #{tpu_custom_call.1} parent=5 // pred_check
        %p228 = pneg %p227
      $region38: #{tpu_custom_call.1} parent=5 // pred_check_branch
        %230 = sbr.rel (%p228) target = $region40
      $region39: #{tpu_custom_call.1} parent=5 // pred_region
        // Predicated region
        $region41: #{tpu_custom_call.1} parent=39 // pred_check
          %p231 = pneg %p36
        $region42: #{tpu_custom_call.1} parent=39 // pred_check_branch
          %233 = sbr.rel (%p231) target = $region44
        $region43: #{tpu_custom_call.1} parent=39 // pred_region
          %p234 = scmp.lt.s32.totalorder %s16, 1
          %s235 = scalar_select %p234, %s16, 1
          %s236 = smul.addr %s235, 32
          %s237 = smul.addr %s236, 8
          %s238 = scalar_lea.vmem %s0, %s237
        $region44: #{tpu_custom_call.1} parent=39 // pred_fallthru
          _
      $region40: #{tpu_custom_call.1} parent=5 // pred_fallthru
        _
      %p239 = scmp.le.s32.totalorder 1, %s16
      %p240 = scmp.lt.s32.totalorder %s16, 3
      %p241 = pnand %p239, %p240
      %p242 = pneg %p241
      // Predicated region
      $region45: #{tpu_custom_call.1} parent=5 // pred_check
        _
      $region46: #{tpu_custom_call.1} parent=5 // pred_check_branch
        %244 = sbr.rel (%p241) target = $region48
      $region47: #{tpu_custom_call.1} parent=5 // pred_region
        %s245 = ssub.s32 %s16, 1
        %p246 = scmp.lt.s32.totalorder %s21, 1
        %s247 = scalar_select %p246, %s21, 1
        %s248 = smul.addr %s247, 32
        %s249 = smul.addr %s248, 8
        %s250 = scalar_lea.vmem %s0, %s249
        %p251 = pneg %p42
        %p252 = pneg %p39
        %p253 = pneg %p63
        %p254 = pneg %p60
        %p255 = pneg %p84
        %p256 = pneg %p81
        %p257 = pneg %p105
        %p258 = pneg %p102
        %p259 = pneg %p126
        %p260 = pneg %p123
        %p261 = pneg %p147
        %p262 = pneg %p144
        %p263 = pneg %p168
        %p264 = pneg %p165
        %p265 = pneg %p194
        %p266 = pneg %p191
        %s267 = sand.u32 %s181, 1
        %s268 = scalar_lea.sflag [#allocation6], %s267
        %s269 = sand.u32 %s181, 1
        %s270 = smul.addr %s269, 16
        %s271 = scalar_lea.vmem [#allocation5], %s270
        %p272 = scmp.lt.s32.totalorder %s21, 1
        %s273 = scalar_select %p272, %s21, 1
        %s274 = smul.addr %s273, 32
        %s275 = smul.addr %s274, 8
        %s276 = scalar_lea.vmem %s0, %s275
        %v277 = vld [vmem:[%s276] sm:$0xff]
        %v278 = vld [vmem:[%s276 + $0x8] sm:$0xff]
        %v279 = vld [vmem:[%s276 + $0x10] sm:$0xff]
        %v280 = vld [vmem:[%s276 + $0x18] sm:$0xff]
        %v281 = vld [vmem:[%s276 + $0x20] sm:$0xff]
        %v282 = vld [vmem:[%s276 + $0x28] sm:$0xff]
        %v283 = vld [vmem:[%s276 + $0x30] sm:$0xff]
        %v284 = vld [vmem:[%s276 + $0x38] sm:$0xff]
        %v285 = vld [vmem:[%s276 + $0x40] sm:$0xff]
        %v286 = vld [vmem:[%s276 + $0x48] sm:$0xff]
        %v287 = vld [vmem:[%s276 + $0x50] sm:$0xff]
        %v288 = vld [vmem:[%s276 + $0x58] sm:$0xff]
        %v289 = vld [vmem:[%s276 + $0x60] sm:$0xff]
        %v290 = vld [vmem:[%s276 + $0x68] sm:$0xff]
        %v291 = vld [vmem:[%s276 + $0x70] sm:$0xff]
        %v292 = vld [vmem:[%s276 + $0x78] sm:$0xff]
        %v293 = vld [vmem:[%s276 + $0x80] sm:$0xff]
        %v294 = vld [vmem:[%s276 + $0x88] sm:$0xff]
        %v295 = vld [vmem:[%s276 + $0x90] sm:$0xff]
        %v296 = vld [vmem:[%s276 + $0x98] sm:$0xff]
        %v297 = vld [vmem:[%s276 + $0xa0] sm:$0xff]
        %v298 = vld [vmem:[%s276 + $0xa8] sm:$0xff]
        %v299 = vld [vmem:[%s276 + $0xb0] sm:$0xff]
        %v300 = vld [vmem:[%s276 + $0xb8] sm:$0xff]
        %v301 = vld [vmem:[%s276 + $0xc0] sm:$0xff]
        %v302 = vld [vmem:[%s276 + $0xc8] sm:$0xff]
        %v303 = vld [vmem:[%s276 + $0xd0] sm:$0xff]
        %v304 = vld [vmem:[%s276 + $0xd8] sm:$0xff]
        %v305 = vld [vmem:[%s276 + $0xe0] sm:$0xff]
        %v306 = vld [vmem:[%s276 + $0xe8] sm:$0xff]
        %v307 = vld [vmem:[%s276 + $0xf0] sm:$0xff]
        %v308 = vld [vmem:[%s276 + $0xf8] sm:$0xff]
        %vm309 = vcmask 64512
        %310 = vst.msk [vmem:[#allocation2] sm:$0xff] %vm309, 0.0
        %311 = vst.msk [vmem:[#allocation2 + $0x8] sm:$0xff] %vm309, 0.0
        %vm312 = vcmask 58368
        %313 = vst.msk [vmem:[#allocation2 + $0x10] sm:$0x3] %vm312, 0.0
        %314 = vst.msk [vmem:[#allocation2 + $0x18] sm:$0xff] %vm309, 0.0
        %315 = vst.msk [vmem:[#allocation2 + $0x20] sm:$0xff] %vm309, 0.0
        %316 = vst.msk [vmem:[#allocation2 + $0x28] sm:$0x3] %vm312, 0.0
        %317 = vst.msk [vmem:[#allocation2 + $0x30] sm:$0xff] %vm309, 0.0
        %318 = vst.msk [vmem:[#allocation2 + $0x38] sm:$0xff] %vm309, 0.0
        %319 = vst.msk [vmem:[#allocation2 + $0x40] sm:$0x3] %vm312, 0.0
        %320 = vst.msk [vmem:[#allocation2 + $0x48] sm:$0xff] %vm309, 0.0
        %321 = vst.msk [vmem:[#allocation2 + $0x50] sm:$0xff] %vm309, 0.0
        %322 = vst.msk [vmem:[#allocation2 + $0x58] sm:$0x3] %vm312, 0.0
        %323 = vst.msk [vmem:[#allocation2 + $0x60] sm:$0xff] %vm309, 0.0
        %324 = vst.msk [vmem:[#allocation2 + $0x68] sm:$0xff] %vm309, 0.0
        %325 = vst.msk [vmem:[#allocation2 + $0x70] sm:$0x3] %vm312, 0.0
        %326 = vst.msk [vmem:[#allocation2 + $0x78] sm:$0xff] %vm309, 0.0
        %327 = vst.msk [vmem:[#allocation2 + $0x80] sm:$0xff] %vm309, 0.0
        %328 = vst.msk [vmem:[#allocation2 + $0x88] sm:$0x3] %vm312, 0.0
        %329 = vst.msk [vmem:[#allocation2 + $0x90] sm:$0xff] %vm309, 0.0
        %330 = vst.msk [vmem:[#allocation2 + $0x98] sm:$0xff] %vm309, 0.0
        %331 = vst.msk [vmem:[#allocation2 + $0xa0] sm:$0x3] %vm312, 0.0
        %332 = vst.msk [vmem:[#allocation2 + $0xa8] sm:$0xff] %vm309, 0.0
        %333 = vst.msk [vmem:[#allocation2 + $0xb0] sm:$0xff] %vm309, 0.0
        %334 = vst.msk [vmem:[#allocation2 + $0xb8] sm:$0x3] %vm312, 0.0
        %335 = vst.msk [vmem:[#allocation2 + $0xc0] sm:$0xff] %vm309, 0.0
        %336 = vst.msk [vmem:[#allocation2 + $0xc8] sm:$0xff] %vm309, 0.0
        %337 = vst.msk [vmem:[#allocation2 + $0xd0] sm:$0x3] %vm312, 0.0
        %338 = vst.msk [vmem:[#allocation2 + $0xd8] sm:$0xff] %vm309, 0.0
        %339 = vst.msk [vmem:[#allocation2 + $0xe0] sm:$0xff] %vm309, 0.0
        %340 = vst.msk [vmem:[#allocation2 + $0xe8] sm:$0x3] %vm312, 0.0
        %341 = vst.msk [vmem:[#allocation2 + $0xf0] sm:$0xff] %vm309, 0.0
        %342 = vst.msk [vmem:[#allocation2 + $0xf8] sm:$0xff] %vm309, 0.0
        %343 = vst.msk [vmem:[#allocation2 + $0x100] sm:$0x3] %vm312, 0.0
        %344 = vst.msk [vmem:[#allocation2 + $0x108] sm:$0xff] %vm309, 0.0
        %345 = vst.msk [vmem:[#allocation2 + $0x110] sm:$0xff] %vm309, 0.0
        %346 = vst.msk [vmem:[#allocation2 + $0x118] sm:$0x3] %vm312, 0.0
        %347 = vst.msk [vmem:[#allocation2 + $0x120] sm:$0xff] %vm309, 0.0
        %348 = vst.msk [vmem:[#allocation2 + $0x128] sm:$0xff] %vm309, 0.0
        %349 = vst.msk [vmem:[#allocation2 + $0x130] sm:$0x3] %vm312, 0.0
        %350 = vst.msk [vmem:[#allocation2 + $0x138] sm:$0xff] %vm309, 0.0
        %351 = vst.msk [vmem:[#allocation2 + $0x140] sm:$0xff] %vm309, 0.0
        %352 = vst.msk [vmem:[#allocation2 + $0x148] sm:$0x3] %vm312, 0.0
        %353 = vst.msk [vmem:[#allocation2 + $0x150] sm:$0xff] %vm309, 0.0
        %354 = vst.msk [vmem:[#allocation2 + $0x158] sm:$0xff] %vm309, 0.0
        %355 = vst.msk [vmem:[#allocation2 + $0x160] sm:$0x3] %vm312, 0.0
        %356 = vst.msk [vmem:[#allocation2 + $0x168] sm:$0xff] %vm309, 0.0
        %357 = vst.msk [vmem:[#allocation2 + $0x170] sm:$0xff] %vm309, 0.0
        %358 = vst.msk [vmem:[#allocation2 + $0x178] sm:$0x3] %vm312, 0.0
        %359 = vst.msk [vmem:[#allocation2 + $0x180] sm:$0xff] %vm309, 0.0
        %360 = vst.msk [vmem:[#allocation2 + $0x188] sm:$0xff] %vm309, 0.0
        %361 = vst.msk [vmem:[#allocation2 + $0x190] sm:$0x3] %vm312, 0.0
        %362 = vst.msk [vmem:[#allocation2 + $0x198] sm:$0xff] %vm309, 0.0
        %363 = vst.msk [vmem:[#allocation2 + $0x1a0] sm:$0xff] %vm309, 0.0
        %364 = vst.msk [vmem:[#allocation2 + $0x1a8] sm:$0x3] %vm312, 0.0
        %s365 = scalar_lea.vmem [#allocation2], 24
        %vm366 = vcmask 7168
        %367 = vst.msk [vmem:[%s365 + $0x1] sm:$0xff] %vm366, %v277
        %368 = vst.msk [vmem:[%s365 + $0x9] sm:$0xff] %vm366, %v278
        %369 = vst.msk [vmem:[%s365 + $0x19] sm:$0xff] %vm366, %v279
        %370 = vst.msk [vmem:[%s365 + $0x21] sm:$0xff] %vm366, %v280
        %371 = vst.msk [vmem:[%s365 + $0x31] sm:$0xff] %vm366, %v281
        %372 = vst.msk [vmem:[%s365 + $0x39] sm:$0xff] %vm366, %v282
        %373 = vst.msk [vmem:[%s365 + $0x49] sm:$0xff] %vm366, %v283
        %374 = vst.msk [vmem:[%s365 + $0x51] sm:$0xff] %vm366, %v284
        %375 = vst.msk [vmem:[%s365 + $0x61] sm:$0xff] %vm366, %v285
        %376 = vst.msk [vmem:[%s365 + $0x69] sm:$0xff] %vm366, %v286
        %377 = vst.msk [vmem:[%s365 + $0x79] sm:$0xff] %vm366, %v287
        %378 = vst.msk [vmem:[%s365 + $0x81] sm:$0xff] %vm366, %v288
        %379 = vst.msk [vmem:[%s365 + $0x91] sm:$0xff] %vm366, %v289
        %380 = vst.msk [vmem:[%s365 + $0x99] sm:$0xff] %vm366, %v290
        %381 = vst.msk [vmem:[%s365 + $0xa9] sm:$0xff] %vm366, %v291
        %382 = vst.msk [vmem:[%s365 + $0xb1] sm:$0xff] %vm366, %v292
        %383 = vst.msk [vmem:[%s365 + $0xc1] sm:$0xff] %vm366, %v293
        %384 = vst.msk [vmem:[%s365 + $0xc9] sm:$0xff] %vm366, %v294
        %385 = vst.msk [vmem:[%s365 + $0xd9] sm:$0xff] %vm366, %v295
        %386 = vst.msk [vmem:[%s365 + $0xe1] sm:$0xff] %vm366, %v296
        %387 = vst.msk [vmem:[%s365 + $0xf1] sm:$0xff] %vm366, %v297
        %388 = vst.msk [vmem:[%s365 + $0xf9] sm:$0xff] %vm366, %v298
        %389 = vst.msk [vmem:[%s365 + $0x109] sm:$0xff] %vm366, %v299
        %390 = vst.msk [vmem:[%s365 + $0x111] sm:$0xff] %vm366, %v300
        %391 = vst.msk [vmem:[%s365 + $0x121] sm:$0xff] %vm366, %v301
        %392 = vst.msk [vmem:[%s365 + $0x129] sm:$0xff] %vm366, %v302
        %393 = vst.msk [vmem:[%s365 + $0x139] sm:$0xff] %vm366, %v303
        %394 = vst.msk [vmem:[%s365 + $0x141] sm:$0xff] %vm366, %v304
        %395 = vst.msk [vmem:[%s365 + $0x151] sm:$0xff] %vm366, %v305
        %396 = vst.msk [vmem:[%s365 + $0x159] sm:$0xff] %vm366, %v306
        %397 = vst.msk [vmem:[%s365 + $0x169] sm:$0xff] %vm366, %v307
        %398 = vst.msk [vmem:[%s365 + $0x171] sm:$0xff] %vm366, %v308
        %v399 = vld [vmem:[#allocation2] sm:$0xff]
        %v400 = vld [vmem:[#allocation2 + $0x8] sm:$0xff]
        %v401 = vld [vmem:[#allocation2 + $0x10] sm:$0x3]
        %v402 = vld [vmem:[#allocation2 + $0x18] sm:$0xff]
        %v403 = vld [vmem:[#allocation2 + $0x20] sm:$0xff]
        %v404 = vld [vmem:[#allocation2 + $0x28] sm:$0x3]
        %v405 = vld [vmem:[#allocation2 + $0x30] sm:$0xff]
        %v406 = vld [vmem:[#allocation2 + $0x38] sm:$0xff]
        %v407 = vld [vmem:[#allocation2 + $0x40] sm:$0x3]
        %v408 = vld [vmem:[#allocation2 + $0x48] sm:$0xff]
        %v409 = vld [vmem:[#allocation2 + $0x50] sm:$0xff]
        %v410 = vld [vmem:[#allocation2 + $0x58] sm:$0x3]
        %v411 = vld [vmem:[#allocation2 + $0x60] sm:$0xff]
        %v412 = vld [vmem:[#allocation2 + $0x68] sm:$0xff]
        %v413 = vld [vmem:[#allocation2 + $0x70] sm:$0x3]
        %v414 = vld [vmem:[#allocation2 + $0x78] sm:$0xff]
        %v415 = vld [vmem:[#allocation2 + $0x80] sm:$0xff]
        %v416 = vld [vmem:[#allocation2 + $0x88] sm:$0x3]
        %v417 = vld [vmem:[#allocation2 + $0x90] sm:$0xff]
        %v418 = vld [vmem:[#allocation2 + $0x98] sm:$0xff]
        %v419 = vld [vmem:[#allocation2 + $0xa0] sm:$0x3]
        %v420 = vld [vmem:[#allocation2 + $0xa8] sm:$0xff]
        %v421 = vld [vmem:[#allocation2 + $0xb0] sm:$0xff]
        %v422 = vld [vmem:[#allocation2 + $0xb8] sm:$0x3]
        %v423 = vld [vmem:[#allocation2 + $0xc0] sm:$0xff]
        %v424 = vld [vmem:[#allocation2 + $0xc8] sm:$0xff]
        %v425 = vld [vmem:[#allocation2 + $0xd0] sm:$0x3]
        %v426 = vld [vmem:[#allocation2 + $0xd8] sm:$0xff]
        %v427 = vld [vmem:[#allocation2 + $0xe0] sm:$0xff]
        %v428 = vld [vmem:[#allocation2 + $0xe8] sm:$0x3]
        %v429 = vld [vmem:[#allocation2 + $0xf0] sm:$0xff]
        %v430 = vld [vmem:[#allocation2 + $0xf8] sm:$0xff]
        %v431 = vld [vmem:[#allocation2 + $0x100] sm:$0x3]
        %v432 = vld [vmem:[#allocation2 + $0x108] sm:$0xff]
        %v433 = vld [vmem:[#allocation2 + $0x110] sm:$0xff]
        %v434 = vld [vmem:[#allocation2 + $0x118] sm:$0x3]
        %v435 = vld [vmem:[#allocation2 + $0x120] sm:$0xff]
        %v436 = vld [vmem:[#allocation2 + $0x128] sm:$0xff]
        %v437 = vld [vmem:[#allocation2 + $0x130] sm:$0x3]
        %v438 = vld [vmem:[#allocation2 + $0x138] sm:$0xff]
        %v439 = vld [vmem:[#allocation2 + $0x140] sm:$0xff]
        %v440 = vld [vmem:[#allocation2 + $0x148] sm:$0x3]
        %v441 = vld [vmem:[#allocation2 + $0x150] sm:$0xff]
        %v442 = vld [vmem:[#allocation2 + $0x158] sm:$0xff]
        %v443 = vld [vmem:[#allocation2 + $0x160] sm:$0x3]
        %v444 = vld [vmem:[#allocation2 + $0x168] sm:$0xff]
        %v445 = vld [vmem:[#allocation2 + $0x170] sm:$0xff]
        %v446 = vld [vmem:[#allocation2 + $0x178] sm:$0x3]
        %v447 = vld [vmem:[#allocation2 + $0x180] sm:$0xff]
        %v448 = vld [vmem:[#allocation2 + $0x188] sm:$0xff]
        %v449 = vld [vmem:[#allocation2 + $0x190] sm:$0x3]
        %v450 = vld [vmem:[#allocation2 + $0x198] sm:$0xff]
        %v451 = vld [vmem:[#allocation2 + $0x1a0] sm:$0xff]
        %v452 = vld [vmem:[#allocation2 + $0x1a8] sm:$0x3]
        %vm501 = vcmask 1046528
        %v502 = vrot.slane %v399, 1
        %v503 = vrot.slane %v400, 1
        %v504 = vsel %vm501, %v502, %v503
        %v505 = vrot.slane %v401, 1
        %v506 = vsel %vm501, %v503, %v505
        %v507 = vrot.slane %v402, 1
        %v508 = vrot.slane %v403, 1
        %v509 = vsel %vm501, %v507, %v508
        %v510 = vrot.slane %v404, 1
        %v511 = vsel %vm501, %v508, %v510
        %v512 = vrot.slane %v405, 1
        %v513 = vrot.slane %v406, 1
        %v514 = vsel %vm501, %v512, %v513
        %v515 = vrot.slane %v407, 1
        %v516 = vsel %vm501, %v513, %v515
        %v517 = vrot.slane %v408, 1
        %v518 = vrot.slane %v409, 1
        %v519 = vsel %vm501, %v517, %v518
        %v520 = vrot.slane %v410, 1
        %v521 = vsel %vm501, %v518, %v520
        %v522 = vrot.slane %v411, 1
        %v523 = vrot.slane %v412, 1
        %v524 = vsel %vm501, %v522, %v523
        %v525 = vrot.slane %v413, 1
        %v526 = vsel %vm501, %v523, %v525
        %v527 = vrot.slane %v414, 1
        %v528 = vrot.slane %v415, 1
        %v529 = vsel %vm501, %v527, %v528
        %v530 = vrot.slane %v416, 1
        %v531 = vsel %vm501, %v528, %v530
        %v532 = vrot.slane %v417, 1
        %v533 = vrot.slane %v418, 1
        %v534 = vsel %vm501, %v532, %v533
        %v535 = vrot.slane %v419, 1
        %v536 = vsel %vm501, %v533, %v535
        %v537 = vrot.slane %v420, 1
        %v538 = vrot.slane %v421, 1
        %v539 = vsel %vm501, %v537, %v538
        %v540 = vrot.slane %v422, 1
        %v541 = vsel %vm501, %v538, %v540
        %v542 = vrot.slane %v423, 1
        %v543 = vrot.slane %v424, 1
        %v544 = vsel %vm501, %v542, %v543
        %v545 = vrot.slane %v425, 1
        %v546 = vsel %vm501, %v543, %v545
        %v547 = vrot.slane %v426, 1
        %v548 = vrot.slane %v427, 1
        %v549 = vsel %vm501, %v547, %v548
        %v550 = vrot.slane %v428, 1
        %v551 = vsel %vm501, %v548, %v550
        %v552 = vrot.slane %v429, 1
        %v553 = vrot.slane %v430, 1
        %v554 = vsel %vm501, %v552, %v553
        %v555 = vrot.slane %v431, 1
        %v556 = vsel %vm501, %v553, %v555
        %v557 = vrot.slane %v432, 1
        %v558 = vrot.slane %v433, 1
        %v559 = vsel %vm501, %v557, %v558
        %v560 = vrot.slane %v434, 1
        %v561 = vsel %vm501, %v558, %v560
        %v562 = vrot.slane %v435, 1
        %v563 = vrot.slane %v436, 1
        %v564 = vsel %vm501, %v562, %v563
        %v565 = vrot.slane %v437, 1
        %v566 = vsel %vm501, %v563, %v565
        %v567 = vrot.slane %v438, 1
        %v568 = vrot.slane %v439, 1
        %v569 = vsel %vm501, %v567, %v568
        %v570 = vrot.slane %v440, 1
        %v571 = vsel %vm501, %v568, %v570
        %v572 = vrot.slane %v441, 1
        %v573 = vrot.slane %v442, 1
        %v574 = vsel %vm501, %v572, %v573
        %v575 = vrot.slane %v443, 1
        %v576 = vsel %vm501, %v573, %v575
        %v577 = vrot.slane %v444, 1
        %v578 = vrot.slane %v445, 1
        %v579 = vsel %vm501, %v577, %v578
        %v580 = vrot.slane %v446, 1
        %v581 = vsel %vm501, %v578, %v580
        %vm582 = vcmask 1045504
        %v583 = vrot.slane %v399, 2
        %v584 = vrot.slane %v400, 2
        %v585 = vsel %vm582, %v583, %v584
        %v586 = vrot.slane %v401, 2
        %v587 = vsel %vm582, %v584, %v586
        %v588 = vrot.slane %v402, 2
        %v589 = vrot.slane %v403, 2
        %v590 = vsel %vm582, %v588, %v589
        %v591 = vrot.slane %v404, 2
        %v592 = vsel %vm582, %v589, %v591
        %v593 = vrot.slane %v405, 2
        %v594 = vrot.slane %v406, 2
        %v595 = vsel %vm582, %v593, %v594
        %v596 = vrot.slane %v407, 2
        %v597 = vsel %vm582, %v594, %v596
        %v598 = vrot.slane %v408, 2
        %v599 = vrot.slane %v409, 2
        %v600 = vsel %vm582, %v598, %v599
        %v601 = vrot.slane %v410, 2
        %v602 = vsel %vm582, %v599, %v601
        %v603 = vrot.slane %v411, 2
        %v604 = vrot.slane %v412, 2
        %v605 = vsel %vm582, %v603, %v604
        %v606 = vrot.slane %v413, 2
        %v607 = vsel %vm582, %v604, %v606
        %v608 = vrot.slane %v414, 2
        %v609 = vrot.slane %v415, 2
        %v610 = vsel %vm582, %v608, %v609
        %v611 = vrot.slane %v416, 2
        %v612 = vsel %vm582, %v609, %v611
        %v613 = vrot.slane %v417, 2
        %v614 = vrot.slane %v418, 2
        %v615 = vsel %vm582, %v613, %v614
        %v616 = vrot.slane %v419, 2
        %v617 = vsel %vm582, %v614, %v616
        %v618 = vrot.slane %v420, 2
        %v619 = vrot.slane %v421, 2
        %v620 = vsel %vm582, %v618, %v619
        %v621 = vrot.slane %v422, 2
        %v622 = vsel %vm582, %v619, %v621
        %v623 = vrot.slane %v423, 2
        %v624 = vrot.slane %v424, 2
        %v625 = vsel %vm582, %v623, %v624
        %v626 = vrot.slane %v425, 2
        %v627 = vsel %vm582, %v624, %v626
        %v628 = vrot.slane %v426, 2
        %v629 = vrot.slane %v427, 2
        %v630 = vsel %vm582, %v628, %v629
        %v631 = vrot.slane %v428, 2
        %v632 = vsel %vm582, %v629, %v631
        %v633 = vrot.slane %v429, 2
        %v634 = vrot.slane %v430, 2
        %v635 = vsel %vm582, %v633, %v634
        %v636 = vrot.slane %v431, 2
        %v637 = vsel %vm582, %v634, %v636
        %v638 = vrot.slane %v432, 2
        %v639 = vrot.slane %v433, 2
        %v640 = vsel %vm582, %v638, %v639
        %v641 = vrot.slane %v434, 2
        %v642 = vsel %vm582, %v639, %v641
        %v643 = vrot.slane %v435, 2
        %v644 = vrot.slane %v436, 2
        %v645 = vsel %vm582, %v643, %v644
        %v646 = vrot.slane %v437, 2
        %v647 = vsel %vm582, %v644, %v646
        %v648 = vrot.slane %v438, 2
        %v649 = vrot.slane %v439, 2
        %v650 = vsel %vm582, %v648, %v649
        %v651 = vrot.slane %v440, 2
        %v652 = vsel %vm582, %v649, %v651
        %v653 = vrot.slane %v441, 2
        %v654 = vrot.slane %v442, 2
        %v655 = vsel %vm582, %v653, %v654
        %v656 = vrot.slane %v443, 2
        %v657 = vsel %vm582, %v654, %v656
        %v658 = vrot.slane %v444, 2
        %v659 = vrot.slane %v445, 2
        %v660 = vsel %vm582, %v658, %v659
        %v661 = vrot.slane %v446, 2
        %v662 = vsel %vm582, %v659, %v661
        %v666 = vrot.slane %v447, 1
        %v667 = vrot.slane %v448, 1
        %v668 = vsel %vm501, %v666, %v667
        %v669 = vrot.slane %v449, 1
        %v670 = vsel %vm501, %v667, %v669
        %v671 = vrot.slane %v447, 2
        %v672 = vrot.slane %v448, 2
        %v673 = vsel %vm582, %v671, %v672
        %v674 = vrot.slane %v449, 2
        %v675 = vsel %vm582, %v672, %v674
        %v679 = vrot.slane %v450, 1
        %v680 = vrot.slane %v451, 1
        %v681 = vsel %vm501, %v679, %v680
        %v682 = vrot.slane %v452, 1
        %v683 = vsel %vm501, %v680, %v682
        %v684 = vrot.slane %v450, 2
        %v685 = vrot.slane %v451, 2
        %v686 = vsel %vm582, %v684, %v685
        %v687 = vrot.slane %v452, 2
        %v688 = vsel %vm582, %v685, %v687
        %689 = vrot.lane.b32.xlu0 %v504, 8
        %v690 = vpop.permute.xlu0 %689
        %691 = vrot.lane.b32.xlu0 %v506, 8
        %v692 = vpop.permute.xlu0 %691
        %693 = vrot.lane.b32.xlu0 %v509, 8
        %v694 = vpop.permute.xlu0 %693
        %695 = vrot.lane.b32.xlu0 %v511, 8
        %v696 = vpop.permute.xlu0 %695
        %697 = vrot.lane.b32.xlu0 %v514, 8
        %v698 = vpop.permute.xlu0 %697
        %699 = vrot.lane.b32.xlu0 %v516, 8
        %v700 = vpop.permute.xlu0 %699
        %701 = vrot.lane.b32.xlu0 %v519, 8
        %v702 = vpop.permute.xlu0 %701
        %703 = vrot.lane.b32.xlu0 %v521, 8
        %v704 = vpop.permute.xlu0 %703
        %705 = vrot.lane.b32.xlu0 %v524, 8
        %v706 = vpop.permute.xlu0 %705
        %707 = vrot.lane.b32.xlu0 %v526, 8
        %v708 = vpop.permute.xlu0 %707
        %709 = vrot.lane.b32.xlu0 %v529, 8
        %v710 = vpop.permute.xlu0 %709
        %711 = vrot.lane.b32.xlu0 %v531, 8
        %v712 = vpop.permute.xlu0 %711
        %713 = vrot.lane.b32.xlu0 %v534, 8
        %v714 = vpop.permute.xlu0 %713
        %715 = vrot.lane.b32.xlu0 %v536, 8
        %v716 = vpop.permute.xlu0 %715
        %717 = vrot.lane.b32.xlu0 %v539, 8
        %v718 = vpop.permute.xlu0 %717
        %719 = vrot.lane.b32.xlu0 %v541, 8
        %v720 = vpop.permute.xlu0 %719
        %721 = vrot.lane.b32.xlu0 %v544, 8
        %v722 = vpop.permute.xlu0 %721
        %723 = vrot.lane.b32.xlu0 %v546, 8
        %v724 = vpop.permute.xlu0 %723
        %725 = vrot.lane.b32.xlu0 %v549, 8
        %v726 = vpop.permute.xlu0 %725
        %727 = vrot.lane.b32.xlu0 %v551, 8
        %v728 = vpop.permute.xlu0 %727
        %729 = vrot.lane.b32.xlu0 %v554, 8
        %v730 = vpop.permute.xlu0 %729
        %731 = vrot.lane.b32.xlu0 %v556, 8
        %v732 = vpop.permute.xlu0 %731
        %733 = vrot.lane.b32.xlu0 %v559, 8
        %v734 = vpop.permute.xlu0 %733
        %735 = vrot.lane.b32.xlu0 %v561, 8
        %v736 = vpop.permute.xlu0 %735
        %737 = vrot.lane.b32.xlu0 %v564, 8
        %v738 = vpop.permute.xlu0 %737
        %739 = vrot.lane.b32.xlu0 %v566, 8
        %v740 = vpop.permute.xlu0 %739
        %741 = vrot.lane.b32.xlu0 %v569, 8
        %v742 = vpop.permute.xlu0 %741
        %743 = vrot.lane.b32.xlu0 %v571, 8
        %v744 = vpop.permute.xlu0 %743
        %745 = vrot.lane.b32.xlu0 %v574, 8
        %v746 = vpop.permute.xlu0 %745
        %747 = vrot.lane.b32.xlu0 %v576, 8
        %v748 = vpop.permute.xlu0 %747
        %749 = vrot.lane.b32.xlu0 %v579, 8
        %v750 = vpop.permute.xlu0 %749
        %751 = vrot.lane.b32.xlu0 %v581, 8
        %v752 = vpop.permute.xlu0 %751
        %785 = vrot.lane.b32.xlu0 %v585, 16
        %v786 = vpop.permute.xlu0 %785
        %787 = vrot.lane.b32.xlu0 %v587, 16
        %v788 = vpop.permute.xlu0 %787
        %789 = vrot.lane.b32.xlu0 %v590, 16
        %v790 = vpop.permute.xlu0 %789
        %791 = vrot.lane.b32.xlu0 %v592, 16
        %v792 = vpop.permute.xlu0 %791
        %793 = vrot.lane.b32.xlu0 %v595, 16
        %v794 = vpop.permute.xlu0 %793
        %795 = vrot.lane.b32.xlu0 %v597, 16
        %v796 = vpop.permute.xlu0 %795
        %797 = vrot.lane.b32.xlu0 %v600, 16
        %v798 = vpop.permute.xlu0 %797
        %799 = vrot.lane.b32.xlu0 %v602, 16
        %v800 = vpop.permute.xlu0 %799
        %801 = vrot.lane.b32.xlu0 %v605, 16
        %v802 = vpop.permute.xlu0 %801
        %803 = vrot.lane.b32.xlu0 %v607, 16
        %v804 = vpop.permute.xlu0 %803
        %805 = vrot.lane.b32.xlu0 %v610, 16
        %v806 = vpop.permute.xlu0 %805
        %807 = vrot.lane.b32.xlu0 %v612, 16
        %v808 = vpop.permute.xlu0 %807
        %809 = vrot.lane.b32.xlu0 %v615, 16
        %v810 = vpop.permute.xlu0 %809
        %811 = vrot.lane.b32.xlu0 %v617, 16
        %v812 = vpop.permute.xlu0 %811
        %813 = vrot.lane.b32.xlu0 %v620, 16
        %v814 = vpop.permute.xlu0 %813
        %815 = vrot.lane.b32.xlu0 %v622, 16
        %v816 = vpop.permute.xlu0 %815
        %817 = vrot.lane.b32.xlu0 %v625, 16
        %v818 = vpop.permute.xlu0 %817
        %819 = vrot.lane.b32.xlu0 %v627, 16
        %v820 = vpop.permute.xlu0 %819
        %821 = vrot.lane.b32.xlu0 %v630, 16
        %v822 = vpop.permute.xlu0 %821
        %823 = vrot.lane.b32.xlu0 %v632, 16
        %v824 = vpop.permute.xlu0 %823
        %825 = vrot.lane.b32.xlu0 %v635, 16
        %v826 = vpop.permute.xlu0 %825
        %827 = vrot.lane.b32.xlu0 %v637, 16
        %v828 = vpop.permute.xlu0 %827
        %829 = vrot.lane.b32.xlu0 %v640, 16
        %v830 = vpop.permute.xlu0 %829
        %831 = vrot.lane.b32.xlu0 %v642, 16
        %v832 = vpop.permute.xlu0 %831
        %833 = vrot.lane.b32.xlu0 %v645, 16
        %v834 = vpop.permute.xlu0 %833
        %835 = vrot.lane.b32.xlu0 %v647, 16
        %v836 = vpop.permute.xlu0 %835
        %837 = vrot.lane.b32.xlu0 %v650, 16
        %v838 = vpop.permute.xlu0 %837
        %839 = vrot.lane.b32.xlu0 %v652, 16
        %v840 = vpop.permute.xlu0 %839
        %841 = vrot.lane.b32.xlu0 %v655, 16
        %v842 = vpop.permute.xlu0 %841
        %843 = vrot.lane.b32.xlu0 %v657, 16
        %v844 = vpop.permute.xlu0 %843
        %845 = vrot.lane.b32.xlu0 %v660, 16
        %v846 = vpop.permute.xlu0 %845
        %847 = vrot.lane.b32.xlu0 %v662, 16
        %v848 = vpop.permute.xlu0 %847
        %881 = vrot.lane.b32.xlu0 %v402, 24
        %v882 = vpop.permute.xlu0 %881
        %883 = vrot.lane.b32.xlu0 %v403, 24
        %v884 = vpop.permute.xlu0 %883
        %885 = vrot.lane.b32.xlu0 %v405, 24
        %v886 = vpop.permute.xlu0 %885
        %887 = vrot.lane.b32.xlu0 %v406, 24
        %v888 = vpop.permute.xlu0 %887
        %889 = vrot.lane.b32.xlu0 %v408, 24
        %v890 = vpop.permute.xlu0 %889
        %891 = vrot.lane.b32.xlu0 %v409, 24
        %v892 = vpop.permute.xlu0 %891
        %893 = vrot.lane.b32.xlu0 %v411, 24
        %v894 = vpop.permute.xlu0 %893
        %895 = vrot.lane.b32.xlu0 %v412, 24
        %v896 = vpop.permute.xlu0 %895
        %897 = vrot.lane.b32.xlu0 %v414, 24
        %v898 = vpop.permute.xlu0 %897
        %899 = vrot.lane.b32.xlu0 %v415, 24
        %v900 = vpop.permute.xlu0 %899
        %901 = vrot.lane.b32.xlu0 %v417, 24
        %v902 = vpop.permute.xlu0 %901
        %903 = vrot.lane.b32.xlu0 %v418, 24
        %v904 = vpop.permute.xlu0 %903
        %905 = vrot.lane.b32.xlu0 %v420, 24
        %v906 = vpop.permute.xlu0 %905
        %907 = vrot.lane.b32.xlu0 %v421, 24
        %v908 = vpop.permute.xlu0 %907
        %909 = vrot.lane.b32.xlu0 %v423, 24
        %v910 = vpop.permute.xlu0 %909
        %911 = vrot.lane.b32.xlu0 %v424, 24
        %v912 = vpop.permute.xlu0 %911
        %913 = vrot.lane.b32.xlu0 %v426, 24
        %v914 = vpop.permute.xlu0 %913
        %915 = vrot.lane.b32.xlu0 %v427, 24
        %v916 = vpop.permute.xlu0 %915
        %917 = vrot.lane.b32.xlu0 %v429, 24
        %v918 = vpop.permute.xlu0 %917
        %919 = vrot.lane.b32.xlu0 %v430, 24
        %v920 = vpop.permute.xlu0 %919
        %921 = vrot.lane.b32.xlu0 %v432, 24
        %v922 = vpop.permute.xlu0 %921
        %923 = vrot.lane.b32.xlu0 %v433, 24
        %v924 = vpop.permute.xlu0 %923
        %925 = vrot.lane.b32.xlu0 %v435, 24
        %v926 = vpop.permute.xlu0 %925
        %927 = vrot.lane.b32.xlu0 %v436, 24
        %v928 = vpop.permute.xlu0 %927
        %929 = vrot.lane.b32.xlu0 %v438, 24
        %v930 = vpop.permute.xlu0 %929
        %931 = vrot.lane.b32.xlu0 %v439, 24
        %v932 = vpop.permute.xlu0 %931
        %933 = vrot.lane.b32.xlu0 %v441, 24
        %v934 = vpop.permute.xlu0 %933
        %935 = vrot.lane.b32.xlu0 %v442, 24
        %v936 = vpop.permute.xlu0 %935
        %937 = vrot.lane.b32.xlu0 %v444, 24
        %v938 = vpop.permute.xlu0 %937
        %939 = vrot.lane.b32.xlu0 %v445, 24
        %v940 = vpop.permute.xlu0 %939
        %941 = vrot.lane.b32.xlu0 %v447, 24
        %v942 = vpop.permute.xlu0 %941
        %943 = vrot.lane.b32.xlu0 %v448, 24
        %v944 = vpop.permute.xlu0 %943
        %977 = vrot.lane.b32.xlu0 %v509, 32
        %v978 = vpop.permute.xlu0 %977
        %979 = vrot.lane.b32.xlu0 %v511, 32
        %v980 = vpop.permute.xlu0 %979
        %981 = vrot.lane.b32.xlu0 %v514, 32
        %v982 = vpop.permute.xlu0 %981
        %983 = vrot.lane.b32.xlu0 %v516, 32
        %v984 = vpop.permute.xlu0 %983
        %985 = vrot.lane.b32.xlu0 %v519, 32
        %v986 = vpop.permute.xlu0 %985
        %987 = vrot.lane.b32.xlu0 %v521, 32
        %v988 = vpop.permute.xlu0 %987
        %989 = vrot.lane.b32.xlu0 %v524, 32
        %v990 = vpop.permute.xlu0 %989
        %991 = vrot.lane.b32.xlu0 %v526, 32
        %v992 = vpop.permute.xlu0 %991
        %993 = vrot.lane.b32.xlu0 %v529, 32
        %v994 = vpop.permute.xlu0 %993
        %995 = vrot.lane.b32.xlu0 %v531, 32
        %v996 = vpop.permute.xlu0 %995
        %997 = vrot.lane.b32.xlu0 %v534, 32
        %v998 = vpop.permute.xlu0 %997
        %999 = vrot.lane.b32.xlu0 %v536, 32
        %v1000 = vpop.permute.xlu0 %999
        %1001 = vrot.lane.b32.xlu0 %v539, 32
        %v1002 = vpop.permute.xlu0 %1001
        %1003 = vrot.lane.b32.xlu0 %v541, 32
        %v1004 = vpop.permute.xlu0 %1003
        %1005 = vrot.lane.b32.xlu0 %v544, 32
        %v1006 = vpop.permute.xlu0 %1005
        %1007 = vrot.lane.b32.xlu0 %v546, 32
        %v1008 = vpop.permute.xlu0 %1007
        %1009 = vrot.lane.b32.xlu0 %v549, 32
        %v1010 = vpop.permute.xlu0 %1009
        %1011 = vrot.lane.b32.xlu0 %v551, 32
        %v1012 = vpop.permute.xlu0 %1011
        %1013 = vrot.lane.b32.xlu0 %v554, 32
        %v1014 = vpop.permute.xlu0 %1013
        %1015 = vrot.lane.b32.xlu0 %v556, 32
        %v1016 = vpop.permute.xlu0 %1015
        %1017 = vrot.lane.b32.xlu0 %v559, 32
        %v1018 = vpop.permute.xlu0 %1017
        %1019 = vrot.lane.b32.xlu0 %v561, 32
        %v1020 = vpop.permute.xlu0 %1019
        %1021 = vrot.lane.b32.xlu0 %v564, 32
        %v1022 = vpop.permute.xlu0 %1021
        %1023 = vrot.lane.b32.xlu0 %v566, 32
        %v1024 = vpop.permute.xlu0 %1023
        %1025 = vrot.lane.b32.xlu0 %v569, 32
        %v1026 = vpop.permute.xlu0 %1025
        %1027 = vrot.lane.b32.xlu0 %v571, 32
        %v1028 = vpop.permute.xlu0 %1027
        %1029 = vrot.lane.b32.xlu0 %v574, 32
        %v1030 = vpop.permute.xlu0 %1029
        %1031 = vrot.lane.b32.xlu0 %v576, 32
        %v1032 = vpop.permute.xlu0 %1031
        %1033 = vrot.lane.b32.xlu0 %v579, 32
        %v1034 = vpop.permute.xlu0 %1033
        %1035 = vrot.lane.b32.xlu0 %v581, 32
        %v1036 = vpop.permute.xlu0 %1035
        %1037 = vrot.lane.b32.xlu0 %v668, 32
        %v1038 = vpop.permute.xlu0 %1037
        %1039 = vrot.lane.b32.xlu0 %v670, 32
        %v1040 = vpop.permute.xlu0 %1039
        %1073 = vrot.lane.b32.xlu0 %v590, 40
        %v1074 = vpop.permute.xlu0 %1073
        %1075 = vrot.lane.b32.xlu0 %v592, 40
        %v1076 = vpop.permute.xlu0 %1075
        %1077 = vrot.lane.b32.xlu0 %v595, 40
        %v1078 = vpop.permute.xlu0 %1077
        %1079 = vrot.lane.b32.xlu0 %v597, 40
        %v1080 = vpop.permute.xlu0 %1079
        %1081 = vrot.lane.b32.xlu0 %v600, 40
        %v1082 = vpop.permute.xlu0 %1081
        %1083 = vrot.lane.b32.xlu0 %v602, 40
        %v1084 = vpop.permute.xlu0 %1083
        %1085 = vrot.lane.b32.xlu0 %v605, 40
        %v1086 = vpop.permute.xlu0 %1085
        %1087 = vrot.lane.b32.xlu0 %v607, 40
        %v1088 = vpop.permute.xlu0 %1087
        %1089 = vrot.lane.b32.xlu0 %v610, 40
        %v1090 = vpop.permute.xlu0 %1089
        %1091 = vrot.lane.b32.xlu0 %v612, 40
        %v1092 = vpop.permute.xlu0 %1091
        %1093 = vrot.lane.b32.xlu0 %v615, 40
        %v1094 = vpop.permute.xlu0 %1093
        %1095 = vrot.lane.b32.xlu0 %v617, 40
        %v1096 = vpop.permute.xlu0 %1095
        %1097 = vrot.lane.b32.xlu0 %v620, 40
        %v1098 = vpop.permute.xlu0 %1097
        %1099 = vrot.lane.b32.xlu0 %v622, 40
        %v1100 = vpop.permute.xlu0 %1099
        %1101 = vrot.lane.b32.xlu0 %v625, 40
        %v1102 = vpop.permute.xlu0 %1101
        %1103 = vrot.lane.b32.xlu0 %v627, 40
        %v1104 = vpop.permute.xlu0 %1103
        %1105 = vrot.lane.b32.xlu0 %v630, 40
        %v1106 = vpop.permute.xlu0 %1105
        %1107 = vrot.lane.b32.xlu0 %v632, 40
        %v1108 = vpop.permute.xlu0 %1107
        %1109 = vrot.lane.b32.xlu0 %v635, 40
        %v1110 = vpop.permute.xlu0 %1109
        %1111 = vrot.lane.b32.xlu0 %v637, 40
        %v1112 = vpop.permute.xlu0 %1111
        %1113 = vrot.lane.b32.xlu0 %v640, 40
        %v1114 = vpop.permute.xlu0 %1113
        %1115 = vrot.lane.b32.xlu0 %v642, 40
        %v1116 = vpop.permute.xlu0 %1115
        %1117 = vrot.lane.b32.xlu0 %v645, 40
        %v1118 = vpop.permute.xlu0 %1117
        %1119 = vrot.lane.b32.xlu0 %v647, 40
        %v1120 = vpop.permute.xlu0 %1119
        %1121 = vrot.lane.b32.xlu0 %v650, 40
        %v1122 = vpop.permute.xlu0 %1121
        %1123 = vrot.lane.b32.xlu0 %v652, 40
        %v1124 = vpop.permute.xlu0 %1123
        %1125 = vrot.lane.b32.xlu0 %v655, 40
        %v1126 = vpop.permute.xlu0 %1125
        %1127 = vrot.lane.b32.xlu0 %v657, 40
        %v1128 = vpop.permute.xlu0 %1127
        %1129 = vrot.lane.b32.xlu0 %v660, 40
        %v1130 = vpop.permute.xlu0 %1129
        %1131 = vrot.lane.b32.xlu0 %v662, 40
        %v1132 = vpop.permute.xlu0 %1131
        %1133 = vrot.lane.b32.xlu0 %v673, 40
        %v1134 = vpop.permute.xlu0 %1133
        %1135 = vrot.lane.b32.xlu0 %v675, 40
        %v1136 = vpop.permute.xlu0 %1135
        %1169 = vrot.lane.b32.xlu0 %v405, 48
        %v1170 = vpop.permute.xlu0 %1169
        %1171 = vrot.lane.b32.xlu0 %v406, 48
        %v1172 = vpop.permute.xlu0 %1171
        %1173 = vrot.lane.b32.xlu0 %v408, 48
        %v1174 = vpop.permute.xlu0 %1173
        %1175 = vrot.lane.b32.xlu0 %v409, 48
        %v1176 = vpop.permute.xlu0 %1175
        %1177 = vrot.lane.b32.xlu0 %v411, 48
        %v1178 = vpop.permute.xlu0 %1177
        %1179 = vrot.lane.b32.xlu0 %v412, 48
        %v1180 = vpop.permute.xlu0 %1179
        %1181 = vrot.lane.b32.xlu0 %v414, 48
        %v1182 = vpop.permute.xlu0 %1181
        %1183 = vrot.lane.b32.xlu0 %v415, 48
        %v1184 = vpop.permute.xlu0 %1183
        %1185 = vrot.lane.b32.xlu0 %v417, 48
        %v1186 = vpop.permute.xlu0 %1185
        %1187 = vrot.lane.b32.xlu0 %v418, 48
        %v1188 = vpop.permute.xlu0 %1187
        %1189 = vrot.lane.b32.xlu0 %v420, 48
        %v1190 = vpop.permute.xlu0 %1189
        %1191 = vrot.lane.b32.xlu0 %v421, 48
        %v1192 = vpop.permute.xlu0 %1191
        %1193 = vrot.lane.b32.xlu0 %v423, 48
        %v1194 = vpop.permute.xlu0 %1193
        %1195 = vrot.lane.b32.xlu0 %v424, 48
        %v1196 = vpop.permute.xlu0 %1195
        %1197 = vrot.lane.b32.xlu0 %v426, 48
        %v1198 = vpop.permute.xlu0 %1197
        %1199 = vrot.lane.b32.xlu0 %v427, 48
        %v1200 = vpop.permute.xlu0 %1199
        %1201 = vrot.lane.b32.xlu0 %v429, 48
        %v1202 = vpop.permute.xlu0 %1201
        %1203 = vrot.lane.b32.xlu0 %v430, 48
        %v1204 = vpop.permute.xlu0 %1203
        %1205 = vrot.lane.b32.xlu0 %v432, 48
        %v1206 = vpop.permute.xlu0 %1205
        %1207 = vrot.lane.b32.xlu0 %v433, 48
        %v1208 = vpop.permute.xlu0 %1207
        %1209 = vrot.lane.b32.xlu0 %v435, 48
        %v1210 = vpop.permute.xlu0 %1209
        %1211 = vrot.lane.b32.xlu0 %v436, 48
        %v1212 = vpop.permute.xlu0 %1211
        %1213 = vrot.lane.b32.xlu0 %v438, 48
        %v1214 = vpop.permute.xlu0 %1213
        %1215 = vrot.lane.b32.xlu0 %v439, 48
        %v1216 = vpop.permute.xlu0 %1215
        %1217 = vrot.lane.b32.xlu0 %v441, 48
        %v1218 = vpop.permute.xlu0 %1217
        %1219 = vrot.lane.b32.xlu0 %v442, 48
        %v1220 = vpop.permute.xlu0 %1219
        %1221 = vrot.lane.b32.xlu0 %v444, 48
        %v1222 = vpop.permute.xlu0 %1221
        %1223 = vrot.lane.b32.xlu0 %v445, 48
        %v1224 = vpop.permute.xlu0 %1223
        %1225 = vrot.lane.b32.xlu0 %v447, 48
        %v1226 = vpop.permute.xlu0 %1225
        %1227 = vrot.lane.b32.xlu0 %v448, 48
        %v1228 = vpop.permute.xlu0 %1227
        %1229 = vrot.lane.b32.xlu0 %v450, 48
        %v1230 = vpop.permute.xlu0 %1229
        %1231 = vrot.lane.b32.xlu0 %v451, 48
        %v1232 = vpop.permute.xlu0 %1231
        %1265 = vrot.lane.b32.xlu0 %v514, 56
        %v1266 = vpop.permute.xlu0 %1265
        %1267 = vrot.lane.b32.xlu0 %v516, 56
        %v1268 = vpop.permute.xlu0 %1267
        %1269 = vrot.lane.b32.xlu0 %v519, 56
        %v1270 = vpop.permute.xlu0 %1269
        %1271 = vrot.lane.b32.xlu0 %v521, 56
        %v1272 = vpop.permute.xlu0 %1271
        %1273 = vrot.lane.b32.xlu0 %v524, 56
        %v1274 = vpop.permute.xlu0 %1273
        %1275 = vrot.lane.b32.xlu0 %v526, 56
        %v1276 = vpop.permute.xlu0 %1275
        %1277 = vrot.lane.b32.xlu0 %v529, 56
        %v1278 = vpop.permute.xlu0 %1277
        %1279 = vrot.lane.b32.xlu0 %v531, 56
        %v1280 = vpop.permute.xlu0 %1279
        %1281 = vrot.lane.b32.xlu0 %v534, 56
        %v1282 = vpop.permute.xlu0 %1281
        %1283 = vrot.lane.b32.xlu0 %v536, 56
        %v1284 = vpop.permute.xlu0 %1283
        %1285 = vrot.lane.b32.xlu0 %v539, 56
        %v1286 = vpop.permute.xlu0 %1285
        %1287 = vrot.lane.b32.xlu0 %v541, 56
        %v1288 = vpop.permute.xlu0 %1287
        %1289 = vrot.lane.b32.xlu0 %v544, 56
        %v1290 = vpop.permute.xlu0 %1289
        %1291 = vrot.lane.b32.xlu0 %v546, 56
        %v1292 = vpop.permute.xlu0 %1291
        %1293 = vrot.lane.b32.xlu0 %v549, 56
        %v1294 = vpop.permute.xlu0 %1293
        %1295 = vrot.lane.b32.xlu0 %v551, 56
        %v1296 = vpop.permute.xlu0 %1295
        %1297 = vrot.lane.b32.xlu0 %v554, 56
        %v1298 = vpop.permute.xlu0 %1297
        %1299 = vrot.lane.b32.xlu0 %v556, 56
        %v1300 = vpop.permute.xlu0 %1299
        %1301 = vrot.lane.b32.xlu0 %v559, 56
        %v1302 = vpop.permute.xlu0 %1301
        %1303 = vrot.lane.b32.xlu0 %v561, 56
        %v1304 = vpop.permute.xlu0 %1303
        %1305 = vrot.lane.b32.xlu0 %v564, 56
        %v1306 = vpop.permute.xlu0 %1305
        %1307 = vrot.lane.b32.xlu0 %v566, 56
        %v1308 = vpop.permute.xlu0 %1307
        %1309 = vrot.lane.b32.xlu0 %v569, 56
        %v1310 = vpop.permute.xlu0 %1309
        %1311 = vrot.lane.b32.xlu0 %v571, 56
        %v1312 = vpop.permute.xlu0 %1311
        %1313 = vrot.lane.b32.xlu0 %v574, 56
        %v1314 = vpop.permute.xlu0 %1313
        %1315 = vrot.lane.b32.xlu0 %v576, 56
        %v1316 = vpop.permute.xlu0 %1315
        %1317 = vrot.lane.b32.xlu0 %v579, 56
        %v1318 = vpop.permute.xlu0 %1317
        %1319 = vrot.lane.b32.xlu0 %v581, 56
        %v1320 = vpop.permute.xlu0 %1319
        %1321 = vrot.lane.b32.xlu0 %v668, 56
        %v1322 = vpop.permute.xlu0 %1321
        %1323 = vrot.lane.b32.xlu0 %v670, 56
        %v1324 = vpop.permute.xlu0 %1323
        %1325 = vrot.lane.b32.xlu0 %v681, 56
        %v1326 = vpop.permute.xlu0 %1325
        %1327 = vrot.lane.b32.xlu0 %v683, 56
        %v1328 = vpop.permute.xlu0 %1327
        %1361 = vrot.lane.b32.xlu0 %v595, 64
        %v1362 = vpop.permute.xlu0 %1361
        %1363 = vrot.lane.b32.xlu0 %v597, 64
        %v1364 = vpop.permute.xlu0 %1363
        %1365 = vrot.lane.b32.xlu0 %v600, 64
        %v1366 = vpop.permute.xlu0 %1365
        %1367 = vrot.lane.b32.xlu0 %v602, 64
        %v1368 = vpop.permute.xlu0 %1367
        %1369 = vrot.lane.b32.xlu0 %v605, 64
        %v1370 = vpop.permute.xlu0 %1369
        %1371 = vrot.lane.b32.xlu0 %v607, 64
        %v1372 = vpop.permute.xlu0 %1371
        %1373 = vrot.lane.b32.xlu0 %v610, 64
        %v1374 = vpop.permute.xlu0 %1373
        %1375 = vrot.lane.b32.xlu0 %v612, 64
        %v1376 = vpop.permute.xlu0 %1375
        %1377 = vrot.lane.b32.xlu0 %v615, 64
        %v1378 = vpop.permute.xlu0 %1377
        %1379 = vrot.lane.b32.xlu0 %v617, 64
        %v1380 = vpop.permute.xlu0 %1379
        %1381 = vrot.lane.b32.xlu0 %v620, 64
        %v1382 = vpop.permute.xlu0 %1381
        %1383 = vrot.lane.b32.xlu0 %v622, 64
        %v1384 = vpop.permute.xlu0 %1383
        %1385 = vrot.lane.b32.xlu0 %v625, 64
        %v1386 = vpop.permute.xlu0 %1385
        %1387 = vrot.lane.b32.xlu0 %v627, 64
        %v1388 = vpop.permute.xlu0 %1387
        %1389 = vrot.lane.b32.xlu0 %v630, 64
        %v1390 = vpop.permute.xlu0 %1389
        %1391 = vrot.lane.b32.xlu0 %v632, 64
        %v1392 = vpop.permute.xlu0 %1391
        %1393 = vrot.lane.b32.xlu0 %v635, 64
        %v1394 = vpop.permute.xlu0 %1393
        %1395 = vrot.lane.b32.xlu0 %v637, 64
        %v1396 = vpop.permute.xlu0 %1395
        %1397 = vrot.lane.b32.xlu0 %v640, 64
        %v1398 = vpop.permute.xlu0 %1397
        %1399 = vrot.lane.b32.xlu0 %v642, 64
        %v1400 = vpop.permute.xlu0 %1399
        %1401 = vrot.lane.b32.xlu0 %v645, 64
        %v1402 = vpop.permute.xlu0 %1401
        %1403 = vrot.lane.b32.xlu0 %v647, 64
        %v1404 = vpop.permute.xlu0 %1403
        %1405 = vrot.lane.b32.xlu0 %v650, 64
        %v1406 = vpop.permute.xlu0 %1405
        %1407 = vrot.lane.b32.xlu0 %v652, 64
        %v1408 = vpop.permute.xlu0 %1407
        %1409 = vrot.lane.b32.xlu0 %v655, 64
        %v1410 = vpop.permute.xlu0 %1409
        %1411 = vrot.lane.b32.xlu0 %v657, 64
        %v1412 = vpop.permute.xlu0 %1411
        %1413 = vrot.lane.b32.xlu0 %v660, 64
        %v1414 = vpop.permute.xlu0 %1413
        %1415 = vrot.lane.b32.xlu0 %v662, 64
        %v1416 = vpop.permute.xlu0 %1415
        %1417 = vrot.lane.b32.xlu0 %v673, 64
        %v1418 = vpop.permute.xlu0 %1417
        %1419 = vrot.lane.b32.xlu0 %v675, 64
        %v1420 = vpop.permute.xlu0 %1419
        %1421 = vrot.lane.b32.xlu0 %v686, 64
        %v1422 = vpop.permute.xlu0 %1421
        %1423 = vrot.lane.b32.xlu0 %v688, 64
        %v1424 = vpop.permute.xlu0 %1423
        %v1457 = vsel %vm309, %v399, %v690
        %v1458 = vsel %vm309, %v400, %v692
        %v1459 = vsel %vm309, %v402, %v694
        %v1460 = vsel %vm309, %v403, %v696
        %v1461 = vsel %vm309, %v405, %v698
        %v1462 = vsel %vm309, %v406, %v700
        %v1463 = vsel %vm309, %v408, %v702
        %v1464 = vsel %vm309, %v409, %v704
        %v1465 = vsel %vm309, %v411, %v706
        %v1466 = vsel %vm309, %v412, %v708
        %v1467 = vsel %vm309, %v414, %v710
        %v1468 = vsel %vm309, %v415, %v712
        %v1469 = vsel %vm309, %v417, %v714
        %v1470 = vsel %vm309, %v418, %v716
        %v1471 = vsel %vm309, %v420, %v718
        %v1472 = vsel %vm309, %v421, %v720
        %v1473 = vsel %vm309, %v423, %v722
        %v1474 = vsel %vm309, %v424, %v724
        %v1475 = vsel %vm309, %v426, %v726
        %v1476 = vsel %vm309, %v427, %v728
        %v1477 = vsel %vm309, %v429, %v730
        %v1478 = vsel %vm309, %v430, %v732
        %v1479 = vsel %vm309, %v432, %v734
        %v1480 = vsel %vm309, %v433, %v736
        %v1481 = vsel %vm309, %v435, %v738
        %v1482 = vsel %vm309, %v436, %v740
        %v1483 = vsel %vm309, %v438, %v742
        %v1484 = vsel %vm309, %v439, %v744
        %v1485 = vsel %vm309, %v441, %v746
        %v1486 = vsel %vm309, %v442, %v748
        %v1487 = vsel %vm309, %v444, %v750
        %v1488 = vsel %vm309, %v445, %v752
        %vm1489 = vcmask 130048
        %v1490 = vsel %vm1489, %v1457, %v786
        %v1491 = vsel %vm1489, %v1458, %v788
        %v1492 = vsel %vm1489, %v1459, %v790
        %v1493 = vsel %vm1489, %v1460, %v792
        %v1494 = vsel %vm1489, %v1461, %v794
        %v1495 = vsel %vm1489, %v1462, %v796
        %v1496 = vsel %vm1489, %v1463, %v798
        %v1497 = vsel %vm1489, %v1464, %v800
        %v1498 = vsel %vm1489, %v1465, %v802
        %v1499 = vsel %vm1489, %v1466, %v804
        %v1500 = vsel %vm1489, %v1467, %v806
        %v1501 = vsel %vm1489, %v1468, %v808
        %v1502 = vsel %vm1489, %v1469, %v810
        %v1503 = vsel %vm1489, %v1470, %v812
        %v1504 = vsel %vm1489, %v1471, %v814
        %v1505 = vsel %vm1489, %v1472, %v816
        %v1506 = vsel %vm1489, %v1473, %v818
        %v1507 = vsel %vm1489, %v1474, %v820
        %v1508 = vsel %vm1489, %v1475, %v822
        %v1509 = vsel %vm1489, %v1476, %v824
        %v1510 = vsel %vm1489, %v1477, %v826
        %v1511 = vsel %vm1489, %v1478, %v828
        %v1512 = vsel %vm1489, %v1479, %v830
        %v1513 = vsel %vm1489, %v1480, %v832
        %v1514 = vsel %vm1489, %v1481, %v834
        %v1515 = vsel %vm1489, %v1482, %v836
        %v1516 = vsel %vm1489, %v1483, %v838
        %v1517 = vsel %vm1489, %v1484, %v840
        %v1518 = vsel %vm1489, %v1485, %v842
        %v1519 = vsel %vm1489, %v1486, %v844
        %v1520 = vsel %vm1489, %v1487, %v846
        %v1521 = vsel %vm1489, %v1488, %v848
        %vm1522 = vcmask 195584
        %v1523 = vsel %vm1522, %v1490, %v882
        %v1524 = vsel %vm1522, %v1491, %v884
        %v1525 = vsel %vm1522, %v1492, %v886
        %v1526 = vsel %vm1522, %v1493, %v888
        %v1527 = vsel %vm1522, %v1494, %v890
        %v1528 = vsel %vm1522, %v1495, %v892
        %v1529 = vsel %vm1522, %v1496, %v894
        %v1530 = vsel %vm1522, %v1497, %v896
        %v1531 = vsel %vm1522, %v1498, %v898
        %v1532 = vsel %vm1522, %v1499, %v900
        %v1533 = vsel %vm1522, %v1500, %v902
        %v1534 = vsel %vm1522, %v1501, %v904
        %v1535 = vsel %vm1522, %v1502, %v906
        %v1536 = vsel %vm1522, %v1503, %v908
        %v1537 = vsel %vm1522, %v1504, %v910
        %v1538 = vsel %vm1522, %v1505, %v912
        %v1539 = vsel %vm1522, %v1506, %v914
        %v1540 = vsel %vm1522, %v1507, %v916
        %v1541 = vsel %vm1522, %v1508, %v918
        %v1542 = vsel %vm1522, %v1509, %v920
        %v1543 = vsel %vm1522, %v1510, %v922
        %v1544 = vsel %vm1522, %v1511, %v924
        %v1545 = vsel %vm1522, %v1512, %v926
        %v1546 = vsel %vm1522, %v1513, %v928
        %v1547 = vsel %vm1522, %v1514, %v930
        %v1548 = vsel %vm1522, %v1515, %v932
        %v1549 = vsel %vm1522, %v1516, %v934
        %v1550 = vsel %vm1522, %v1517, %v936
        %v1551 = vsel %vm1522, %v1518, %v938
        %v1552 = vsel %vm1522, %v1519, %v940
        %v1553 = vsel %vm1522, %v1520, %v942
        %v1554 = vsel %vm1522, %v1521, %v944
        %vm1555 = vcmask 261120
        %v1556 = vsel %vm1555, %v1523, %v978
        %v1557 = vsel %vm1555, %v1524, %v980
        %v1558 = vsel %vm1555, %v1525, %v982
        %v1559 = vsel %vm1555, %v1526, %v984
        %v1560 = vsel %vm1555, %v1527, %v986
        %v1561 = vsel %vm1555, %v1528, %v988
        %v1562 = vsel %vm1555, %v1529, %v990
        %v1563 = vsel %vm1555, %v1530, %v992
        %v1564 = vsel %vm1555, %v1531, %v994
        %v1565 = vsel %vm1555, %v1532, %v996
        %v1566 = vsel %vm1555, %v1533, %v998
        %v1567 = vsel %vm1555, %v1534, %v1000
        %v1568 = vsel %vm1555, %v1535, %v1002
        %v1569 = vsel %vm1555, %v1536, %v1004
        %v1570 = vsel %vm1555, %v1537, %v1006
        %v1571 = vsel %vm1555, %v1538, %v1008
        %v1572 = vsel %vm1555, %v1539, %v1010
        %v1573 = vsel %vm1555, %v1540, %v1012
        %v1574 = vsel %vm1555, %v1541, %v1014
        %v1575 = vsel %vm1555, %v1542, %v1016
        %v1576 = vsel %vm1555, %v1543, %v1018
        %v1577 = vsel %vm1555, %v1544, %v1020
        %v1578 = vsel %vm1555, %v1545, %v1022
        %v1579 = vsel %vm1555, %v1546, %v1024
        %v1580 = vsel %vm1555, %v1547, %v1026
        %v1581 = vsel %vm1555, %v1548, %v1028
        %v1582 = vsel %vm1555, %v1549, %v1030
        %v1583 = vsel %vm1555, %v1550, %v1032
        %v1584 = vsel %vm1555, %v1551, %v1034
        %v1585 = vsel %vm1555, %v1552, %v1036
        %v1586 = vsel %vm1555, %v1553, %v1038
        %v1587 = vsel %vm1555, %v1554, %v1040
        %vm1588 = vcmask 326656
        %v1589 = vsel %vm1588, %v1556, %v1074
        %v1590 = vsel %vm1588, %v1557, %v1076
        %v1591 = vsel %vm1588, %v1558, %v1078
        %v1592 = vsel %vm1588, %v1559, %v1080
        %v1593 = vsel %vm1588, %v1560, %v1082
        %v1594 = vsel %vm1588, %v1561, %v1084
        %v1595 = vsel %vm1588, %v1562, %v1086
        %v1596 = vsel %vm1588, %v1563, %v1088
        %v1597 = vsel %vm1588, %v1564, %v1090
        %v1598 = vsel %vm1588, %v1565, %v1092
        %v1599 = vsel %vm1588, %v1566, %v1094
        %v1600 = vsel %vm1588, %v1567, %v1096
        %v1601 = vsel %vm1588, %v1568, %v1098
        %v1602 = vsel %vm1588, %v1569, %v1100
        %v1603 = vsel %vm1588, %v1570, %v1102
        %v1604 = vsel %vm1588, %v1571, %v1104
        %v1605 = vsel %vm1588, %v1572, %v1106
        %v1606 = vsel %vm1588, %v1573, %v1108
        %v1607 = vsel %vm1588, %v1574, %v1110
        %v1608 = vsel %vm1588, %v1575, %v1112
        %v1609 = vsel %vm1588, %v1576, %v1114
        %v1610 = vsel %vm1588, %v1577, %v1116
        %v1611 = vsel %vm1588, %v1578, %v1118
        %v1612 = vsel %vm1588, %v1579, %v1120
        %v1613 = vsel %vm1588, %v1580, %v1122
        %v1614 = vsel %vm1588, %v1581, %v1124
        %v1615 = vsel %vm1588, %v1582, %v1126
        %v1616 = vsel %vm1588, %v1583, %v1128
        %v1617 = vsel %vm1588, %v1584, %v1130
        %v1618 = vsel %vm1588, %v1585, %v1132
        %v1619 = vsel %vm1588, %v1586, %v1134
        %v1620 = vsel %vm1588, %v1587, %v1136
        %vm1621 = vcmask 392192
        %v1622 = vsel %vm1621, %v1589, %v1170
        %v1623 = vsel %vm1621, %v1590, %v1172
        %v1624 = vsel %vm1621, %v1591, %v1174
        %v1625 = vsel %vm1621, %v1592, %v1176
        %v1626 = vsel %vm1621, %v1593, %v1178
        %v1627 = vsel %vm1621, %v1594, %v1180
        %v1628 = vsel %vm1621, %v1595, %v1182
        %v1629 = vsel %vm1621, %v1596, %v1184
        %v1630 = vsel %vm1621, %v1597, %v1186
        %v1631 = vsel %vm1621, %v1598, %v1188
        %v1632 = vsel %vm1621, %v1599, %v1190
        %v1633 = vsel %vm1621, %v1600, %v1192
        %v1634 = vsel %vm1621, %v1601, %v1194
        %v1635 = vsel %vm1621, %v1602, %v1196
        %v1636 = vsel %vm1621, %v1603, %v1198
        %v1637 = vsel %vm1621, %v1604, %v1200
        %v1638 = vsel %vm1621, %v1605, %v1202
        %v1639 = vsel %vm1621, %v1606, %v1204
        %v1640 = vsel %vm1621, %v1607, %v1206
        %v1641 = vsel %vm1621, %v1608, %v1208
        %v1642 = vsel %vm1621, %v1609, %v1210
        %v1643 = vsel %vm1621, %v1610, %v1212
        %v1644 = vsel %vm1621, %v1611, %v1214
        %v1645 = vsel %vm1621, %v1612, %v1216
        %v1646 = vsel %vm1621, %v1613, %v1218
        %v1647 = vsel %vm1621, %v1614, %v1220
        %v1648 = vsel %vm1621, %v1615, %v1222
        %v1649 = vsel %vm1621, %v1616, %v1224
        %v1650 = vsel %vm1621, %v1617, %v1226
        %v1651 = vsel %vm1621, %v1618, %v1228
        %v1652 = vsel %vm1621, %v1619, %v1230
        %v1653 = vsel %vm1621, %v1620, %v1232
        %vm1654 = vcmask 457728
        %v1655 = vsel %vm1654, %v1622, %v1266
        %v1656 = vsel %vm1654, %v1623, %v1268
        %v1657 = vsel %vm1654, %v1624, %v1270
        %v1658 = vsel %vm1654, %v1625, %v1272
        %v1659 = vsel %vm1654, %v1626, %v1274
        %v1660 = vsel %vm1654, %v1627, %v1276
        %v1661 = vsel %vm1654, %v1628, %v1278
        %v1662 = vsel %vm1654, %v1629, %v1280
        %v1663 = vsel %vm1654, %v1630, %v1282
        %v1664 = vsel %vm1654, %v1631, %v1284
        %v1665 = vsel %vm1654, %v1632, %v1286
        %v1666 = vsel %vm1654, %v1633, %v1288
        %v1667 = vsel %vm1654, %v1634, %v1290
        %v1668 = vsel %vm1654, %v1635, %v1292
        %v1669 = vsel %vm1654, %v1636, %v1294
        %v1670 = vsel %vm1654, %v1637, %v1296
        %v1671 = vsel %vm1654, %v1638, %v1298
        %v1672 = vsel %vm1654, %v1639, %v1300
        %v1673 = vsel %vm1654, %v1640, %v1302
        %v1674 = vsel %vm1654, %v1641, %v1304
        %v1675 = vsel %vm1654, %v1642, %v1306
        %v1676 = vsel %vm1654, %v1643, %v1308
        %v1677 = vsel %vm1654, %v1644, %v1310
        %v1678 = vsel %vm1654, %v1645, %v1312
        %v1679 = vsel %vm1654, %v1646, %v1314
        %v1680 = vsel %vm1654, %v1647, %v1316
        %v1681 = vsel %vm1654, %v1648, %v1318
        %v1682 = vsel %vm1654, %v1649, %v1320
        %v1683 = vsel %vm1654, %v1650, %v1322
        %v1684 = vsel %vm1654, %v1651, %v1324
        %v1685 = vsel %vm1654, %v1652, %v1326
        %v1686 = vsel %vm1654, %v1653, %v1328
        %vm1687 = vcmask 523264
        %v1688 = vsel %vm1687, %v1655, %v1362
        %v1689 = vsel %vm1687, %v1656, %v1364
        %v1690 = vsel %vm1687, %v1657, %v1366
        %v1691 = vsel %vm1687, %v1658, %v1368
        %v1692 = vsel %vm1687, %v1659, %v1370
        %v1693 = vsel %vm1687, %v1660, %v1372
        %v1694 = vsel %vm1687, %v1661, %v1374
        %v1695 = vsel %vm1687, %v1662, %v1376
        %v1696 = vsel %vm1687, %v1663, %v1378
        %v1697 = vsel %vm1687, %v1664, %v1380
        %v1698 = vsel %vm1687, %v1665, %v1382
        %v1699 = vsel %vm1687, %v1666, %v1384
        %v1700 = vsel %vm1687, %v1667, %v1386
        %v1701 = vsel %vm1687, %v1668, %v1388
        %v1702 = vsel %vm1687, %v1669, %v1390
        %v1703 = vsel %vm1687, %v1670, %v1392
        %v1704 = vsel %vm1687, %v1671, %v1394
        %v1705 = vsel %vm1687, %v1672, %v1396
        %v1706 = vsel %vm1687, %v1673, %v1398
        %v1707 = vsel %vm1687, %v1674, %v1400
        %v1708 = vsel %vm1687, %v1675, %v1402
        %v1709 = vsel %vm1687, %v1676, %v1404
        %v1710 = vsel %vm1687, %v1677, %v1406
        %v1711 = vsel %vm1687, %v1678, %v1408
        %v1712 = vsel %vm1687, %v1679, %v1410
        %v1713 = vsel %vm1687, %v1680, %v1412
        %v1714 = vsel %vm1687, %v1681, %v1414
        %v1715 = vsel %vm1687, %v1682, %v1416
        %v1716 = vsel %vm1687, %v1683, %v1418
        %v1717 = vsel %vm1687, %v1684, %v1420
        %v1718 = vsel %vm1687, %v1685, %v1422
        %v1719 = vsel %vm1687, %v1686, %v1424
        %v1720 = vld [vmem:[%s1] sm:$0xff]
        %v1721 = vld [vmem:[%s1 + $0x8] sm:$0xff]
        %v1722 = vld [vmem:[%s1 + $0x10] sm:$0xff]
        %v1723 = vld [vmem:[%s1 + $0x18] sm:$0xff]
        %v1724 = vld [vmem:[%s1 + $0x20] sm:$0xff]
        %v1725 = vld [vmem:[%s1 + $0x28] sm:$0xff]
        %v1726 = vld [vmem:[%s1 + $0x30] sm:$0xff]
        %v1727 = vld [vmem:[%s1 + $0x38] sm:$0xff]
        %v1728 = vld [vmem:[%s1 + $0x40] sm:$0xff]
        %v1729 = vld [vmem:[%s2] sm:$0x1]
        %v1731 = vlaneseq
        %v1732 = vshrl.u32 %v1731, 7
        %v1733 = vsub.s32 0, %v1732
        %v1734 = vrot.slane %v1729, %v1733
        %vm1736 = vcmask 588800
        %v1738 = vsel %vm1736, %v1688, 0
        %v1741 = vsel %vm1736, %v1689, 0
        %v1744 = vsel %vm1736, %v1690, 0
        %v1747 = vsel %vm1736, %v1691, 0
        %v1750 = vsel %vm1736, %v1692, 0
        %v1753 = vsel %vm1736, %v1693, 0
        %v1756 = vsel %vm1736, %v1694, 0
        %v1759 = vsel %vm1736, %v1695, 0
        %v1762 = vsel %vm1736, %v1696, 0
        %v1765 = vsel %vm1736, %v1697, 0
        %v1768 = vsel %vm1736, %v1698, 0
        %v1771 = vsel %vm1736, %v1699, 0
        %v1774 = vsel %vm1736, %v1700, 0
        %v1777 = vsel %vm1736, %v1701, 0
        %v1780 = vsel %vm1736, %v1702, 0
        %v1783 = vsel %vm1736, %v1703, 0
        %v1786 = vsel %vm1736, %v1704, 0
        %v1789 = vsel %vm1736, %v1705, 0
        %v1792 = vsel %vm1736, %v1706, 0
        %v1795 = vsel %vm1736, %v1707, 0
        %v1798 = vsel %vm1736, %v1708, 0
        %v1801 = vsel %vm1736, %v1709, 0
        %v1804 = vsel %vm1736, %v1710, 0
        %v1807 = vsel %vm1736, %v1711, 0
        %v1810 = vsel %vm1736, %v1712, 0
        %v1813 = vsel %vm1736, %v1713, 0
        %v1816 = vsel %vm1736, %v1714, 0
        %v1819 = vsel %vm1736, %v1715, 0
        %v1822 = vsel %vm1736, %v1716, 0
        %v1825 = vsel %vm1736, %v1717, 0
        %v1828 = vsel %vm1736, %v1718, 0
        %v1831 = vsel %vm1736, %v1719, 0
        %1833 = vmatprep.subr.mxu0 0.0
        %1834 = vmatpush1.msra.mxu0 0.0
        %1835 = vmatprep.subr.mxu0 0.0
        %1836 = vmatpush1.msra.mxu0 0.0
        %1837 = vmatprep.subr.mxu0 0.0
        %1838 = vmatpush1.msra.mxu0 0.0
        %1839 = vmatprep.subr.mxu0 0.0
        %1840 = vmatpush1.msra.mxu0 0.0
        %1841 = vmatprep.subr.mxu0 0.0
        %1842 = vmatpush1.msra.mxu0 0.0
        %1843 = vmatprep.subr.mxu0 0.0
        %1844 = vmatpush1.msra.mxu0 0.0
        %1845 = vmatprep.subr.mxu0 0.0
        %1846 = vmatpush1.msra.mxu0 0.0
        %1847 = vmatprep.subr.mxu0 0.0
        %1848 = vmatpush1.msra.mxu0 %v1728
        %1849 = vmatprep.subr.mxu0 0.0
        %1850 = vmatpush1.msra.mxu0 %v1727
        %1851 = vmatprep.subr.mxu0 0.0
        %1852 = vmatpush1.msra.mxu0 %v1726
        %1853 = vmatprep.subr.mxu0 0.0
        %1854 = vmatpush1.msra.mxu0 %v1725
        %1855 = vmatprep.subr.mxu0 0.0
        %1856 = vmatpush1.msra.mxu0 %v1724
        %1857 = vmatprep.subr.mxu0 0.0
        %1858 = vmatpush1.msra.mxu0 %v1723
        %1859 = vmatprep.subr.mxu0 0.0
        %1860 = vmatpush1.msra.mxu0 %v1722
        %1861 = vmatprep.subr.mxu0 0.0
        %1862 = vmatpush1.msra.mxu0 %v1721
        %1863 = vmatprep.subr.mxu0 0.0
        %1864 = vmatpush1.msra.mxu0 %v1720
        %1865 = vmatprep.subr.mxu0 0.0
        %1866 = vmatpush2.msra.mxu0 0.0
        %1867 = vmatprep.subr.mxu0 0.0
        %1868 = vmatpush2.msra.mxu0 0.0
        %1869 = vmatprep.subr.mxu0 0.0
        %1870 = vmatpush2.msra.mxu0 0.0
        %1871 = vmatprep.subr.mxu0 0.0
        %1872 = vmatpush2.msra.mxu0 0.0
        %1873 = vmatprep.subr.mxu0 0.0
        %1874 = vmatpush2.msra.mxu0 0.0
        %1875 = vmatprep.subr.mxu0 0.0
        %1876 = vmatpush2.msra.mxu0 0.0
        %1877 = vmatprep.subr.mxu0 0.0
        %1878 = vmatpush2.msra.mxu0 0.0
        %1879 = vmatprep.subr.mxu0 0.0
        %1880 = vmatpush2.msra.mxu0 0.0
        %1881 = vmatprep.subr.mxu0 0.0
        %1882 = vmatpush2.msra.mxu0 0.0
        %1883 = vmatprep.subr.mxu0 0.0
        %1884 = vmatpush2.msra.mxu0 0.0
        %1885 = vmatprep.subr.mxu0 0.0
        %1886 = vmatpush2.msra.mxu0 0.0
        %1887 = vmatprep.subr.mxu0 0.0
        %1888 = vmatpush2.msra.mxu0 0.0
        %1889 = vmatprep.subr.mxu0 0.0
        %1890 = vmatpush2.msra.mxu0 0.0
        %1891 = vmatprep.subr.mxu0 0.0
        %1892 = vmatpush2.msra.mxu0 0.0
        %1893 = vmatprep.subr.mxu0 0.0
        %1894 = vmatpush2.msra.mxu0 0.0
        %1895 = vmatprep.subr.mxu0 0.0
        %1896 = vmatpush2.msra.mxu0 0.0
        %1897 = vmatprep.mubr.f32.mxu0 0.0
        %1898 = vmatmul.mubr.f32.gmra.mxu0 %v1738
        %v1899 = vpop.f32.mrf.mxu0
        %v1900 = vadd.f32 %v1734, %v1899
        %v1901 = vpop.f32.mrf.mxu0
        %1902 = vmatprep.mubr.f32.mxu0 0.0
        %1903 = vmatmul.mubr.f32.gmra.mxu0 %v1741
        %v1904 = vpop.f32.mrf.mxu0
        %v1905 = vadd.f32 %v1734, %v1904
        %v1906 = vpop.f32.mrf.mxu0
        %1907 = vmatprep.mubr.f32.mxu0 0.0
        %1908 = vmatmul.mubr.f32.gmra.mxu0 %v1744
        %v1909 = vpop.f32.mrf.mxu0
        %v1910 = vadd.f32 %v1734, %v1909
        %v1911 = vpop.f32.mrf.mxu0
        %1912 = vmatprep.mubr.f32.mxu0 0.0
        %1913 = vmatmul.mubr.f32.gmra.mxu0 %v1747
        %v1914 = vpop.f32.mrf.mxu0
        %v1915 = vadd.f32 %v1734, %v1914
        %v1916 = vpop.f32.mrf.mxu0
        %1917 = vmatprep.mubr.f32.mxu0 0.0
        %1918 = vmatmul.mubr.f32.gmra.mxu0 %v1750
        %v1919 = vpop.f32.mrf.mxu0
        %v1920 = vadd.f32 %v1734, %v1919
        %v1921 = vpop.f32.mrf.mxu0
        %1922 = vmatprep.mubr.f32.mxu0 0.0
        %1923 = vmatmul.mubr.f32.gmra.mxu0 %v1753
        %v1924 = vpop.f32.mrf.mxu0
        %v1925 = vadd.f32 %v1734, %v1924
        %v1926 = vpop.f32.mrf.mxu0
        %1927 = vmatprep.mubr.f32.mxu0 0.0
        %1928 = vmatmul.mubr.f32.gmra.mxu0 %v1756
        %v1929 = vpop.f32.mrf.mxu0
        %v1930 = vadd.f32 %v1734, %v1929
        %v1931 = vpop.f32.mrf.mxu0
        %1932 = vmatprep.mubr.f32.mxu0 0.0
        %1933 = vmatmul.mubr.f32.gmra.mxu0 %v1759
        %v1934 = vpop.f32.mrf.mxu0
        %v1935 = vadd.f32 %v1734, %v1934
        %v1936 = vpop.f32.mrf.mxu0
        %1937 = vmatprep.mubr.f32.mxu0 0.0
        %1938 = vmatmul.mubr.f32.gmra.mxu0 %v1762
        %v1939 = vpop.f32.mrf.mxu0
        %v1940 = vadd.f32 %v1734, %v1939
        %v1941 = vpop.f32.mrf.mxu0
        %1942 = vmatprep.mubr.f32.mxu0 0.0
        %1943 = vmatmul.mubr.f32.gmra.mxu0 %v1765
        %v1944 = vpop.f32.mrf.mxu0
        %v1945 = vadd.f32 %v1734, %v1944
        %v1946 = vpop.f32.mrf.mxu0
        %1947 = vmatprep.mubr.f32.mxu0 0.0
        %1948 = vmatmul.mubr.f32.gmra.mxu0 %v1768
        %v1949 = vpop.f32.mrf.mxu0
        %v1950 = vadd.f32 %v1734, %v1949
        %v1951 = vpop.f32.mrf.mxu0
        %1952 = vmatprep.mubr.f32.mxu0 0.0
        %1953 = vmatmul.mubr.f32.gmra.mxu0 %v1771
        %v1954 = vpop.f32.mrf.mxu0
        %v1955 = vadd.f32 %v1734, %v1954
        %v1956 = vpop.f32.mrf.mxu0
        %1957 = vmatprep.mubr.f32.mxu0 0.0
        %1958 = vmatmul.mubr.f32.gmra.mxu0 %v1774
        %v1959 = vpop.f32.mrf.mxu0
        %v1960 = vadd.f32 %v1734, %v1959
        %v1961 = vpop.f32.mrf.mxu0
        %1962 = vmatprep.mubr.f32.mxu0 0.0
        %1963 = vmatmul.mubr.f32.gmra.mxu0 %v1777
        %v1964 = vpop.f32.mrf.mxu0
        %v1965 = vadd.f32 %v1734, %v1964
        %v1966 = vpop.f32.mrf.mxu0
        %1967 = vmatprep.mubr.f32.mxu0 0.0
        %1968 = vmatmul.mubr.f32.gmra.mxu0 %v1780
        %v1969 = vpop.f32.mrf.mxu0
        %v1970 = vadd.f32 %v1734, %v1969
        %v1971 = vpop.f32.mrf.mxu0
        %1972 = vmatprep.mubr.f32.mxu0 0.0
        %1973 = vmatmul.mubr.f32.gmra.mxu0 %v1783
        %v1974 = vpop.f32.mrf.mxu0
        %v1975 = vadd.f32 %v1734, %v1974
        %v1976 = vpop.f32.mrf.mxu0
        %1977 = vmatprep.mubr.f32.mxu0 0.0
        %1978 = vmatmul.mubr.f32.gmra.mxu0 %v1786
        %v1979 = vpop.f32.mrf.mxu0
        %v1980 = vadd.f32 %v1734, %v1979
        %v1981 = vpop.f32.mrf.mxu0
        %1982 = vmatprep.mubr.f32.mxu0 0.0
        %1983 = vmatmul.mubr.f32.gmra.mxu0 %v1789
        %v1984 = vpop.f32.mrf.mxu0
        %v1985 = vadd.f32 %v1734, %v1984
        %v1986 = vpop.f32.mrf.mxu0
        %1987 = vmatprep.mubr.f32.mxu0 0.0
        %1988 = vmatmul.mubr.f32.gmra.mxu0 %v1792
        %v1989 = vpop.f32.mrf.mxu0
        %v1990 = vadd.f32 %v1734, %v1989
        %v1991 = vpop.f32.mrf.mxu0
        %1992 = vmatprep.mubr.f32.mxu0 0.0
        %1993 = vmatmul.mubr.f32.gmra.mxu0 %v1795
        %v1994 = vpop.f32.mrf.mxu0
        %v1995 = vadd.f32 %v1734, %v1994
        %v1996 = vpop.f32.mrf.mxu0
        %1997 = vmatprep.mubr.f32.mxu0 0.0
        %1998 = vmatmul.mubr.f32.gmra.mxu0 %v1798
        %v1999 = vpop.f32.mrf.mxu0
        %v2000 = vadd.f32 %v1734, %v1999
        %v2001 = vpop.f32.mrf.mxu0
        %2002 = vmatprep.mubr.f32.mxu0 0.0
        %2003 = vmatmul.mubr.f32.gmra.mxu0 %v1801
        %v2004 = vpop.f32.mrf.mxu0
        %v2005 = vadd.f32 %v1734, %v2004
        %v2006 = vpop.f32.mrf.mxu0
        %2007 = vmatprep.mubr.f32.mxu0 0.0
        %2008 = vmatmul.mubr.f32.gmra.mxu0 %v1804
        %v2009 = vpop.f32.mrf.mxu0
        %v2010 = vadd.f32 %v1734, %v2009
        %v2011 = vpop.f32.mrf.mxu0
        %2012 = vmatprep.mubr.f32.mxu0 0.0
        %2013 = vmatmul.mubr.f32.gmra.mxu0 %v1807
        %v2014 = vpop.f32.mrf.mxu0
        %v2015 = vadd.f32 %v1734, %v2014
        %v2016 = vpop.f32.mrf.mxu0
        %2017 = vmatprep.mubr.f32.mxu0 0.0
        %2018 = vmatmul.mubr.f32.gmra.mxu0 %v1810
        %v2019 = vpop.f32.mrf.mxu0
        %v2020 = vadd.f32 %v1734, %v2019
        %v2021 = vpop.f32.mrf.mxu0
        %2022 = vmatprep.mubr.f32.mxu0 0.0
        %2023 = vmatmul.mubr.f32.gmra.mxu0 %v1813
        %v2024 = vpop.f32.mrf.mxu0
        %v2025 = vadd.f32 %v1734, %v2024
        %v2026 = vpop.f32.mrf.mxu0
        %2027 = vmatprep.mubr.f32.mxu0 0.0
        %2028 = vmatmul.mubr.f32.gmra.mxu0 %v1816
        %v2029 = vpop.f32.mrf.mxu0
        %v2030 = vadd.f32 %v1734, %v2029
        %v2031 = vpop.f32.mrf.mxu0
        %2032 = vmatprep.mubr.f32.mxu0 0.0
        %2033 = vmatmul.mubr.f32.gmra.mxu0 %v1819
        %v2034 = vpop.f32.mrf.mxu0
        %v2035 = vadd.f32 %v1734, %v2034
        %v2036 = vpop.f32.mrf.mxu0
        %2037 = vmatprep.mubr.f32.mxu0 0.0
        %2038 = vmatmul.mubr.f32.gmra.mxu0 %v1822
        %v2039 = vpop.f32.mrf.mxu0
        %v2040 = vadd.f32 %v1734, %v2039
        %v2041 = vpop.f32.mrf.mxu0
        %2042 = vmatprep.mubr.f32.mxu0 0.0
        %2043 = vmatmul.mubr.f32.gmra.mxu0 %v1825
        %v2044 = vpop.f32.mrf.mxu0
        %v2045 = vadd.f32 %v1734, %v2044
        %v2046 = vpop.f32.mrf.mxu0
        %2047 = vmatprep.mubr.f32.mxu0 0.0
        %2048 = vmatmul.mubr.f32.gmra.mxu0 %v1828
        %v2049 = vpop.f32.mrf.mxu0
        %v2050 = vadd.f32 %v1734, %v2049
        %v2051 = vpop.f32.mrf.mxu0
        %2052 = vmatprep.mubr.f32.mxu0 0.0
        %2053 = vmatmul.mubr.f32.gmra.mxu0 %v1831
        %v2054 = vpop.f32.mrf.mxu0
        %v2055 = vadd.f32 %v1734, %v2054
        %v2056 = vpop.f32.mrf.mxu0
        %2057 = vdwg.mxu0
        %v2058 = vmax.f32 %v1900, 0.0
        %v2059 = vmax.f32 %v1905, 0.0
        %v2060 = vmax.f32 %v1910, 0.0
        %v2061 = vmax.f32 %v1915, 0.0
        %v2062 = vmax.f32 %v1920, 0.0
        %v2063 = vmax.f32 %v1925, 0.0
        %v2064 = vmax.f32 %v1930, 0.0
        %v2065 = vmax.f32 %v1935, 0.0
        %v2066 = vmax.f32 %v1940, 0.0
        %v2067 = vmax.f32 %v1945, 0.0
        %v2068 = vmax.f32 %v1950, 0.0
        %v2069 = vmax.f32 %v1955, 0.0
        %v2070 = vmax.f32 %v1960, 0.0
        %v2071 = vmax.f32 %v1965, 0.0
        %v2072 = vmax.f32 %v1970, 0.0
        %v2073 = vmax.f32 %v1975, 0.0
        %v2074 = vmax.f32 %v1980, 0.0
        %v2075 = vmax.f32 %v1985, 0.0
        %v2076 = vmax.f32 %v1990, 0.0
        %v2077 = vmax.f32 %v1995, 0.0
        %v2078 = vmax.f32 %v2000, 0.0
        %v2079 = vmax.f32 %v2005, 0.0
        %v2080 = vmax.f32 %v2010, 0.0
        %v2081 = vmax.f32 %v2015, 0.0
        %v2082 = vmax.f32 %v2020, 0.0
        %v2083 = vmax.f32 %v2025, 0.0
        %v2084 = vmax.f32 %v2030, 0.0
        %v2085 = vmax.f32 %v2035, 0.0
        %v2086 = vmax.f32 %v2040, 0.0
        %v2087 = vmax.f32 %v2045, 0.0
        %v2088 = vmax.f32 %v2050, 0.0
        %v2089 = vmax.f32 %v2055, 0.0
        %v2122 = vcombine.high %v2058, %v2058
        %v2124 = vunpack.c.l.s4 1983009808
        %v2125 = vunpack.c.0.s8 %v2124
        %v2126 = vlaneseq
        %v2127 = vshrl.u32 %v2126, 7
        %v2128 = vsub.s32 %v2125, %v2127
        %v2129 = vrot.slane %v2058, %v2128
        %v2131 = vunpack.c.l.s4 1983009808
        %v2132 = vunpack.c.0.s8 %v2131
        %v2133 = vlaneseq
        %v2134 = vshrl.u32 %v2133, 7
        %v2135 = vsub.s32 %v2132, %v2134
        %v2136 = vrot.slane %v2122, %v2135
        %v2137 = vcombine.high %v2129, %v2129
        %v2138 = vcombine.high %v2136, %v2136
        %v2139 = vcombine.high %v2059, %v2059
        %v2141 = vunpack.c.l.s4 1983009808
        %v2142 = vunpack.c.0.s8 %v2141
        %v2143 = vlaneseq
        %v2144 = vshrl.u32 %v2143, 7
        %v2145 = vsub.s32 %v2142, %v2144
        %v2146 = vrot.slane %v2059, %v2145
        %v2148 = vunpack.c.l.s4 1983009808
        %v2149 = vunpack.c.0.s8 %v2148
        %v2150 = vlaneseq
        %v2151 = vshrl.u32 %v2150, 7
        %v2152 = vsub.s32 %v2149, %v2151
        %v2153 = vrot.slane %v2139, %v2152
        %v2154 = vcombine.high %v2146, %v2146
        %v2155 = vcombine.high %v2153, %v2153
        %v2156 = vcombine.high %v2060, %v2060
        %v2158 = vunpack.c.l.s4 1983009808
        %v2159 = vunpack.c.0.s8 %v2158
        %v2160 = vlaneseq
        %v2161 = vshrl.u32 %v2160, 7
        %v2162 = vsub.s32 %v2159, %v2161
        %v2163 = vrot.slane %v2060, %v2162
        %v2165 = vunpack.c.l.s4 1983009808
        %v2166 = vunpack.c.0.s8 %v2165
        %v2167 = vlaneseq
        %v2168 = vshrl.u32 %v2167, 7
        %v2169 = vsub.s32 %v2166, %v2168
        %v2170 = vrot.slane %v2156, %v2169
        %v2171 = vcombine.high %v2163, %v2163
        %v2172 = vcombine.high %v2170, %v2170
        %v2173 = vcombine.high %v2061, %v2061
        %v2175 = vunpack.c.l.s4 1983009808
        %v2176 = vunpack.c.0.s8 %v2175
        %v2177 = vlaneseq
        %v2178 = vshrl.u32 %v2177, 7
        %v2179 = vsub.s32 %v2176, %v2178
        %v2180 = vrot.slane %v2061, %v2179
        %v2182 = vunpack.c.l.s4 1983009808
        %v2183 = vunpack.c.0.s8 %v2182
        %v2184 = vlaneseq
        %v2185 = vshrl.u32 %v2184, 7
        %v2186 = vsub.s32 %v2183, %v2185
        %v2187 = vrot.slane %v2173, %v2186
        %v2188 = vcombine.high %v2180, %v2180
        %v2189 = vcombine.high %v2187, %v2187
        %v2190 = vcombine.high %v2062, %v2062
        %v2192 = vunpack.c.l.s4 1983009808
        %v2193 = vunpack.c.0.s8 %v2192
        %v2194 = vlaneseq
        %v2195 = vshrl.u32 %v2194, 7
        %v2196 = vsub.s32 %v2193, %v2195
        %v2197 = vrot.slane %v2062, %v2196
        %v2199 = vunpack.c.l.s4 1983009808
        %v2200 = vunpack.c.0.s8 %v2199
        %v2201 = vlaneseq
        %v2202 = vshrl.u32 %v2201, 7
        %v2203 = vsub.s32 %v2200, %v2202
        %v2204 = vrot.slane %v2190, %v2203
        %v2205 = vcombine.high %v2197, %v2197
        %v2206 = vcombine.high %v2204, %v2204
        %v2207 = vcombine.high %v2063, %v2063
        %v2209 = vunpack.c.l.s4 1983009808
        %v2210 = vunpack.c.0.s8 %v2209
        %v2211 = vlaneseq
        %v2212 = vshrl.u32 %v2211, 7
        %v2213 = vsub.s32 %v2210, %v2212
        %v2214 = vrot.slane %v2063, %v2213
        %v2216 = vunpack.c.l.s4 1983009808
        %v2217 = vunpack.c.0.s8 %v2216
        %v2218 = vlaneseq
        %v2219 = vshrl.u32 %v2218, 7
        %v2220 = vsub.s32 %v2217, %v2219
        %v2221 = vrot.slane %v2207, %v2220
        %v2222 = vcombine.high %v2214, %v2214
        %v2223 = vcombine.high %v2221, %v2221
        %v2224 = vcombine.high %v2064, %v2064
        %v2226 = vunpack.c.l.s4 1983009808
        %v2227 = vunpack.c.0.s8 %v2226
        %v2228 = vlaneseq
        %v2229 = vshrl.u32 %v2228, 7
        %v2230 = vsub.s32 %v2227, %v2229
        %v2231 = vrot.slane %v2064, %v2230
        %v2233 = vunpack.c.l.s4 1983009808
        %v2234 = vunpack.c.0.s8 %v2233
        %v2235 = vlaneseq
        %v2236 = vshrl.u32 %v2235, 7
        %v2237 = vsub.s32 %v2234, %v2236
        %v2238 = vrot.slane %v2224, %v2237
        %v2239 = vcombine.high %v2231, %v2231
        %v2240 = vcombine.high %v2238, %v2238
        %v2241 = vcombine.high %v2065, %v2065
        %v2243 = vunpack.c.l.s4 1983009808
        %v2244 = vunpack.c.0.s8 %v2243
        %v2245 = vlaneseq
        %v2246 = vshrl.u32 %v2245, 7
        %v2247 = vsub.s32 %v2244, %v2246
        %v2248 = vrot.slane %v2065, %v2247
        %v2250 = vunpack.c.l.s4 1983009808
        %v2251 = vunpack.c.0.s8 %v2250
        %v2252 = vlaneseq
        %v2253 = vshrl.u32 %v2252, 7
        %v2254 = vsub.s32 %v2251, %v2253
        %v2255 = vrot.slane %v2241, %v2254
        %v2256 = vcombine.high %v2248, %v2248
        %v2257 = vcombine.high %v2255, %v2255
        %v2258 = vcombine.high %v2066, %v2066
        %v2260 = vunpack.c.l.s4 1983009808
        %v2261 = vunpack.c.0.s8 %v2260
        %v2262 = vlaneseq
        %v2263 = vshrl.u32 %v2262, 7
        %v2264 = vsub.s32 %v2261, %v2263
        %v2265 = vrot.slane %v2066, %v2264
        %v2267 = vunpack.c.l.s4 1983009808
        %v2268 = vunpack.c.0.s8 %v2267
        %v2269 = vlaneseq
        %v2270 = vshrl.u32 %v2269, 7
        %v2271 = vsub.s32 %v2268, %v2270
        %v2272 = vrot.slane %v2258, %v2271
        %v2273 = vcombine.high %v2265, %v2265
        %v2274 = vcombine.high %v2272, %v2272
        %v2275 = vcombine.high %v2067, %v2067
        %v2277 = vunpack.c.l.s4 1983009808
        %v2278 = vunpack.c.0.s8 %v2277
        %v2279 = vlaneseq
        %v2280 = vshrl.u32 %v2279, 7
        %v2281 = vsub.s32 %v2278, %v2280
        %v2282 = vrot.slane %v2067, %v2281
        %v2284 = vunpack.c.l.s4 1983009808
        %v2285 = vunpack.c.0.s8 %v2284
        %v2286 = vlaneseq
        %v2287 = vshrl.u32 %v2286, 7
        %v2288 = vsub.s32 %v2285, %v2287
        %v2289 = vrot.slane %v2275, %v2288
        %v2290 = vcombine.high %v2282, %v2282
        %v2291 = vcombine.high %v2289, %v2289
        %v2292 = vcombine.high %v2068, %v2068
        %v2294 = vunpack.c.l.s4 1983009808
        %v2295 = vunpack.c.0.s8 %v2294
        %v2296 = vlaneseq
        %v2297 = vshrl.u32 %v2296, 7
        %v2298 = vsub.s32 %v2295, %v2297
        %v2299 = vrot.slane %v2068, %v2298
        %v2301 = vunpack.c.l.s4 1983009808
        %v2302 = vunpack.c.0.s8 %v2301
        %v2303 = vlaneseq
        %v2304 = vshrl.u32 %v2303, 7
        %v2305 = vsub.s32 %v2302, %v2304
        %v2306 = vrot.slane %v2292, %v2305
        %v2307 = vcombine.high %v2299, %v2299
        %v2308 = vcombine.high %v2306, %v2306
        %v2309 = vcombine.high %v2069, %v2069
        %v2311 = vunpack.c.l.s4 1983009808
        %v2312 = vunpack.c.0.s8 %v2311
        %v2313 = vlaneseq
        %v2314 = vshrl.u32 %v2313, 7
        %v2315 = vsub.s32 %v2312, %v2314
        %v2316 = vrot.slane %v2069, %v2315
        %v2318 = vunpack.c.l.s4 1983009808
        %v2319 = vunpack.c.0.s8 %v2318
        %v2320 = vlaneseq
        %v2321 = vshrl.u32 %v2320, 7
        %v2322 = vsub.s32 %v2319, %v2321
        %v2323 = vrot.slane %v2309, %v2322
        %v2324 = vcombine.high %v2316, %v2316
        %v2325 = vcombine.high %v2323, %v2323
        %v2326 = vcombine.high %v2070, %v2070
        %v2328 = vunpack.c.l.s4 1983009808
        %v2329 = vunpack.c.0.s8 %v2328
        %v2330 = vlaneseq
        %v2331 = vshrl.u32 %v2330, 7
        %v2332 = vsub.s32 %v2329, %v2331
        %v2333 = vrot.slane %v2070, %v2332
        %v2335 = vunpack.c.l.s4 1983009808
        %v2336 = vunpack.c.0.s8 %v2335
        %v2337 = vlaneseq
        %v2338 = vshrl.u32 %v2337, 7
        %v2339 = vsub.s32 %v2336, %v2338
        %v2340 = vrot.slane %v2326, %v2339
        %v2341 = vcombine.high %v2333, %v2333
        %v2342 = vcombine.high %v2340, %v2340
        %v2343 = vcombine.high %v2071, %v2071
        %v2345 = vunpack.c.l.s4 1983009808
        %v2346 = vunpack.c.0.s8 %v2345
        %v2347 = vlaneseq
        %v2348 = vshrl.u32 %v2347, 7
        %v2349 = vsub.s32 %v2346, %v2348
        %v2350 = vrot.slane %v2071, %v2349
        %v2352 = vunpack.c.l.s4 1983009808
        %v2353 = vunpack.c.0.s8 %v2352
        %v2354 = vlaneseq
        %v2355 = vshrl.u32 %v2354, 7
        %v2356 = vsub.s32 %v2353, %v2355
        %v2357 = vrot.slane %v2343, %v2356
        %v2358 = vcombine.high %v2350, %v2350
        %v2359 = vcombine.high %v2357, %v2357
        %v2360 = vcombine.high %v2072, %v2072
        %v2362 = vunpack.c.l.s4 1983009808
        %v2363 = vunpack.c.0.s8 %v2362
        %v2364 = vlaneseq
        %v2365 = vshrl.u32 %v2364, 7
        %v2366 = vsub.s32 %v2363, %v2365
        %v2367 = vrot.slane %v2072, %v2366
        %v2369 = vunpack.c.l.s4 1983009808
        %v2370 = vunpack.c.0.s8 %v2369
        %v2371 = vlaneseq
        %v2372 = vshrl.u32 %v2371, 7
        %v2373 = vsub.s32 %v2370, %v2372
        %v2374 = vrot.slane %v2360, %v2373
        %v2375 = vcombine.high %v2367, %v2367
        %v2376 = vcombine.high %v2374, %v2374
        %v2377 = vcombine.high %v2073, %v2073
        %v2379 = vunpack.c.l.s4 1983009808
        %v2380 = vunpack.c.0.s8 %v2379
        %v2381 = vlaneseq
        %v2382 = vshrl.u32 %v2381, 7
        %v2383 = vsub.s32 %v2380, %v2382
        %v2384 = vrot.slane %v2073, %v2383
        %v2386 = vunpack.c.l.s4 1983009808
        %v2387 = vunpack.c.0.s8 %v2386
        %v2388 = vlaneseq
        %v2389 = vshrl.u32 %v2388, 7
        %v2390 = vsub.s32 %v2387, %v2389
        %v2391 = vrot.slane %v2377, %v2390
        %v2392 = vcombine.high %v2384, %v2384
        %v2393 = vcombine.high %v2391, %v2391
        %v2394 = vcombine.high %v2074, %v2074
        %v2396 = vunpack.c.l.s4 1983009808
        %v2397 = vunpack.c.0.s8 %v2396
        %v2398 = vlaneseq
        %v2399 = vshrl.u32 %v2398, 7
        %v2400 = vsub.s32 %v2397, %v2399
        %v2401 = vrot.slane %v2074, %v2400
        %v2403 = vunpack.c.l.s4 1983009808
        %v2404 = vunpack.c.0.s8 %v2403
        %v2405 = vlaneseq
        %v2406 = vshrl.u32 %v2405, 7
        %v2407 = vsub.s32 %v2404, %v2406
        %v2408 = vrot.slane %v2394, %v2407
        %v2409 = vcombine.high %v2401, %v2401
        %v2410 = vcombine.high %v2408, %v2408
        %v2411 = vcombine.high %v2075, %v2075
        %v2413 = vunpack.c.l.s4 1983009808
        %v2414 = vunpack.c.0.s8 %v2413
        %v2415 = vlaneseq
        %v2416 = vshrl.u32 %v2415, 7
        %v2417 = vsub.s32 %v2414, %v2416
        %v2418 = vrot.slane %v2075, %v2417
        %v2420 = vunpack.c.l.s4 1983009808
        %v2421 = vunpack.c.0.s8 %v2420
        %v2422 = vlaneseq
        %v2423 = vshrl.u32 %v2422, 7
        %v2424 = vsub.s32 %v2421, %v2423
        %v2425 = vrot.slane %v2411, %v2424
        %v2426 = vcombine.high %v2418, %v2418
        %v2427 = vcombine.high %v2425, %v2425
        %v2428 = vcombine.high %v2076, %v2076
        %v2430 = vunpack.c.l.s4 1983009808
        %v2431 = vunpack.c.0.s8 %v2430
        %v2432 = vlaneseq
        %v2433 = vshrl.u32 %v2432, 7
        %v2434 = vsub.s32 %v2431, %v2433
        %v2435 = vrot.slane %v2076, %v2434
        %v2437 = vunpack.c.l.s4 1983009808
        %v2438 = vunpack.c.0.s8 %v2437
        %v2439 = vlaneseq
        %v2440 = vshrl.u32 %v2439, 7
        %v2441 = vsub.s32 %v2438, %v2440
        %v2442 = vrot.slane %v2428, %v2441
        %v2443 = vcombine.high %v2435, %v2435
        %v2444 = vcombine.high %v2442, %v2442
        %v2445 = vcombine.high %v2077, %v2077
        %v2447 = vunpack.c.l.s4 1983009808
        %v2448 = vunpack.c.0.s8 %v2447
        %v2449 = vlaneseq
        %v2450 = vshrl.u32 %v2449, 7
        %v2451 = vsub.s32 %v2448, %v2450
        %v2452 = vrot.slane %v2077, %v2451
        %v2454 = vunpack.c.l.s4 1983009808
        %v2455 = vunpack.c.0.s8 %v2454
        %v2456 = vlaneseq
        %v2457 = vshrl.u32 %v2456, 7
        %v2458 = vsub.s32 %v2455, %v2457
        %v2459 = vrot.slane %v2445, %v2458
        %v2460 = vcombine.high %v2452, %v2452
        %v2461 = vcombine.high %v2459, %v2459
        %v2462 = vcombine.high %v2078, %v2078
        %v2464 = vunpack.c.l.s4 1983009808
        %v2465 = vunpack.c.0.s8 %v2464
        %v2466 = vlaneseq
        %v2467 = vshrl.u32 %v2466, 7
        %v2468 = vsub.s32 %v2465, %v2467
        %v2469 = vrot.slane %v2078, %v2468
        %v2471 = vunpack.c.l.s4 1983009808
        %v2472 = vunpack.c.0.s8 %v2471
        %v2473 = vlaneseq
        %v2474 = vshrl.u32 %v2473, 7
        %v2475 = vsub.s32 %v2472, %v2474
        %v2476 = vrot.slane %v2462, %v2475
        %v2477 = vcombine.high %v2469, %v2469
        %v2478 = vcombine.high %v2476, %v2476
        %v2479 = vcombine.high %v2079, %v2079
        %v2481 = vunpack.c.l.s4 1983009808
        %v2482 = vunpack.c.0.s8 %v2481
        %v2483 = vlaneseq
        %v2484 = vshrl.u32 %v2483, 7
        %v2485 = vsub.s32 %v2482, %v2484
        %v2486 = vrot.slane %v2079, %v2485
        %v2488 = vunpack.c.l.s4 1983009808
        %v2489 = vunpack.c.0.s8 %v2488
        %v2490 = vlaneseq
        %v2491 = vshrl.u32 %v2490, 7
        %v2492 = vsub.s32 %v2489, %v2491
        %v2493 = vrot.slane %v2479, %v2492
        %v2494 = vcombine.high %v2486, %v2486
        %v2495 = vcombine.high %v2493, %v2493
        %v2496 = vcombine.high %v2080, %v2080
        %v2498 = vunpack.c.l.s4 1983009808
        %v2499 = vunpack.c.0.s8 %v2498
        %v2500 = vlaneseq
        %v2501 = vshrl.u32 %v2500, 7
        %v2502 = vsub.s32 %v2499, %v2501
        %v2503 = vrot.slane %v2080, %v2502
        %v2505 = vunpack.c.l.s4 1983009808
        %v2506 = vunpack.c.0.s8 %v2505
        %v2507 = vlaneseq
        %v2508 = vshrl.u32 %v2507, 7
        %v2509 = vsub.s32 %v2506, %v2508
        %v2510 = vrot.slane %v2496, %v2509
        %v2511 = vcombine.high %v2503, %v2503
        %v2512 = vcombine.high %v2510, %v2510
        %v2513 = vcombine.high %v2081, %v2081
        %v2515 = vunpack.c.l.s4 1983009808
        %v2516 = vunpack.c.0.s8 %v2515
        %v2517 = vlaneseq
        %v2518 = vshrl.u32 %v2517, 7
        %v2519 = vsub.s32 %v2516, %v2518
        %v2520 = vrot.slane %v2081, %v2519
        %v2522 = vunpack.c.l.s4 1983009808
        %v2523 = vunpack.c.0.s8 %v2522
        %v2524 = vlaneseq
        %v2525 = vshrl.u32 %v2524, 7
        %v2526 = vsub.s32 %v2523, %v2525
        %v2527 = vrot.slane %v2513, %v2526
        %v2528 = vcombine.high %v2520, %v2520
        %v2529 = vcombine.high %v2527, %v2527
        %v2530 = vcombine.high %v2082, %v2082
        %v2532 = vunpack.c.l.s4 1983009808
        %v2533 = vunpack.c.0.s8 %v2532
        %v2534 = vlaneseq
        %v2535 = vshrl.u32 %v2534, 7
        %v2536 = vsub.s32 %v2533, %v2535
        %v2537 = vrot.slane %v2082, %v2536
        %v2539 = vunpack.c.l.s4 1983009808
        %v2540 = vunpack.c.0.s8 %v2539
        %v2541 = vlaneseq
        %v2542 = vshrl.u32 %v2541, 7
        %v2543 = vsub.s32 %v2540, %v2542
        %v2544 = vrot.slane %v2530, %v2543
        %v2545 = vcombine.high %v2537, %v2537
        %v2546 = vcombine.high %v2544, %v2544
        %v2547 = vcombine.high %v2083, %v2083
        %v2549 = vunpack.c.l.s4 1983009808
        %v2550 = vunpack.c.0.s8 %v2549
        %v2551 = vlaneseq
        %v2552 = vshrl.u32 %v2551, 7
        %v2553 = vsub.s32 %v2550, %v2552
        %v2554 = vrot.slane %v2083, %v2553
        %v2556 = vunpack.c.l.s4 1983009808
        %v2557 = vunpack.c.0.s8 %v2556
        %v2558 = vlaneseq
        %v2559 = vshrl.u32 %v2558, 7
        %v2560 = vsub.s32 %v2557, %v2559
        %v2561 = vrot.slane %v2547, %v2560
        %v2562 = vcombine.high %v2554, %v2554
        %v2563 = vcombine.high %v2561, %v2561
        %v2564 = vcombine.high %v2084, %v2084
        %v2566 = vunpack.c.l.s4 1983009808
        %v2567 = vunpack.c.0.s8 %v2566
        %v2568 = vlaneseq
        %v2569 = vshrl.u32 %v2568, 7
        %v2570 = vsub.s32 %v2567, %v2569
        %v2571 = vrot.slane %v2084, %v2570
        %v2573 = vunpack.c.l.s4 1983009808
        %v2574 = vunpack.c.0.s8 %v2573
        %v2575 = vlaneseq
        %v2576 = vshrl.u32 %v2575, 7
        %v2577 = vsub.s32 %v2574, %v2576
        %v2578 = vrot.slane %v2564, %v2577
        %v2579 = vcombine.high %v2571, %v2571
        %v2580 = vcombine.high %v2578, %v2578
        %v2581 = vcombine.high %v2085, %v2085
        %v2583 = vunpack.c.l.s4 1983009808
        %v2584 = vunpack.c.0.s8 %v2583
        %v2585 = vlaneseq
        %v2586 = vshrl.u32 %v2585, 7
        %v2587 = vsub.s32 %v2584, %v2586
        %v2588 = vrot.slane %v2085, %v2587
        %v2590 = vunpack.c.l.s4 1983009808
        %v2591 = vunpack.c.0.s8 %v2590
        %v2592 = vlaneseq
        %v2593 = vshrl.u32 %v2592, 7
        %v2594 = vsub.s32 %v2591, %v2593
        %v2595 = vrot.slane %v2581, %v2594
        %v2596 = vcombine.high %v2588, %v2588
        %v2597 = vcombine.high %v2595, %v2595
        %v2598 = vcombine.high %v2086, %v2086
        %v2600 = vunpack.c.l.s4 1983009808
        %v2601 = vunpack.c.0.s8 %v2600
        %v2602 = vlaneseq
        %v2603 = vshrl.u32 %v2602, 7
        %v2604 = vsub.s32 %v2601, %v2603
        %v2605 = vrot.slane %v2086, %v2604
        %v2607 = vunpack.c.l.s4 1983009808
        %v2608 = vunpack.c.0.s8 %v2607
        %v2609 = vlaneseq
        %v2610 = vshrl.u32 %v2609, 7
        %v2611 = vsub.s32 %v2608, %v2610
        %v2612 = vrot.slane %v2598, %v2611
        %v2613 = vcombine.high %v2605, %v2605
        %v2614 = vcombine.high %v2612, %v2612
        %v2615 = vcombine.high %v2087, %v2087
        %v2617 = vunpack.c.l.s4 1983009808
        %v2618 = vunpack.c.0.s8 %v2617
        %v2619 = vlaneseq
        %v2620 = vshrl.u32 %v2619, 7
        %v2621 = vsub.s32 %v2618, %v2620
        %v2622 = vrot.slane %v2087, %v2621
        %v2624 = vunpack.c.l.s4 1983009808
        %v2625 = vunpack.c.0.s8 %v2624
        %v2626 = vlaneseq
        %v2627 = vshrl.u32 %v2626, 7
        %v2628 = vsub.s32 %v2625, %v2627
        %v2629 = vrot.slane %v2615, %v2628
        %v2630 = vcombine.high %v2622, %v2622
        %v2631 = vcombine.high %v2629, %v2629
        %v2632 = vcombine.high %v2088, %v2088
        %v2634 = vunpack.c.l.s4 1983009808
        %v2635 = vunpack.c.0.s8 %v2634
        %v2636 = vlaneseq
        %v2637 = vshrl.u32 %v2636, 7
        %v2638 = vsub.s32 %v2635, %v2637
        %v2639 = vrot.slane %v2088, %v2638
        %v2641 = vunpack.c.l.s4 1983009808
        %v2642 = vunpack.c.0.s8 %v2641
        %v2643 = vlaneseq
        %v2644 = vshrl.u32 %v2643, 7
        %v2645 = vsub.s32 %v2642, %v2644
        %v2646 = vrot.slane %v2632, %v2645
        %v2647 = vcombine.high %v2639, %v2639
        %v2648 = vcombine.high %v2646, %v2646
        %v2649 = vcombine.high %v2089, %v2089
        %v2651 = vunpack.c.l.s4 1983009808
        %v2652 = vunpack.c.0.s8 %v2651
        %v2653 = vlaneseq
        %v2654 = vshrl.u32 %v2653, 7
        %v2655 = vsub.s32 %v2652, %v2654
        %v2656 = vrot.slane %v2089, %v2655
        %v2658 = vunpack.c.l.s4 1983009808
        %v2659 = vunpack.c.0.s8 %v2658
        %v2660 = vlaneseq
        %v2661 = vshrl.u32 %v2660, 7
        %v2662 = vsub.s32 %v2659, %v2661
        %v2663 = vrot.slane %v2649, %v2662
        %v2664 = vcombine.high %v2656, %v2656
        %v2665 = vcombine.high %v2663, %v2663
        %v2794 = vrot.slane %v2129, 7
        %v2795 = vrot.slane %v2794, 2
        %v2796 = vrot.slane %v2137, 7
        %v2797 = vrot.slane %v2796, 2
        %v2798 = vrot.slane %v2136, 7
        %v2799 = vrot.slane %v2798, 2
        %v2800 = vrot.slane %v2138, 7
        %v2801 = vrot.slane %v2800, 2
        %v2802 = vrot.slane %v2146, 7
        %v2803 = vrot.slane %v2802, 2
        %v2804 = vrot.slane %v2154, 7
        %v2805 = vrot.slane %v2804, 2
        %v2806 = vrot.slane %v2153, 7
        %v2807 = vrot.slane %v2806, 2
        %v2808 = vrot.slane %v2155, 7
        %v2809 = vrot.slane %v2808, 2
        %v2810 = vrot.slane %v2197, 7
        %v2811 = vrot.slane %v2810, 2
        %v2812 = vrot.slane %v2205, 7
        %v2813 = vrot.slane %v2812, 2
        %v2814 = vrot.slane %v2204, 7
        %v2815 = vrot.slane %v2814, 2
        %v2816 = vrot.slane %v2206, 7
        %v2817 = vrot.slane %v2816, 2
        %v2818 = vrot.slane %v2214, 7
        %v2819 = vrot.slane %v2818, 2
        %v2820 = vrot.slane %v2222, 7
        %v2821 = vrot.slane %v2820, 2
        %v2822 = vrot.slane %v2221, 7
        %v2823 = vrot.slane %v2822, 2
        %v2824 = vrot.slane %v2223, 7
        %v2825 = vrot.slane %v2824, 2
        %v2826 = vrot.slane %v2265, 7
        %v2827 = vrot.slane %v2826, 2
        %v2828 = vrot.slane %v2273, 7
        %v2829 = vrot.slane %v2828, 2
        %v2830 = vrot.slane %v2272, 7
        %v2831 = vrot.slane %v2830, 2
        %v2832 = vrot.slane %v2274, 7
        %v2833 = vrot.slane %v2832, 2
        %v2834 = vrot.slane %v2282, 7
        %v2835 = vrot.slane %v2834, 2
        %v2836 = vrot.slane %v2290, 7
        %v2837 = vrot.slane %v2836, 2
        %v2838 = vrot.slane %v2289, 7
        %v2839 = vrot.slane %v2838, 2
        %v2840 = vrot.slane %v2291, 7
        %v2841 = vrot.slane %v2840, 2
        %v2842 = vrot.slane %v2333, 7
        %v2843 = vrot.slane %v2842, 2
        %v2844 = vrot.slane %v2341, 7
        %v2845 = vrot.slane %v2844, 2
        %v2846 = vrot.slane %v2340, 7
        %v2847 = vrot.slane %v2846, 2
        %v2848 = vrot.slane %v2342, 7
        %v2849 = vrot.slane %v2848, 2
        %v2850 = vrot.slane %v2350, 7
        %v2851 = vrot.slane %v2850, 2
        %v2852 = vrot.slane %v2358, 7
        %v2853 = vrot.slane %v2852, 2
        %v2854 = vrot.slane %v2357, 7
        %v2855 = vrot.slane %v2854, 2
        %v2856 = vrot.slane %v2359, 7
        %v2857 = vrot.slane %v2856, 2
        %v2858 = vrot.slane %v2401, 7
        %v2859 = vrot.slane %v2858, 2
        %v2860 = vrot.slane %v2409, 7
        %v2861 = vrot.slane %v2860, 2
        %v2862 = vrot.slane %v2408, 7
        %v2863 = vrot.slane %v2862, 2
        %v2864 = vrot.slane %v2410, 7
        %v2865 = vrot.slane %v2864, 2
        %v2866 = vrot.slane %v2418, 7
        %v2867 = vrot.slane %v2866, 2
        %v2868 = vrot.slane %v2426, 7
        %v2869 = vrot.slane %v2868, 2
        %v2870 = vrot.slane %v2425, 7
        %v2871 = vrot.slane %v2870, 2
        %v2872 = vrot.slane %v2427, 7
        %v2873 = vrot.slane %v2872, 2
        %v2874 = vrot.slane %v2469, 7
        %v2875 = vrot.slane %v2874, 2
        %v2876 = vrot.slane %v2477, 7
        %v2877 = vrot.slane %v2876, 2
        %v2878 = vrot.slane %v2476, 7
        %v2879 = vrot.slane %v2878, 2
        %v2880 = vrot.slane %v2478, 7
        %v2881 = vrot.slane %v2880, 2
        %v2882 = vrot.slane %v2486, 7
        %v2883 = vrot.slane %v2882, 2
        %v2884 = vrot.slane %v2494, 7
        %v2885 = vrot.slane %v2884, 2
        %v2886 = vrot.slane %v2493, 7
        %v2887 = vrot.slane %v2886, 2
        %v2888 = vrot.slane %v2495, 7
        %v2889 = vrot.slane %v2888, 2
        %v2890 = vrot.slane %v2537, 7
        %v2891 = vrot.slane %v2890, 2
        %v2892 = vrot.slane %v2545, 7
        %v2893 = vrot.slane %v2892, 2
        %v2894 = vrot.slane %v2544, 7
        %v2895 = vrot.slane %v2894, 2
        %v2896 = vrot.slane %v2546, 7
        %v2897 = vrot.slane %v2896, 2
        %v2898 = vrot.slane %v2554, 7
        %v2899 = vrot.slane %v2898, 2
        %v2900 = vrot.slane %v2562, 7
        %v2901 = vrot.slane %v2900, 2
        %v2902 = vrot.slane %v2561, 7
        %v2903 = vrot.slane %v2902, 2
        %v2904 = vrot.slane %v2563, 7
        %v2905 = vrot.slane %v2904, 2
        %v2906 = vrot.slane %v2605, 7
        %v2907 = vrot.slane %v2906, 2
        %v2908 = vrot.slane %v2613, 7
        %v2909 = vrot.slane %v2908, 2
        %v2910 = vrot.slane %v2612, 7
        %v2911 = vrot.slane %v2910, 2
        %v2912 = vrot.slane %v2614, 7
        %v2913 = vrot.slane %v2912, 2
        %v2914 = vrot.slane %v2622, 7
        %v2915 = vrot.slane %v2914, 2
        %v2916 = vrot.slane %v2630, 7
        %v2917 = vrot.slane %v2916, 2
        %v2918 = vrot.slane %v2629, 7
        %v2919 = vrot.slane %v2918, 2
        %v2920 = vrot.slane %v2631, 7
        %v2921 = vrot.slane %v2920, 2
        %v2986 = vmax.f32 %v2129, %v2795
        %v2987 = vmax.f32 %v2137, %v2797
        %v2988 = vmax.f32 %v2136, %v2799
        %v2989 = vmax.f32 %v2138, %v2801
        %v2990 = vmax.f32 %v2146, %v2803
        %v2991 = vmax.f32 %v2154, %v2805
        %v2992 = vmax.f32 %v2153, %v2807
        %v2993 = vmax.f32 %v2155, %v2809
        %v2994 = vmax.f32 %v2197, %v2811
        %v2995 = vmax.f32 %v2205, %v2813
        %v2996 = vmax.f32 %v2204, %v2815
        %v2997 = vmax.f32 %v2206, %v2817
        %v2998 = vmax.f32 %v2214, %v2819
        %v2999 = vmax.f32 %v2222, %v2821
        %v3000 = vmax.f32 %v2221, %v2823
        %v3001 = vmax.f32 %v2223, %v2825
        %v3002 = vmax.f32 %v2265, %v2827
        %v3003 = vmax.f32 %v2273, %v2829
        %v3004 = vmax.f32 %v2272, %v2831
        %v3005 = vmax.f32 %v2274, %v2833
        %v3006 = vmax.f32 %v2282, %v2835
        %v3007 = vmax.f32 %v2290, %v2837
        %v3008 = vmax.f32 %v2289, %v2839
        %v3009 = vmax.f32 %v2291, %v2841
        %v3010 = vmax.f32 %v2333, %v2843
        %v3011 = vmax.f32 %v2341, %v2845
        %v3012 = vmax.f32 %v2340, %v2847
        %v3013 = vmax.f32 %v2342, %v2849
        %v3014 = vmax.f32 %v2350, %v2851
        %v3015 = vmax.f32 %v2358, %v2853
        %v3016 = vmax.f32 %v2357, %v2855
        %v3017 = vmax.f32 %v2359, %v2857
        %v3018 = vmax.f32 %v2401, %v2859
        %v3019 = vmax.f32 %v2409, %v2861
        %v3020 = vmax.f32 %v2408, %v2863
        %v3021 = vmax.f32 %v2410, %v2865
        %v3022 = vmax.f32 %v2418, %v2867
        %v3023 = vmax.f32 %v2426, %v2869
        %v3024 = vmax.f32 %v2425, %v2871
        %v3025 = vmax.f32 %v2427, %v2873
        %v3026 = vmax.f32 %v2469, %v2875
        %v3027 = vmax.f32 %v2477, %v2877
        %v3028 = vmax.f32 %v2476, %v2879
        %v3029 = vmax.f32 %v2478, %v2881
        %v3030 = vmax.f32 %v2486, %v2883
        %v3031 = vmax.f32 %v2494, %v2885
        %v3032 = vmax.f32 %v2493, %v2887
        %v3033 = vmax.f32 %v2495, %v2889
        %v3034 = vmax.f32 %v2537, %v2891
        %v3035 = vmax.f32 %v2545, %v2893
        %v3036 = vmax.f32 %v2544, %v2895
        %v3037 = vmax.f32 %v2546, %v2897
        %v3038 = vmax.f32 %v2554, %v2899
        %v3039 = vmax.f32 %v2562, %v2901
        %v3040 = vmax.f32 %v2561, %v2903
        %v3041 = vmax.f32 %v2563, %v2905
        %v3042 = vmax.f32 %v2605, %v2907
        %v3043 = vmax.f32 %v2613, %v2909
        %v3044 = vmax.f32 %v2612, %v2911
        %v3045 = vmax.f32 %v2614, %v2913
        %v3046 = vmax.f32 %v2622, %v2915
        %v3047 = vmax.f32 %v2630, %v2917
        %v3048 = vmax.f32 %v2629, %v2919
        %v3049 = vmax.f32 %v2631, %v2921
        %v3050 = vrot.slane %v2163, 7
        %v3051 = vrot.slane %v3050, 2
        %v3052 = vrot.slane %v2171, 7
        %v3053 = vrot.slane %v3052, 2
        %v3054 = vrot.slane %v2170, 7
        %v3055 = vrot.slane %v3054, 2
        %v3056 = vrot.slane %v2172, 7
        %v3057 = vrot.slane %v3056, 2
        %v3058 = vrot.slane %v2180, 7
        %v3059 = vrot.slane %v3058, 2
        %v3060 = vrot.slane %v2188, 7
        %v3061 = vrot.slane %v3060, 2
        %v3062 = vrot.slane %v2187, 7
        %v3063 = vrot.slane %v3062, 2
        %v3064 = vrot.slane %v2189, 7
        %v3065 = vrot.slane %v3064, 2
        %v3066 = vrot.slane %v2231, 7
        %v3067 = vrot.slane %v3066, 2
        %v3068 = vrot.slane %v2239, 7
        %v3069 = vrot.slane %v3068, 2
        %v3070 = vrot.slane %v2238, 7
        %v3071 = vrot.slane %v3070, 2
        %v3072 = vrot.slane %v2240, 7
        %v3073 = vrot.slane %v3072, 2
        %v3074 = vrot.slane %v2248, 7
        %v3075 = vrot.slane %v3074, 2
        %v3076 = vrot.slane %v2256, 7
        %v3077 = vrot.slane %v3076, 2
        %v3078 = vrot.slane %v2255, 7
        %v3079 = vrot.slane %v3078, 2
        %v3080 = vrot.slane %v2257, 7
        %v3081 = vrot.slane %v3080, 2
        %v3082 = vrot.slane %v2299, 7
        %v3083 = vrot.slane %v3082, 2
        %v3084 = vrot.slane %v2307, 7
        %v3085 = vrot.slane %v3084, 2
        %v3086 = vrot.slane %v2306, 7
        %v3087 = vrot.slane %v3086, 2
        %v3088 = vrot.slane %v2308, 7
        %v3089 = vrot.slane %v3088, 2
        %v3090 = vrot.slane %v2316, 7
        %v3091 = vrot.slane %v3090, 2
        %v3092 = vrot.slane %v2324, 7
        %v3093 = vrot.slane %v3092, 2
        %v3094 = vrot.slane %v2323, 7
        %v3095 = vrot.slane %v3094, 2
        %v3096 = vrot.slane %v2325, 7
        %v3097 = vrot.slane %v3096, 2
        %v3098 = vrot.slane %v2367, 7
        %v3099 = vrot.slane %v3098, 2
        %v3100 = vrot.slane %v2375, 7
        %v3101 = vrot.slane %v3100, 2
        %v3102 = vrot.slane %v2374, 7
        %v3103 = vrot.slane %v3102, 2
        %v3104 = vrot.slane %v2376, 7
        %v3105 = vrot.slane %v3104, 2
        %v3106 = vrot.slane %v2384, 7
        %v3107 = vrot.slane %v3106, 2
        %v3108 = vrot.slane %v2392, 7
        %v3109 = vrot.slane %v3108, 2
        %v3110 = vrot.slane %v2391, 7
        %v3111 = vrot.slane %v3110, 2
        %v3112 = vrot.slane %v2393, 7
        %v3113 = vrot.slane %v3112, 2
        %v3114 = vrot.slane %v2435, 7
        %v3115 = vrot.slane %v3114, 2
        %v3116 = vrot.slane %v2443, 7
        %v3117 = vrot.slane %v3116, 2
        %v3118 = vrot.slane %v2442, 7
        %v3119 = vrot.slane %v3118, 2
        %v3120 = vrot.slane %v2444, 7
        %v3121 = vrot.slane %v3120, 2
        %v3122 = vrot.slane %v2452, 7
        %v3123 = vrot.slane %v3122, 2
        %v3124 = vrot.slane %v2460, 7
        %v3125 = vrot.slane %v3124, 2
        %v3126 = vrot.slane %v2459, 7
        %v3127 = vrot.slane %v3126, 2
        %v3128 = vrot.slane %v2461, 7
        %v3129 = vrot.slane %v3128, 2
        %v3130 = vrot.slane %v2503, 7
        %v3131 = vrot.slane %v3130, 2
        %v3132 = vrot.slane %v2511, 7
        %v3133 = vrot.slane %v3132, 2
        %v3134 = vrot.slane %v2510, 7
        %v3135 = vrot.slane %v3134, 2
        %v3136 = vrot.slane %v2512, 7
        %v3137 = vrot.slane %v3136, 2
        %v3138 = vrot.slane %v2520, 7
        %v3139 = vrot.slane %v3138, 2
        %v3140 = vrot.slane %v2528, 7
        %v3141 = vrot.slane %v3140, 2
        %v3142 = vrot.slane %v2527, 7
        %v3143 = vrot.slane %v3142, 2
        %v3144 = vrot.slane %v2529, 7
        %v3145 = vrot.slane %v3144, 2
        %v3146 = vrot.slane %v2571, 7
        %v3147 = vrot.slane %v3146, 2
        %v3148 = vrot.slane %v2579, 7
        %v3149 = vrot.slane %v3148, 2
        %v3150 = vrot.slane %v2578, 7
        %v3151 = vrot.slane %v3150, 2
        %v3152 = vrot.slane %v2580, 7
        %v3153 = vrot.slane %v3152, 2
        %v3154 = vrot.slane %v2588, 7
        %v3155 = vrot.slane %v3154, 2
        %v3156 = vrot.slane %v2596, 7
        %v3157 = vrot.slane %v3156, 2
        %v3158 = vrot.slane %v2595, 7
        %v3159 = vrot.slane %v3158, 2
        %v3160 = vrot.slane %v2597, 7
        %v3161 = vrot.slane %v3160, 2
        %v3162 = vrot.slane %v2639, 7
        %v3163 = vrot.slane %v3162, 2
        %v3164 = vrot.slane %v2647, 7
        %v3165 = vrot.slane %v3164, 2
        %v3166 = vrot.slane %v2646, 7
        %v3167 = vrot.slane %v3166, 2
        %v3168 = vrot.slane %v2648, 7
        %v3169 = vrot.slane %v3168, 2
        %v3170 = vrot.slane %v2656, 7
        %v3171 = vrot.slane %v3170, 2
        %v3172 = vrot.slane %v2664, 7
        %v3173 = vrot.slane %v3172, 2
        %v3174 = vrot.slane %v2663, 7
        %v3175 = vrot.slane %v3174, 2
        %v3176 = vrot.slane %v2665, 7
        %v3177 = vrot.slane %v3176, 2
        %v3242 = vmax.f32 %v2163, %v3051
        %v3243 = vmax.f32 %v2171, %v3053
        %v3244 = vmax.f32 %v2170, %v3055
        %v3245 = vmax.f32 %v2172, %v3057
        %v3246 = vmax.f32 %v2180, %v3059
        %v3247 = vmax.f32 %v2188, %v3061
        %v3248 = vmax.f32 %v2187, %v3063
        %v3249 = vmax.f32 %v2189, %v3065
        %v3250 = vmax.f32 %v2231, %v3067
        %v3251 = vmax.f32 %v2239, %v3069
        %v3252 = vmax.f32 %v2238, %v3071
        %v3253 = vmax.f32 %v2240, %v3073
        %v3254 = vmax.f32 %v2248, %v3075
        %v3255 = vmax.f32 %v2256, %v3077
        %v3256 = vmax.f32 %v2255, %v3079
        %v3257 = vmax.f32 %v2257, %v3081
        %v3258 = vmax.f32 %v2299, %v3083
        %v3259 = vmax.f32 %v2307, %v3085
        %v3260 = vmax.f32 %v2306, %v3087
        %v3261 = vmax.f32 %v2308, %v3089
        %v3262 = vmax.f32 %v2316, %v3091
        %v3263 = vmax.f32 %v2324, %v3093
        %v3264 = vmax.f32 %v2323, %v3095
        %v3265 = vmax.f32 %v2325, %v3097
        %v3266 = vmax.f32 %v2367, %v3099
        %v3267 = vmax.f32 %v2375, %v3101
        %v3268 = vmax.f32 %v2374, %v3103
        %v3269 = vmax.f32 %v2376, %v3105
        %v3270 = vmax.f32 %v2384, %v3107
        %v3271 = vmax.f32 %v2392, %v3109
        %v3272 = vmax.f32 %v2391, %v3111
        %v3273 = vmax.f32 %v2393, %v3113
        %v3274 = vmax.f32 %v2435, %v3115
        %v3275 = vmax.f32 %v2443, %v3117
        %v3276 = vmax.f32 %v2442, %v3119
        %v3277 = vmax.f32 %v2444, %v3121
        %v3278 = vmax.f32 %v2452, %v3123
        %v3279 = vmax.f32 %v2460, %v3125
        %v3280 = vmax.f32 %v2459, %v3127
        %v3281 = vmax.f32 %v2461, %v3129
        %v3282 = vmax.f32 %v2503, %v3131
        %v3283 = vmax.f32 %v2511, %v3133
        %v3284 = vmax.f32 %v2510, %v3135
        %v3285 = vmax.f32 %v2512, %v3137
        %v3286 = vmax.f32 %v2520, %v3139
        %v3287 = vmax.f32 %v2528, %v3141
        %v3288 = vmax.f32 %v2527, %v3143
        %v3289 = vmax.f32 %v2529, %v3145
        %v3290 = vmax.f32 %v2571, %v3147
        %v3291 = vmax.f32 %v2579, %v3149
        %v3292 = vmax.f32 %v2578, %v3151
        %v3293 = vmax.f32 %v2580, %v3153
        %v3294 = vmax.f32 %v2588, %v3155
        %v3295 = vmax.f32 %v2596, %v3157
        %v3296 = vmax.f32 %v2595, %v3159
        %v3297 = vmax.f32 %v2597, %v3161
        %v3298 = vmax.f32 %v2639, %v3163
        %v3299 = vmax.f32 %v2647, %v3165
        %v3300 = vmax.f32 %v2646, %v3167
        %v3301 = vmax.f32 %v2648, %v3169
        %v3302 = vmax.f32 %v2656, %v3171
        %v3303 = vmax.f32 %v2664, %v3173
        %v3304 = vmax.f32 %v2663, %v3175
        %v3305 = vmax.f32 %v2665, %v3177
        %v3306 = vmax.f32 %v2986, %v3242
        %v3307 = vmax.f32 %v2987, %v3243
        %v3308 = vmax.f32 %v2988, %v3244
        %v3309 = vmax.f32 %v2989, %v3245
        %v3310 = vmax.f32 %v2990, %v3246
        %v3311 = vmax.f32 %v2991, %v3247
        %v3312 = vmax.f32 %v2992, %v3248
        %v3313 = vmax.f32 %v2993, %v3249
        %v3314 = vmax.f32 %v2994, %v3250
        %v3315 = vmax.f32 %v2995, %v3251
        %v3316 = vmax.f32 %v2996, %v3252
        %v3317 = vmax.f32 %v2997, %v3253
        %v3318 = vmax.f32 %v2998, %v3254
        %v3319 = vmax.f32 %v2999, %v3255
        %v3320 = vmax.f32 %v3000, %v3256
        %v3321 = vmax.f32 %v3001, %v3257
        %v3322 = vmax.f32 %v3002, %v3258
        %v3323 = vmax.f32 %v3003, %v3259
        %v3324 = vmax.f32 %v3004, %v3260
        %v3325 = vmax.f32 %v3005, %v3261
        %v3326 = vmax.f32 %v3006, %v3262
        %v3327 = vmax.f32 %v3007, %v3263
        %v3328 = vmax.f32 %v3008, %v3264
        %v3329 = vmax.f32 %v3009, %v3265
        %v3330 = vmax.f32 %v3010, %v3266
        %v3331 = vmax.f32 %v3011, %v3267
        %v3332 = vmax.f32 %v3012, %v3268
        %v3333 = vmax.f32 %v3013, %v3269
        %v3334 = vmax.f32 %v3014, %v3270
        %v3335 = vmax.f32 %v3015, %v3271
        %v3336 = vmax.f32 %v3016, %v3272
        %v3337 = vmax.f32 %v3017, %v3273
        %v3338 = vmax.f32 %v3018, %v3274
        %v3339 = vmax.f32 %v3019, %v3275
        %v3340 = vmax.f32 %v3020, %v3276
        %v3341 = vmax.f32 %v3021, %v3277
        %v3342 = vmax.f32 %v3022, %v3278
        %v3343 = vmax.f32 %v3023, %v3279
        %v3344 = vmax.f32 %v3024, %v3280
        %v3345 = vmax.f32 %v3025, %v3281
        %v3346 = vmax.f32 %v3026, %v3282
        %v3347 = vmax.f32 %v3027, %v3283
        %v3348 = vmax.f32 %v3028, %v3284
        %v3349 = vmax.f32 %v3029, %v3285
        %v3350 = vmax.f32 %v3030, %v3286
        %v3351 = vmax.f32 %v3031, %v3287
        %v3352 = vmax.f32 %v3032, %v3288
        %v3353 = vmax.f32 %v3033, %v3289
        %v3354 = vmax.f32 %v3034, %v3290
        %v3355 = vmax.f32 %v3035, %v3291
        %v3356 = vmax.f32 %v3036, %v3292
        %v3357 = vmax.f32 %v3037, %v3293
        %v3358 = vmax.f32 %v3038, %v3294
        %v3359 = vmax.f32 %v3039, %v3295
        %v3360 = vmax.f32 %v3040, %v3296
        %v3361 = vmax.f32 %v3041, %v3297
        %v3362 = vmax.f32 %v3042, %v3298
        %v3363 = vmax.f32 %v3043, %v3299
        %v3364 = vmax.f32 %v3044, %v3300
        %v3365 = vmax.f32 %v3045, %v3301
        %v3366 = vmax.f32 %v3046, %v3302
        %v3367 = vmax.f32 %v3047, %v3303
        %v3368 = vmax.f32 %v3048, %v3304
        %v3369 = vmax.f32 %v3049, %v3305
        %3370 = vst.msk [vmem:[#allocation3] sm:$0xff] %vm1489, 0.0
        %vm3371 = vcmask 123904
        %3372 = vst.msk [vmem:[#allocation3 + $0x8] sm:$0x3] %vm3371, 0.0
        %3373 = vst.msk [vmem:[#allocation3 + $0x10] sm:$0xff] %vm1489, 0.0
        %3374 = vst.msk [vmem:[#allocation3 + $0x18] sm:$0x3] %vm3371, 0.0
        %3375 = vst.msk [vmem:[#allocation3 + $0x20] sm:$0xff] %vm1489, 0.0
        %3376 = vst.msk [vmem:[#allocation3 + $0x28] sm:$0x3] %vm3371, 0.0
        %3377 = vst.msk [vmem:[#allocation3 + $0x30] sm:$0xff] %vm1489, 0.0
        %3378 = vst.msk [vmem:[#allocation3 + $0x38] sm:$0x3] %vm3371, 0.0
        %3379 = vst.msk [vmem:[#allocation3 + $0x40] sm:$0xff] %vm1489, 0.0
        %3380 = vst.msk [vmem:[#allocation3 + $0x48] sm:$0x3] %vm3371, 0.0
        %3381 = vst.msk [vmem:[#allocation3 + $0x50] sm:$0xff] %vm1489, 0.0
        %3382 = vst.msk [vmem:[#allocation3 + $0x58] sm:$0x3] %vm3371, 0.0
        %3383 = vst.msk [vmem:[#allocation3 + $0x60] sm:$0xff] %vm1489, 0.0
        %3384 = vst.msk [vmem:[#allocation3 + $0x68] sm:$0x3] %vm3371, 0.0
        %3385 = vst.msk [vmem:[#allocation3 + $0x70] sm:$0xff] %vm1489, 0.0
        %3386 = vst.msk [vmem:[#allocation3 + $0x78] sm:$0x3] %vm3371, 0.0
        %3387 = vst.msk [vmem:[#allocation3 + $0x80] sm:$0xff] %vm1489, 0.0
        %3388 = vst.msk [vmem:[#allocation3 + $0x88] sm:$0x3] %vm3371, 0.0
        %3389 = vst.msk [vmem:[#allocation3 + $0x90] sm:$0xff] %vm1489, 0.0
        %3390 = vst.msk [vmem:[#allocation3 + $0x98] sm:$0x3] %vm3371, 0.0
        %v3455 = vlaneseq
        %v3456 = vshrl.u32 %v3455, 7
        %v3457 = vsub.s32 0, %v3456
        %v3458 = vrot.slane %v3306, %v3457
        %v3459 = vlaneseq
        %v3460 = vshrl.u32 %v3459, 7
        %v3461 = vsub.s32 0, %v3460
        %v3462 = vrot.slane %v3307, %v3461
        %v3463 = vlaneseq
        %v3464 = vshrl.u32 %v3463, 7
        %v3465 = vsub.s32 0, %v3464
        %v3466 = vrot.slane %v3308, %v3465
        %v3467 = vlaneseq
        %v3468 = vshrl.u32 %v3467, 7
        %v3469 = vsub.s32 0, %v3468
        %v3470 = vrot.slane %v3309, %v3469
        %v3471 = vlaneseq
        %v3472 = vshrl.u32 %v3471, 7
        %v3473 = vsub.s32 0, %v3472
        %v3474 = vrot.slane %v3310, %v3473
        %v3475 = vlaneseq
        %v3476 = vshrl.u32 %v3475, 7
        %v3477 = vsub.s32 0, %v3476
        %v3478 = vrot.slane %v3311, %v3477
        %v3479 = vlaneseq
        %v3480 = vshrl.u32 %v3479, 7
        %v3481 = vsub.s32 0, %v3480
        %v3482 = vrot.slane %v3312, %v3481
        %v3483 = vlaneseq
        %v3484 = vshrl.u32 %v3483, 7
        %v3485 = vsub.s32 0, %v3484
        %v3486 = vrot.slane %v3313, %v3485
        %v3487 = vlaneseq
        %v3488 = vshrl.u32 %v3487, 7
        %v3489 = vsub.s32 0, %v3488
        %v3490 = vrot.slane %v3314, %v3489
        %v3491 = vlaneseq
        %v3492 = vshrl.u32 %v3491, 7
        %v3493 = vsub.s32 0, %v3492
        %v3494 = vrot.slane %v3315, %v3493
        %v3495 = vlaneseq
        %v3496 = vshrl.u32 %v3495, 7
        %v3497 = vsub.s32 0, %v3496
        %v3498 = vrot.slane %v3316, %v3497
        %v3499 = vlaneseq
        %v3500 = vshrl.u32 %v3499, 7
        %v3501 = vsub.s32 0, %v3500
        %v3502 = vrot.slane %v3317, %v3501
        %v3503 = vlaneseq
        %v3504 = vshrl.u32 %v3503, 7
        %v3505 = vsub.s32 0, %v3504
        %v3506 = vrot.slane %v3318, %v3505
        %v3507 = vlaneseq
        %v3508 = vshrl.u32 %v3507, 7
        %v3509 = vsub.s32 0, %v3508
        %v3510 = vrot.slane %v3319, %v3509
        %v3511 = vlaneseq
        %v3512 = vshrl.u32 %v3511, 7
        %v3513 = vsub.s32 0, %v3512
        %v3514 = vrot.slane %v3320, %v3513
        %v3515 = vlaneseq
        %v3516 = vshrl.u32 %v3515, 7
        %v3517 = vsub.s32 0, %v3516
        %v3518 = vrot.slane %v3321, %v3517
        %v3519 = vlaneseq
        %v3520 = vshrl.u32 %v3519, 7
        %v3521 = vsub.s32 0, %v3520
        %v3522 = vrot.slane %v3322, %v3521
        %v3523 = vlaneseq
        %v3524 = vshrl.u32 %v3523, 7
        %v3525 = vsub.s32 0, %v3524
        %v3526 = vrot.slane %v3323, %v3525
        %v3527 = vlaneseq
        %v3528 = vshrl.u32 %v3527, 7
        %v3529 = vsub.s32 0, %v3528
        %v3530 = vrot.slane %v3324, %v3529
        %v3531 = vlaneseq
        %v3532 = vshrl.u32 %v3531, 7
        %v3533 = vsub.s32 0, %v3532
        %v3534 = vrot.slane %v3325, %v3533
        %v3535 = vlaneseq
        %v3536 = vshrl.u32 %v3535, 7
        %v3537 = vsub.s32 0, %v3536
        %v3538 = vrot.slane %v3326, %v3537
        %v3539 = vlaneseq
        %v3540 = vshrl.u32 %v3539, 7
        %v3541 = vsub.s32 0, %v3540
        %v3542 = vrot.slane %v3327, %v3541
        %v3543 = vlaneseq
        %v3544 = vshrl.u32 %v3543, 7
        %v3545 = vsub.s32 0, %v3544
        %v3546 = vrot.slane %v3328, %v3545
        %v3547 = vlaneseq
        %v3548 = vshrl.u32 %v3547, 7
        %v3549 = vsub.s32 0, %v3548
        %v3550 = vrot.slane %v3329, %v3549
        %v3551 = vlaneseq
        %v3552 = vshrl.u32 %v3551, 7
        %v3553 = vsub.s32 0, %v3552
        %v3554 = vrot.slane %v3330, %v3553
        %v3555 = vlaneseq
        %v3556 = vshrl.u32 %v3555, 7
        %v3557 = vsub.s32 0, %v3556
        %v3558 = vrot.slane %v3331, %v3557
        %v3559 = vlaneseq
        %v3560 = vshrl.u32 %v3559, 7
        %v3561 = vsub.s32 0, %v3560
        %v3562 = vrot.slane %v3332, %v3561
        %v3563 = vlaneseq
        %v3564 = vshrl.u32 %v3563, 7
        %v3565 = vsub.s32 0, %v3564
        %v3566 = vrot.slane %v3333, %v3565
        %v3567 = vlaneseq
        %v3568 = vshrl.u32 %v3567, 7
        %v3569 = vsub.s32 0, %v3568
        %v3570 = vrot.slane %v3334, %v3569
        %v3571 = vlaneseq
        %v3572 = vshrl.u32 %v3571, 7
        %v3573 = vsub.s32 0, %v3572
        %v3574 = vrot.slane %v3335, %v3573
        %v3575 = vlaneseq
        %v3576 = vshrl.u32 %v3575, 7
        %v3577 = vsub.s32 0, %v3576
        %v3578 = vrot.slane %v3336, %v3577
        %v3579 = vlaneseq
        %v3580 = vshrl.u32 %v3579, 7
        %v3581 = vsub.s32 0, %v3580
        %v3582 = vrot.slane %v3337, %v3581
        %v3583 = vlaneseq
        %v3584 = vshrl.u32 %v3583, 7
        %v3585 = vsub.s32 0, %v3584
        %v3586 = vrot.slane %v3338, %v3585
        %v3587 = vlaneseq
        %v3588 = vshrl.u32 %v3587, 7
        %v3589 = vsub.s32 0, %v3588
        %v3590 = vrot.slane %v3339, %v3589
        %v3591 = vlaneseq
        %v3592 = vshrl.u32 %v3591, 7
        %v3593 = vsub.s32 0, %v3592
        %v3594 = vrot.slane %v3340, %v3593
        %v3595 = vlaneseq
        %v3596 = vshrl.u32 %v3595, 7
        %v3597 = vsub.s32 0, %v3596
        %v3598 = vrot.slane %v3341, %v3597
        %v3599 = vlaneseq
        %v3600 = vshrl.u32 %v3599, 7
        %v3601 = vsub.s32 0, %v3600
        %v3602 = vrot.slane %v3342, %v3601
        %v3603 = vlaneseq
        %v3604 = vshrl.u32 %v3603, 7
        %v3605 = vsub.s32 0, %v3604
        %v3606 = vrot.slane %v3343, %v3605
        %v3607 = vlaneseq
        %v3608 = vshrl.u32 %v3607, 7
        %v3609 = vsub.s32 0, %v3608
        %v3610 = vrot.slane %v3344, %v3609
        %v3611 = vlaneseq
        %v3612 = vshrl.u32 %v3611, 7
        %v3613 = vsub.s32 0, %v3612
        %v3614 = vrot.slane %v3345, %v3613
        %v3615 = vlaneseq
        %v3616 = vshrl.u32 %v3615, 7
        %v3617 = vsub.s32 0, %v3616
        %v3618 = vrot.slane %v3346, %v3617
        %v3619 = vlaneseq
        %v3620 = vshrl.u32 %v3619, 7
        %v3621 = vsub.s32 0, %v3620
        %v3622 = vrot.slane %v3347, %v3621
        %v3623 = vlaneseq
        %v3624 = vshrl.u32 %v3623, 7
        %v3625 = vsub.s32 0, %v3624
        %v3626 = vrot.slane %v3348, %v3625
        %v3627 = vlaneseq
        %v3628 = vshrl.u32 %v3627, 7
        %v3629 = vsub.s32 0, %v3628
        %v3630 = vrot.slane %v3349, %v3629
        %v3631 = vlaneseq
        %v3632 = vshrl.u32 %v3631, 7
        %v3633 = vsub.s32 0, %v3632
        %v3634 = vrot.slane %v3350, %v3633
        %v3635 = vlaneseq
        %v3636 = vshrl.u32 %v3635, 7
        %v3637 = vsub.s32 0, %v3636
        %v3638 = vrot.slane %v3351, %v3637
        %v3639 = vlaneseq
        %v3640 = vshrl.u32 %v3639, 7
        %v3641 = vsub.s32 0, %v3640
        %v3642 = vrot.slane %v3352, %v3641
        %v3643 = vlaneseq
        %v3644 = vshrl.u32 %v3643, 7
        %v3645 = vsub.s32 0, %v3644
        %v3646 = vrot.slane %v3353, %v3645
        %v3647 = vlaneseq
        %v3648 = vshrl.u32 %v3647, 7
        %v3649 = vsub.s32 0, %v3648
        %v3650 = vrot.slane %v3354, %v3649
        %v3651 = vlaneseq
        %v3652 = vshrl.u32 %v3651, 7
        %v3653 = vsub.s32 0, %v3652
        %v3654 = vrot.slane %v3355, %v3653
        %v3655 = vlaneseq
        %v3656 = vshrl.u32 %v3655, 7
        %v3657 = vsub.s32 0, %v3656
        %v3658 = vrot.slane %v3356, %v3657
        %v3659 = vlaneseq
        %v3660 = vshrl.u32 %v3659, 7
        %v3661 = vsub.s32 0, %v3660
        %v3662 = vrot.slane %v3357, %v3661
        %v3663 = vlaneseq
        %v3664 = vshrl.u32 %v3663, 7
        %v3665 = vsub.s32 0, %v3664
        %v3666 = vrot.slane %v3358, %v3665
        %v3667 = vlaneseq
        %v3668 = vshrl.u32 %v3667, 7
        %v3669 = vsub.s32 0, %v3668
        %v3670 = vrot.slane %v3359, %v3669
        %v3671 = vlaneseq
        %v3672 = vshrl.u32 %v3671, 7
        %v3673 = vsub.s32 0, %v3672
        %v3674 = vrot.slane %v3360, %v3673
        %v3675 = vlaneseq
        %v3676 = vshrl.u32 %v3675, 7
        %v3677 = vsub.s32 0, %v3676
        %v3678 = vrot.slane %v3361, %v3677
        %v3679 = vlaneseq
        %v3680 = vshrl.u32 %v3679, 7
        %v3681 = vsub.s32 0, %v3680
        %v3682 = vrot.slane %v3362, %v3681
        %v3683 = vlaneseq
        %v3684 = vshrl.u32 %v3683, 7
        %v3685 = vsub.s32 0, %v3684
        %v3686 = vrot.slane %v3363, %v3685
        %v3687 = vlaneseq
        %v3688 = vshrl.u32 %v3687, 7
        %v3689 = vsub.s32 0, %v3688
        %v3690 = vrot.slane %v3364, %v3689
        %v3691 = vlaneseq
        %v3692 = vshrl.u32 %v3691, 7
        %v3693 = vsub.s32 0, %v3692
        %v3694 = vrot.slane %v3365, %v3693
        %v3695 = vlaneseq
        %v3696 = vshrl.u32 %v3695, 7
        %v3697 = vsub.s32 0, %v3696
        %v3698 = vrot.slane %v3366, %v3697
        %v3699 = vlaneseq
        %v3700 = vshrl.u32 %v3699, 7
        %v3701 = vsub.s32 0, %v3700
        %v3702 = vrot.slane %v3367, %v3701
        %v3703 = vlaneseq
        %v3704 = vshrl.u32 %v3703, 7
        %v3705 = vsub.s32 0, %v3704
        %v3706 = vrot.slane %v3368, %v3705
        %v3707 = vlaneseq
        %v3708 = vshrl.u32 %v3707, 7
        %v3709 = vsub.s32 0, %v3708
        %v3710 = vrot.slane %v3369, %v3709
        %vm3711 = vcmask 1041409
        %v3712 = vsel %vm3711, %v3462, %v3458
        %vm3713 = vcmask 1042434
        %v3714 = vsel %vm3713, %v3466, %v3712
        %vm3715 = vcmask 1043459
        %v3716 = vsel %vm3715, %v3470, %v3714
        %vm3717 = vcmask 1044484
        %v3718 = vsel %vm3717, %v3474, %v3716
        %vm3719 = vcmask 1045509
        %v3720 = vsel %vm3719, %v3478, %v3718
        %vm3721 = vcmask 1046534
        %v3722 = vsel %vm3721, %v3482, %v3720
        %vm3723 = vcmask 1047559
        %v3724 = vsel %vm3723, %v3486, %v3722
        %v3725 = vsel %vm3711, %v3494, %v3490
        %v3726 = vsel %vm3713, %v3498, %v3725
        %v3727 = vsel %vm3715, %v3502, %v3726
        %v3728 = vsel %vm3717, %v3506, %v3727
        %v3729 = vsel %vm3719, %v3510, %v3728
        %v3730 = vsel %vm3721, %v3514, %v3729
        %v3731 = vsel %vm3723, %v3518, %v3730
        %v3732 = vsel %vm3711, %v3526, %v3522
        %v3733 = vsel %vm3713, %v3530, %v3732
        %v3734 = vsel %vm3715, %v3534, %v3733
        %v3735 = vsel %vm3717, %v3538, %v3734
        %v3736 = vsel %vm3719, %v3542, %v3735
        %v3737 = vsel %vm3721, %v3546, %v3736
        %v3738 = vsel %vm3723, %v3550, %v3737
        %v3739 = vsel %vm3711, %v3558, %v3554
        %v3740 = vsel %vm3713, %v3562, %v3739
        %v3741 = vsel %vm3715, %v3566, %v3740
        %v3742 = vsel %vm3717, %v3570, %v3741
        %v3743 = vsel %vm3719, %v3574, %v3742
        %v3744 = vsel %vm3721, %v3578, %v3743
        %v3745 = vsel %vm3723, %v3582, %v3744
        %v3746 = vsel %vm3711, %v3590, %v3586
        %v3747 = vsel %vm3713, %v3594, %v3746
        %v3748 = vsel %vm3715, %v3598, %v3747
        %v3749 = vsel %vm3717, %v3602, %v3748
        %v3750 = vsel %vm3719, %v3606, %v3749
        %v3751 = vsel %vm3721, %v3610, %v3750
        %v3752 = vsel %vm3723, %v3614, %v3751
        %v3753 = vsel %vm3711, %v3622, %v3618
        %v3754 = vsel %vm3713, %v3626, %v3753
        %v3755 = vsel %vm3715, %v3630, %v3754
        %v3756 = vsel %vm3717, %v3634, %v3755
        %v3757 = vsel %vm3719, %v3638, %v3756
        %v3758 = vsel %vm3721, %v3642, %v3757
        %v3759 = vsel %vm3723, %v3646, %v3758
        %v3760 = vsel %vm3711, %v3654, %v3650
        %v3761 = vsel %vm3713, %v3658, %v3760
        %v3762 = vsel %vm3715, %v3662, %v3761
        %v3763 = vsel %vm3717, %v3666, %v3762
        %v3764 = vsel %vm3719, %v3670, %v3763
        %v3765 = vsel %vm3721, %v3674, %v3764
        %v3766 = vsel %vm3723, %v3678, %v3765
        %v3767 = vsel %vm3711, %v3686, %v3682
        %v3768 = vsel %vm3713, %v3690, %v3767
        %v3769 = vsel %vm3715, %v3694, %v3768
        %v3770 = vsel %vm3717, %v3698, %v3769
        %v3771 = vsel %vm3719, %v3702, %v3770
        %v3772 = vsel %vm3721, %v3706, %v3771
        %v3773 = vsel %vm3723, %v3710, %v3772
        %s3782 = scalar_lea.vmem [#allocation3], 16
        %3783 = vst.msk [vmem:[%s3782 + $0x1] sm:$0xff] %vm1489, %v3724
        %3784 = vst.msk [vmem:[%s3782 + $0x11] sm:$0xff] %vm1489, %v3731
        %3785 = vst.msk [vmem:[%s3782 + $0x21] sm:$0xff] %vm1489, %v3738
        %3786 = vst.msk [vmem:[%s3782 + $0x31] sm:$0xff] %vm1489, %v3745
        %3787 = vst.msk [vmem:[%s3782 + $0x41] sm:$0xff] %vm1489, %v3752
        %3788 = vst.msk [vmem:[%s3782 + $0x51] sm:$0xff] %vm1489, %v3759
        %3789 = vst.msk [vmem:[%s3782 + $0x61] sm:$0xff] %vm1489, %v3766
        %3790 = vst.msk [vmem:[%s3782 + $0x71] sm:$0xff] %vm1489, %v3773
        %v3791 = vld [vmem:[#allocation3] sm:$0xff]
        %v3792 = vld [vmem:[#allocation3 + $0x8] sm:$0x3]
        %v3793 = vld [vmem:[#allocation3 + $0x10] sm:$0xff]
        %v3794 = vld [vmem:[#allocation3 + $0x18] sm:$0x3]
        %v3795 = vld [vmem:[#allocation3 + $0x20] sm:$0xff]
        %v3796 = vld [vmem:[#allocation3 + $0x28] sm:$0x3]
        %v3797 = vld [vmem:[#allocation3 + $0x30] sm:$0xff]
        %v3798 = vld [vmem:[#allocation3 + $0x38] sm:$0x3]
        %v3799 = vld [vmem:[#allocation3 + $0x40] sm:$0xff]
        %v3800 = vld [vmem:[#allocation3 + $0x48] sm:$0x3]
        %v3801 = vld [vmem:[#allocation3 + $0x50] sm:$0xff]
        %v3802 = vld [vmem:[#allocation3 + $0x58] sm:$0x3]
        %v3803 = vld [vmem:[#allocation3 + $0x60] sm:$0xff]
        %v3804 = vld [vmem:[#allocation3 + $0x68] sm:$0x3]
        %v3805 = vld [vmem:[#allocation3 + $0x70] sm:$0xff]
        %v3806 = vld [vmem:[#allocation3 + $0x78] sm:$0x3]
        %v3807 = vld [vmem:[#allocation3 + $0x80] sm:$0xff]
        %v3808 = vld [vmem:[#allocation3 + $0x88] sm:$0x3]
        %v3809 = vld [vmem:[#allocation3 + $0x90] sm:$0xff]
        %v3810 = vld [vmem:[#allocation3 + $0x98] sm:$0x3]
        %v3827 = vrot.slane %v3791, 1
        %v3828 = vrot.slane %v3792, 1
        %v3829 = vsel %vm501, %v3827, %v3828
        %v3830 = vrot.slane %v3793, 1
        %v3831 = vrot.slane %v3794, 1
        %v3832 = vsel %vm501, %v3830, %v3831
        %v3833 = vrot.slane %v3795, 1
        %v3834 = vrot.slane %v3796, 1
        %v3835 = vsel %vm501, %v3833, %v3834
        %v3836 = vrot.slane %v3797, 1
        %v3837 = vrot.slane %v3798, 1
        %v3838 = vsel %vm501, %v3836, %v3837
        %v3839 = vrot.slane %v3799, 1
        %v3840 = vrot.slane %v3800, 1
        %v3841 = vsel %vm501, %v3839, %v3840
        %v3842 = vrot.slane %v3801, 1
        %v3843 = vrot.slane %v3802, 1
        %v3844 = vsel %vm501, %v3842, %v3843
        %v3845 = vrot.slane %v3803, 1
        %v3846 = vrot.slane %v3804, 1
        %v3847 = vsel %vm501, %v3845, %v3846
        %v3848 = vrot.slane %v3805, 1
        %v3849 = vrot.slane %v3806, 1
        %v3850 = vsel %vm501, %v3848, %v3849
        %v3851 = vrot.slane %v3791, 2
        %v3852 = vrot.slane %v3792, 2
        %v3853 = vsel %vm582, %v3851, %v3852
        %v3854 = vrot.slane %v3793, 2
        %v3855 = vrot.slane %v3794, 2
        %v3856 = vsel %vm582, %v3854, %v3855
        %v3857 = vrot.slane %v3795, 2
        %v3858 = vrot.slane %v3796, 2
        %v3859 = vsel %vm582, %v3857, %v3858
        %v3860 = vrot.slane %v3797, 2
        %v3861 = vrot.slane %v3798, 2
        %v3862 = vsel %vm582, %v3860, %v3861
        %v3863 = vrot.slane %v3799, 2
        %v3864 = vrot.slane %v3800, 2
        %v3865 = vsel %vm582, %v3863, %v3864
        %v3866 = vrot.slane %v3801, 2
        %v3867 = vrot.slane %v3802, 2
        %v3868 = vsel %vm582, %v3866, %v3867
        %v3869 = vrot.slane %v3803, 2
        %v3870 = vrot.slane %v3804, 2
        %v3871 = vsel %vm582, %v3869, %v3870
        %v3872 = vrot.slane %v3805, 2
        %v3873 = vrot.slane %v3806, 2
        %v3874 = vsel %vm582, %v3872, %v3873
        %v3877 = vrot.slane %v3807, 1
        %v3878 = vrot.slane %v3808, 1
        %v3879 = vsel %vm501, %v3877, %v3878
        %v3880 = vrot.slane %v3807, 2
        %v3881 = vrot.slane %v3808, 2
        %v3882 = vsel %vm582, %v3880, %v3881
        %v3885 = vrot.slane %v3809, 1
        %v3886 = vrot.slane %v3810, 1
        %v3887 = vsel %vm501, %v3885, %v3886
        %v3888 = vrot.slane %v3809, 2
        %v3889 = vrot.slane %v3810, 2
        %v3890 = vsel %vm582, %v3888, %v3889
        %3891 = vrot.lane.b32.xlu0 %v3829, 16
        %v3892 = vpop.permute.xlu0 %3891
        %3893 = vrot.lane.b32.xlu0 %v3832, 16
        %v3894 = vpop.permute.xlu0 %3893
        %3895 = vrot.lane.b32.xlu0 %v3835, 16
        %v3896 = vpop.permute.xlu0 %3895
        %3897 = vrot.lane.b32.xlu0 %v3838, 16
        %v3898 = vpop.permute.xlu0 %3897
        %3899 = vrot.lane.b32.xlu0 %v3841, 16
        %v3900 = vpop.permute.xlu0 %3899
        %3901 = vrot.lane.b32.xlu0 %v3844, 16
        %v3902 = vpop.permute.xlu0 %3901
        %3903 = vrot.lane.b32.xlu0 %v3847, 16
        %v3904 = vpop.permute.xlu0 %3903
        %3905 = vrot.lane.b32.xlu0 %v3850, 16
        %v3906 = vpop.permute.xlu0 %3905
        %3915 = vrot.lane.b32.xlu0 %v3853, 32
        %v3916 = vpop.permute.xlu0 %3915
        %3917 = vrot.lane.b32.xlu0 %v3856, 32
        %v3918 = vpop.permute.xlu0 %3917
        %3919 = vrot.lane.b32.xlu0 %v3859, 32
        %v3920 = vpop.permute.xlu0 %3919
        %3921 = vrot.lane.b32.xlu0 %v3862, 32
        %v3922 = vpop.permute.xlu0 %3921
        %3923 = vrot.lane.b32.xlu0 %v3865, 32
        %v3924 = vpop.permute.xlu0 %3923
        %3925 = vrot.lane.b32.xlu0 %v3868, 32
        %v3926 = vpop.permute.xlu0 %3925
        %3927 = vrot.lane.b32.xlu0 %v3871, 32
        %v3928 = vpop.permute.xlu0 %3927
        %3929 = vrot.lane.b32.xlu0 %v3874, 32
        %v3930 = vpop.permute.xlu0 %3929
        %3939 = vrot.lane.b32.xlu0 %v3793, 48
        %v3940 = vpop.permute.xlu0 %3939
        %3941 = vrot.lane.b32.xlu0 %v3795, 48
        %v3942 = vpop.permute.xlu0 %3941
        %3943 = vrot.lane.b32.xlu0 %v3797, 48
        %v3944 = vpop.permute.xlu0 %3943
        %3945 = vrot.lane.b32.xlu0 %v3799, 48
        %v3946 = vpop.permute.xlu0 %3945
        %3947 = vrot.lane.b32.xlu0 %v3801, 48
        %v3948 = vpop.permute.xlu0 %3947
        %3949 = vrot.lane.b32.xlu0 %v3803, 48
        %v3950 = vpop.permute.xlu0 %3949
        %3951 = vrot.lane.b32.xlu0 %v3805, 48
        %v3952 = vpop.permute.xlu0 %3951
        %3953 = vrot.lane.b32.xlu0 %v3807, 48
        %v3954 = vpop.permute.xlu0 %3953
        %3963 = vrot.lane.b32.xlu0 %v3832, 64
        %v3964 = vpop.permute.xlu0 %3963
        %3965 = vrot.lane.b32.xlu0 %v3835, 64
        %v3966 = vpop.permute.xlu0 %3965
        %3967 = vrot.lane.b32.xlu0 %v3838, 64
        %v3968 = vpop.permute.xlu0 %3967
        %3969 = vrot.lane.b32.xlu0 %v3841, 64
        %v3970 = vpop.permute.xlu0 %3969
        %3971 = vrot.lane.b32.xlu0 %v3844, 64
        %v3972 = vpop.permute.xlu0 %3971
        %3973 = vrot.lane.b32.xlu0 %v3847, 64
        %v3974 = vpop.permute.xlu0 %3973
        %3975 = vrot.lane.b32.xlu0 %v3850, 64
        %v3976 = vpop.permute.xlu0 %3975
        %3977 = vrot.lane.b32.xlu0 %v3879, 64
        %v3978 = vpop.permute.xlu0 %3977
        %3987 = vrot.lane.b32.xlu0 %v3856, 80
        %v3988 = vpop.permute.xlu0 %3987
        %3989 = vrot.lane.b32.xlu0 %v3859, 80
        %v3990 = vpop.permute.xlu0 %3989
        %3991 = vrot.lane.b32.xlu0 %v3862, 80
        %v3992 = vpop.permute.xlu0 %3991
        %3993 = vrot.lane.b32.xlu0 %v3865, 80
        %v3994 = vpop.permute.xlu0 %3993
        %3995 = vrot.lane.b32.xlu0 %v3868, 80
        %v3996 = vpop.permute.xlu0 %3995
        %3997 = vrot.lane.b32.xlu0 %v3871, 80
        %v3998 = vpop.permute.xlu0 %3997
        %3999 = vrot.lane.b32.xlu0 %v3874, 80
        %v4000 = vpop.permute.xlu0 %3999
        %4001 = vrot.lane.b32.xlu0 %v3882, 80
        %v4002 = vpop.permute.xlu0 %4001
        %4011 = vrot.lane.b32.xlu0 %v3795, 96
        %v4012 = vpop.permute.xlu0 %4011
        %4013 = vrot.lane.b32.xlu0 %v3797, 96
        %v4014 = vpop.permute.xlu0 %4013
        %4015 = vrot.lane.b32.xlu0 %v3799, 96
        %v4016 = vpop.permute.xlu0 %4015
        %4017 = vrot.lane.b32.xlu0 %v3801, 96
        %v4018 = vpop.permute.xlu0 %4017
        %4019 = vrot.lane.b32.xlu0 %v3803, 96
        %v4020 = vpop.permute.xlu0 %4019
        %4021 = vrot.lane.b32.xlu0 %v3805, 96
        %v4022 = vpop.permute.xlu0 %4021
        %4023 = vrot.lane.b32.xlu0 %v3807, 96
        %v4024 = vpop.permute.xlu0 %4023
        %4025 = vrot.lane.b32.xlu0 %v3809, 96
        %v4026 = vpop.permute.xlu0 %4025
        %4035 = vrot.lane.b32.xlu0 %v3835, 112
        %v4036 = vpop.permute.xlu0 %4035
        %4037 = vrot.lane.b32.xlu0 %v3838, 112
        %v4038 = vpop.permute.xlu0 %4037
        %4039 = vrot.lane.b32.xlu0 %v3841, 112
        %v4040 = vpop.permute.xlu0 %4039
        %4041 = vrot.lane.b32.xlu0 %v3844, 112
        %v4042 = vpop.permute.xlu0 %4041
        %4043 = vrot.lane.b32.xlu0 %v3847, 112
        %v4044 = vpop.permute.xlu0 %4043
        %4045 = vrot.lane.b32.xlu0 %v3850, 112
        %v4046 = vpop.permute.xlu0 %4045
        %4047 = vrot.lane.b32.xlu0 %v3879, 112
        %v4048 = vpop.permute.xlu0 %4047
        %4049 = vrot.lane.b32.xlu0 %v3887, 112
        %v4050 = vpop.permute.xlu0 %4049
        %v4059 = vsel %vm1489, %v3791, %v3892
        %v4060 = vsel %vm1489, %v3793, %v3894
        %v4061 = vsel %vm1489, %v3795, %v3896
        %v4062 = vsel %vm1489, %v3797, %v3898
        %v4063 = vsel %vm1489, %v3799, %v3900
        %v4064 = vsel %vm1489, %v3801, %v3902
        %v4065 = vsel %vm1489, %v3803, %v3904
        %v4066 = vsel %vm1489, %v3805, %v3906
        %v4067 = vsel %vm1555, %v4059, %v3916
        %v4068 = vsel %vm1555, %v4060, %v3918
        %v4069 = vsel %vm1555, %v4061, %v3920
        %v4070 = vsel %vm1555, %v4062, %v3922
        %v4071 = vsel %vm1555, %v4063, %v3924
        %v4072 = vsel %vm1555, %v4064, %v3926
        %v4073 = vsel %vm1555, %v4065, %v3928
        %v4074 = vsel %vm1555, %v4066, %v3930
        %v4075 = vsel %vm1621, %v4067, %v3940
        %v4076 = vsel %vm1621, %v4068, %v3942
        %v4077 = vsel %vm1621, %v4069, %v3944
        %v4078 = vsel %vm1621, %v4070, %v3946
        %v4079 = vsel %vm1621, %v4071, %v3948
        %v4080 = vsel %vm1621, %v4072, %v3950
        %v4081 = vsel %vm1621, %v4073, %v3952
        %v4082 = vsel %vm1621, %v4074, %v3954
        %v4083 = vsel %vm1687, %v4075, %v3964
        %v4084 = vsel %vm1687, %v4076, %v3966
        %v4085 = vsel %vm1687, %v4077, %v3968
        %v4086 = vsel %vm1687, %v4078, %v3970
        %v4087 = vsel %vm1687, %v4079, %v3972
        %v4088 = vsel %vm1687, %v4080, %v3974
        %v4089 = vsel %vm1687, %v4081, %v3976
        %v4090 = vsel %vm1687, %v4082, %v3978
        %vm4091 = vcmask 654336
        %v4092 = vsel %vm4091, %v4083, %v3988
        %v4093 = vsel %vm4091, %v4084, %v3990
        %v4094 = vsel %vm4091, %v4085, %v3992
        %v4095 = vsel %vm4091, %v4086, %v3994
        %v4096 = vsel %vm4091, %v4087, %v3996
        %v4097 = vsel %vm4091, %v4088, %v3998
        %v4098 = vsel %vm4091, %v4089, %v4000
        %v4099 = vsel %vm4091, %v4090, %v4002
        %vm4100 = vcmask 785408
        %v4101 = vsel %vm4100, %v4092, %v4012
        %v4102 = vsel %vm4100, %v4093, %v4014
        %v4103 = vsel %vm4100, %v4094, %v4016
        %v4104 = vsel %vm4100, %v4095, %v4018
        %v4105 = vsel %vm4100, %v4096, %v4020
        %v4106 = vsel %vm4100, %v4097, %v4022
        %v4107 = vsel %vm4100, %v4098, %v4024
        %v4108 = vsel %vm4100, %v4099, %v4026
        %vm4109 = vcmask 916480
        %v4110 = vsel %vm4109, %v4101, %v4036
        %v4111 = vsel %vm4109, %v4102, %v4038
        %v4112 = vsel %vm4109, %v4103, %v4040
        %v4113 = vsel %vm4109, %v4104, %v4042
        %v4114 = vsel %vm4109, %v4105, %v4044
        %v4115 = vsel %vm4109, %v4106, %v4046
        %v4116 = vsel %vm4109, %v4107, %v4048
        %v4117 = vsel %vm4109, %v4108, %v4050
        %v4118 = vld [vmem:[%s3] sm:$0xff]
        %v4119 = vld [vmem:[%s3 + $0x8] sm:$0xff]
        %v4120 = vld [vmem:[%s3 + $0x10] sm:$0xff]
        %v4121 = vld [vmem:[%s3 + $0x18] sm:$0xff]
        %v4122 = vld [vmem:[%s3 + $0x20] sm:$0xff]
        %v4123 = vld [vmem:[%s3 + $0x28] sm:$0xff]
        %v4124 = vld [vmem:[%s3 + $0x30] sm:$0xff]
        %v4125 = vld [vmem:[%s3 + $0x38] sm:$0xff]
        %v4126 = vld [vmem:[%s3 + $0x40] sm:$0xff]
        %v4127 = vld [vmem:[%s3 + $0x48] sm:$0xff]
        %v4128 = vld [vmem:[%s3 + $0x50] sm:$0xff]
        %v4129 = vld [vmem:[%s3 + $0x58] sm:$0xff]
        %v4130 = vld [vmem:[%s3 + $0x60] sm:$0xff]
        %v4131 = vld [vmem:[%s3 + $0x68] sm:$0xff]
        %v4132 = vld [vmem:[%s3 + $0x70] sm:$0xff]
        %v4133 = vld [vmem:[%s3 + $0x78] sm:$0xff]
        %v4134 = vld [vmem:[%s3 + $0x80] sm:$0xff]
        %v4135 = vld [vmem:[%s3 + $0x88] sm:$0xff]
        %v4136 = vld [vmem:[%s4] sm:$0x1]
        %v4138 = vlaneseq
        %v4139 = vshrl.u32 %v4138, 7
        %v4140 = vsub.s32 0, %v4139
        %v4141 = vrot.slane %v4136, %v4140
        %v4143 = vsel %vm1489, %v3859, 0
        %v4145 = vsel %vm1489, %v3862, 0
        %v4147 = vsel %vm1489, %v3865, 0
        %v4149 = vsel %vm1489, %v3868, 0
        %v4151 = vsel %vm1489, %v3871, 0
        %v4153 = vsel %vm1489, %v3874, 0
        %v4155 = vsel %vm1489, %v3882, 0
        %v4157 = vsel %vm1489, %v3890, 0
        %4159 = vmatprep.subr.mxu0 0.0
        %4160 = vmatpush1.msra.mxu0 %v4133
        %4161 = vmatprep.subr.mxu0 0.0
        %4162 = vmatpush1.msra.mxu0 %v4132
        %4163 = vmatprep.subr.mxu0 0.0
        %4164 = vmatpush1.msra.mxu0 %v4131
        %4165 = vmatprep.subr.mxu0 0.0
        %4166 = vmatpush1.msra.mxu0 %v4130
        %4167 = vmatprep.subr.mxu0 0.0
        %4168 = vmatpush1.msra.mxu0 %v4129
        %4169 = vmatprep.subr.mxu0 0.0
        %4170 = vmatpush1.msra.mxu0 %v4128
        %4171 = vmatprep.subr.mxu0 0.0
        %4172 = vmatpush1.msra.mxu0 %v4127
        %4173 = vmatprep.subr.mxu0 0.0
        %4174 = vmatpush1.msra.mxu0 %v4126
        %4175 = vmatprep.subr.mxu0 0.0
        %4176 = vmatpush1.msra.mxu0 %v4125
        %4177 = vmatprep.subr.mxu0 0.0
        %4178 = vmatpush1.msra.mxu0 %v4124
        %4179 = vmatprep.subr.mxu0 0.0
        %4180 = vmatpush1.msra.mxu0 %v4123
        %4181 = vmatprep.subr.mxu0 0.0
        %4182 = vmatpush1.msra.mxu0 %v4122
        %4183 = vmatprep.subr.mxu0 0.0
        %4184 = vmatpush1.msra.mxu0 %v4121
        %4185 = vmatprep.subr.mxu0 0.0
        %4186 = vmatpush1.msra.mxu0 %v4120
        %4187 = vmatprep.subr.mxu0 0.0
        %4188 = vmatpush1.msra.mxu0 %v4119
        %4189 = vmatprep.subr.mxu0 0.0
        %4190 = vmatpush1.msra.mxu0 %v4118
        %4191 = vmatprep.subr.mxu0 0.0
        %4192 = vmatpush2.msra.mxu0 0.0
        %4193 = vmatprep.subr.mxu0 0.0
        %4194 = vmatpush2.msra.mxu0 0.0
        %4195 = vmatprep.subr.mxu0 0.0
        %4196 = vmatpush2.msra.mxu0 0.0
        %4197 = vmatprep.subr.mxu0 0.0
        %4198 = vmatpush2.msra.mxu0 0.0
        %4199 = vmatprep.subr.mxu0 0.0
        %4200 = vmatpush2.msra.mxu0 0.0
        %4201 = vmatprep.subr.mxu0 0.0
        %4202 = vmatpush2.msra.mxu0 0.0
        %4203 = vmatprep.subr.mxu0 0.0
        %4204 = vmatpush2.msra.mxu0 0.0
        %4205 = vmatprep.subr.mxu0 0.0
        %4206 = vmatpush2.msra.mxu0 0.0
        %4207 = vmatprep.subr.mxu0 0.0
        %4208 = vmatpush2.msra.mxu0 0.0
        %4209 = vmatprep.subr.mxu0 0.0
        %4210 = vmatpush2.msra.mxu0 0.0
        %4211 = vmatprep.subr.mxu0 0.0
        %4212 = vmatpush2.msra.mxu0 0.0
        %4213 = vmatprep.subr.mxu0 0.0
        %4214 = vmatpush2.msra.mxu0 0.0
        %4215 = vmatprep.subr.mxu0 0.0
        %4216 = vmatpush2.msra.mxu0 0.0
        %4217 = vmatprep.subr.mxu0 0.0
        %4218 = vmatpush2.msra.mxu0 0.0
        %4219 = vmatprep.subr.mxu0 0.0
        %4220 = vmatpush2.msra.mxu0 %v4135
        %4221 = vmatprep.subr.mxu0 0.0
        %4222 = vmatpush2.msra.mxu0 %v4134
        %4223 = vmatprep.mubr.f32.mxu0 %v4143
        %4224 = vmatmul.mubr.f32.gmra.mxu0 %v4110
        %v4225 = vpop.f32.mrf.mxu0
        %v4226 = vadd.f32 %v4141, %v4225
        %v4227 = vpop.f32.mrf.mxu0
        %4228 = vmatprep.mubr.f32.mxu0 %v4145
        %4229 = vmatmul.mubr.f32.gmra.mxu0 %v4111
        %v4230 = vpop.f32.mrf.mxu0
        %v4231 = vadd.f32 %v4141, %v4230
        %v4232 = vpop.f32.mrf.mxu0
        %4233 = vmatprep.mubr.f32.mxu0 %v4147
        %4234 = vmatmul.mubr.f32.gmra.mxu0 %v4112
        %v4235 = vpop.f32.mrf.mxu0
        %v4236 = vadd.f32 %v4141, %v4235
        %v4237 = vpop.f32.mrf.mxu0
        %4238 = vmatprep.mubr.f32.mxu0 %v4149
        %4239 = vmatmul.mubr.f32.gmra.mxu0 %v4113
        %v4240 = vpop.f32.mrf.mxu0
        %v4241 = vadd.f32 %v4141, %v4240
        %v4242 = vpop.f32.mrf.mxu0
        %4243 = vmatprep.mubr.f32.mxu0 %v4151
        %4244 = vmatmul.mubr.f32.gmra.mxu0 %v4114
        %v4245 = vpop.f32.mrf.mxu0
        %v4246 = vadd.f32 %v4141, %v4245
        %v4247 = vpop.f32.mrf.mxu0
        %4248 = vmatprep.mubr.f32.mxu0 %v4153
        %4249 = vmatmul.mubr.f32.gmra.mxu0 %v4115
        %v4250 = vpop.f32.mrf.mxu0
        %v4251 = vadd.f32 %v4141, %v4250
        %v4252 = vpop.f32.mrf.mxu0
        %4253 = vmatprep.mubr.f32.mxu0 %v4155
        %4254 = vmatmul.mubr.f32.gmra.mxu0 %v4116
        %v4255 = vpop.f32.mrf.mxu0
        %v4256 = vadd.f32 %v4141, %v4255
        %v4257 = vpop.f32.mrf.mxu0
        %4258 = vmatprep.mubr.f32.mxu0 %v4157
        %4259 = vmatmul.mubr.f32.gmra.mxu0 %v4117
        %v4260 = vpop.f32.mrf.mxu0
        %v4261 = vadd.f32 %v4141, %v4260
        %v4262 = vpop.f32.mrf.mxu0
        %4263 = vdwg.mxu0
        %v4264 = vmax.f32 %v4226, 0.0
        %v4265 = vmax.f32 %v4231, 0.0
        %v4266 = vmax.f32 %v4236, 0.0
        %v4267 = vmax.f32 %v4241, 0.0
        %v4268 = vmax.f32 %v4246, 0.0
        %v4269 = vmax.f32 %v4251, 0.0
        %v4270 = vmax.f32 %v4256, 0.0
        %v4271 = vmax.f32 %v4261, 0.0
        %v4280 = vcombine.high %v4264, %v4264
        %v4282 = vunpack.c.l.s4 1983009808
        %v4283 = vunpack.c.0.s8 %v4282
        %v4284 = vlaneseq
        %v4285 = vshrl.u32 %v4284, 7
        %v4286 = vsub.s32 %v4283, %v4285
        %v4287 = vrot.slane %v4264, %v4286
        %v4289 = vunpack.c.l.s4 1983009808
        %v4290 = vunpack.c.0.s8 %v4289
        %v4291 = vlaneseq
        %v4292 = vshrl.u32 %v4291, 7
        %v4293 = vsub.s32 %v4290, %v4292
        %v4294 = vrot.slane %v4280, %v4293
        %v4295 = vcombine.high %v4287, %v4287
        %v4296 = vcombine.high %v4294, %v4294
        %v4297 = vcombine.high %v4265, %v4265
        %v4299 = vunpack.c.l.s4 1983009808
        %v4300 = vunpack.c.0.s8 %v4299
        %v4301 = vlaneseq
        %v4302 = vshrl.u32 %v4301, 7
        %v4303 = vsub.s32 %v4300, %v4302
        %v4304 = vrot.slane %v4265, %v4303
        %v4306 = vunpack.c.l.s4 1983009808
        %v4307 = vunpack.c.0.s8 %v4306
        %v4308 = vlaneseq
        %v4309 = vshrl.u32 %v4308, 7
        %v4310 = vsub.s32 %v4307, %v4309
        %v4311 = vrot.slane %v4297, %v4310
        %v4312 = vcombine.high %v4304, %v4304
        %v4313 = vcombine.high %v4311, %v4311
        %v4314 = vcombine.high %v4266, %v4266
        %v4316 = vunpack.c.l.s4 1983009808
        %v4317 = vunpack.c.0.s8 %v4316
        %v4318 = vlaneseq
        %v4319 = vshrl.u32 %v4318, 7
        %v4320 = vsub.s32 %v4317, %v4319
        %v4321 = vrot.slane %v4266, %v4320
        %v4323 = vunpack.c.l.s4 1983009808
        %v4324 = vunpack.c.0.s8 %v4323
        %v4325 = vlaneseq
        %v4326 = vshrl.u32 %v4325, 7
        %v4327 = vsub.s32 %v4324, %v4326
        %v4328 = vrot.slane %v4314, %v4327
        %v4329 = vcombine.high %v4321, %v4321
        %v4330 = vcombine.high %v4328, %v4328
        %v4331 = vcombine.high %v4267, %v4267
        %v4333 = vunpack.c.l.s4 1983009808
        %v4334 = vunpack.c.0.s8 %v4333
        %v4335 = vlaneseq
        %v4336 = vshrl.u32 %v4335, 7
        %v4337 = vsub.s32 %v4334, %v4336
        %v4338 = vrot.slane %v4267, %v4337
        %v4340 = vunpack.c.l.s4 1983009808
        %v4341 = vunpack.c.0.s8 %v4340
        %v4342 = vlaneseq
        %v4343 = vshrl.u32 %v4342, 7
        %v4344 = vsub.s32 %v4341, %v4343
        %v4345 = vrot.slane %v4331, %v4344
        %v4346 = vcombine.high %v4338, %v4338
        %v4347 = vcombine.high %v4345, %v4345
        %v4348 = vcombine.high %v4268, %v4268
        %v4350 = vunpack.c.l.s4 1983009808
        %v4351 = vunpack.c.0.s8 %v4350
        %v4352 = vlaneseq
        %v4353 = vshrl.u32 %v4352, 7
        %v4354 = vsub.s32 %v4351, %v4353
        %v4355 = vrot.slane %v4268, %v4354
        %v4357 = vunpack.c.l.s4 1983009808
        %v4358 = vunpack.c.0.s8 %v4357
        %v4359 = vlaneseq
        %v4360 = vshrl.u32 %v4359, 7
        %v4361 = vsub.s32 %v4358, %v4360
        %v4362 = vrot.slane %v4348, %v4361
        %v4363 = vcombine.high %v4355, %v4355
        %v4364 = vcombine.high %v4362, %v4362
        %v4365 = vcombine.high %v4269, %v4269
        %v4367 = vunpack.c.l.s4 1983009808
        %v4368 = vunpack.c.0.s8 %v4367
        %v4369 = vlaneseq
        %v4370 = vshrl.u32 %v4369, 7
        %v4371 = vsub.s32 %v4368, %v4370
        %v4372 = vrot.slane %v4269, %v4371
        %v4374 = vunpack.c.l.s4 1983009808
        %v4375 = vunpack.c.0.s8 %v4374
        %v4376 = vlaneseq
        %v4377 = vshrl.u32 %v4376, 7
        %v4378 = vsub.s32 %v4375, %v4377
        %v4379 = vrot.slane %v4365, %v4378
        %v4380 = vcombine.high %v4372, %v4372
        %v4381 = vcombine.high %v4379, %v4379
        %v4382 = vcombine.high %v4270, %v4270
        %v4384 = vunpack.c.l.s4 1983009808
        %v4385 = vunpack.c.0.s8 %v4384
        %v4386 = vlaneseq
        %v4387 = vshrl.u32 %v4386, 7
        %v4388 = vsub.s32 %v4385, %v4387
        %v4389 = vrot.slane %v4270, %v4388
        %v4391 = vunpack.c.l.s4 1983009808
        %v4392 = vunpack.c.0.s8 %v4391
        %v4393 = vlaneseq
        %v4394 = vshrl.u32 %v4393, 7
        %v4395 = vsub.s32 %v4392, %v4394
        %v4396 = vrot.slane %v4382, %v4395
        %v4397 = vcombine.high %v4389, %v4389
        %v4398 = vcombine.high %v4396, %v4396
        %v4399 = vcombine.high %v4271, %v4271
        %v4401 = vunpack.c.l.s4 1983009808
        %v4402 = vunpack.c.0.s8 %v4401
        %v4403 = vlaneseq
        %v4404 = vshrl.u32 %v4403, 7
        %v4405 = vsub.s32 %v4402, %v4404
        %v4406 = vrot.slane %v4271, %v4405
        %v4408 = vunpack.c.l.s4 1983009808
        %v4409 = vunpack.c.0.s8 %v4408
        %v4410 = vlaneseq
        %v4411 = vshrl.u32 %v4410, 7
        %v4412 = vsub.s32 %v4409, %v4411
        %v4413 = vrot.slane %v4399, %v4412
        %v4414 = vcombine.high %v4406, %v4406
        %v4415 = vcombine.high %v4413, %v4413
        %v4448 = vrot.slane %v4287, 7
        %v4449 = vrot.slane %v4448, 2
        %v4450 = vrot.slane %v4295, 7
        %v4451 = vrot.slane %v4450, 2
        %v4452 = vrot.slane %v4294, 7
        %v4453 = vrot.slane %v4452, 2
        %v4454 = vrot.slane %v4296, 7
        %v4455 = vrot.slane %v4454, 2
        %v4456 = vrot.slane %v4321, 7
        %v4457 = vrot.slane %v4456, 2
        %v4458 = vrot.slane %v4329, 7
        %v4459 = vrot.slane %v4458, 2
        %v4460 = vrot.slane %v4328, 7
        %v4461 = vrot.slane %v4460, 2
        %v4462 = vrot.slane %v4330, 7
        %v4463 = vrot.slane %v4462, 2
        %v4464 = vrot.slane %v4355, 7
        %v4465 = vrot.slane %v4464, 2
        %v4466 = vrot.slane %v4363, 7
        %v4467 = vrot.slane %v4466, 2
        %v4468 = vrot.slane %v4362, 7
        %v4469 = vrot.slane %v4468, 2
        %v4470 = vrot.slane %v4364, 7
        %v4471 = vrot.slane %v4470, 2
        %v4472 = vrot.slane %v4389, 7
        %v4473 = vrot.slane %v4472, 2
        %v4474 = vrot.slane %v4397, 7
        %v4475 = vrot.slane %v4474, 2
        %v4476 = vrot.slane %v4396, 7
        %v4477 = vrot.slane %v4476, 2
        %v4478 = vrot.slane %v4398, 7
        %v4479 = vrot.slane %v4478, 2
        %v4496 = vmax.f32 %v4287, %v4449
        %v4497 = vmax.f32 %v4295, %v4451
        %v4498 = vmax.f32 %v4294, %v4453
        %v4499 = vmax.f32 %v4296, %v4455
        %v4500 = vmax.f32 %v4321, %v4457
        %v4501 = vmax.f32 %v4329, %v4459
        %v4502 = vmax.f32 %v4328, %v4461
        %v4503 = vmax.f32 %v4330, %v4463
        %v4504 = vmax.f32 %v4355, %v4465
        %v4505 = vmax.f32 %v4363, %v4467
        %v4506 = vmax.f32 %v4362, %v4469
        %v4507 = vmax.f32 %v4364, %v4471
        %v4508 = vmax.f32 %v4389, %v4473
        %v4509 = vmax.f32 %v4397, %v4475
        %v4510 = vmax.f32 %v4396, %v4477
        %v4511 = vmax.f32 %v4398, %v4479
        %v4512 = vrot.slane %v4304, 7
        %v4513 = vrot.slane %v4512, 2
        %v4514 = vrot.slane %v4312, 7
        %v4515 = vrot.slane %v4514, 2
        %v4516 = vrot.slane %v4311, 7
        %v4517 = vrot.slane %v4516, 2
        %v4518 = vrot.slane %v4313, 7
        %v4519 = vrot.slane %v4518, 2
        %v4520 = vrot.slane %v4338, 7
        %v4521 = vrot.slane %v4520, 2
        %v4522 = vrot.slane %v4346, 7
        %v4523 = vrot.slane %v4522, 2
        %v4524 = vrot.slane %v4345, 7
        %v4525 = vrot.slane %v4524, 2
        %v4526 = vrot.slane %v4347, 7
        %v4527 = vrot.slane %v4526, 2
        %v4528 = vrot.slane %v4372, 7
        %v4529 = vrot.slane %v4528, 2
        %v4530 = vrot.slane %v4380, 7
        %v4531 = vrot.slane %v4530, 2
        %v4532 = vrot.slane %v4379, 7
        %v4533 = vrot.slane %v4532, 2
        %v4534 = vrot.slane %v4381, 7
        %v4535 = vrot.slane %v4534, 2
        %v4536 = vrot.slane %v4406, 7
        %v4537 = vrot.slane %v4536, 2
        %v4538 = vrot.slane %v4414, 7
        %v4539 = vrot.slane %v4538, 2
        %v4540 = vrot.slane %v4413, 7
        %v4541 = vrot.slane %v4540, 2
        %v4542 = vrot.slane %v4415, 7
        %v4543 = vrot.slane %v4542, 2
        %v4560 = vmax.f32 %v4304, %v4513
        %v4561 = vmax.f32 %v4312, %v4515
        %v4562 = vmax.f32 %v4311, %v4517
        %v4563 = vmax.f32 %v4313, %v4519
        %v4564 = vmax.f32 %v4338, %v4521
        %v4565 = vmax.f32 %v4346, %v4523
        %v4566 = vmax.f32 %v4345, %v4525
        %v4567 = vmax.f32 %v4347, %v4527
        %v4568 = vmax.f32 %v4372, %v4529
        %v4569 = vmax.f32 %v4380, %v4531
        %v4570 = vmax.f32 %v4379, %v4533
        %v4571 = vmax.f32 %v4381, %v4535
        %v4572 = vmax.f32 %v4406, %v4537
        %v4573 = vmax.f32 %v4414, %v4539
        %v4574 = vmax.f32 %v4413, %v4541
        %v4575 = vmax.f32 %v4415, %v4543
        %v4576 = vmax.f32 %v4496, %v4560
        %v4577 = vmax.f32 %v4497, %v4561
        %v4578 = vmax.f32 %v4498, %v4562
        %v4579 = vmax.f32 %v4499, %v4563
        %v4580 = vmax.f32 %v4500, %v4564
        %v4581 = vmax.f32 %v4501, %v4565
        %v4582 = vmax.f32 %v4502, %v4566
        %v4583 = vmax.f32 %v4503, %v4567
        %v4584 = vmax.f32 %v4504, %v4568
        %v4585 = vmax.f32 %v4505, %v4569
        %v4586 = vmax.f32 %v4506, %v4570
        %v4587 = vmax.f32 %v4507, %v4571
        %v4588 = vmax.f32 %v4508, %v4572
        %v4589 = vmax.f32 %v4509, %v4573
        %v4590 = vmax.f32 %v4510, %v4574
        %v4591 = vmax.f32 %v4511, %v4575
        %vm4592 = vcmask 259072
        %4593 = vst.msk [vmem:[#allocation4] sm:$0x3f] %vm4592, 0.0
        %4594 = vst.msk [vmem:[#allocation4 + $0x8] sm:$0x3f] %vm4592, 0.0
        %4595 = vst.msk [vmem:[#allocation4 + $0x10] sm:$0x3f] %vm4592, 0.0
        %4596 = vst.msk [vmem:[#allocation4 + $0x18] sm:$0x3f] %vm4592, 0.0
        %4597 = vst.msk [vmem:[#allocation4 + $0x20] sm:$0x3f] %vm4592, 0.0
        %4598 = vst.msk [vmem:[#allocation4 + $0x28] sm:$0x3f] %vm4592, 0.0
        %v4615 = vlaneseq
        %v4616 = vshrl.u32 %v4615, 7
        %v4617 = vsub.s32 0, %v4616
        %v4618 = vrot.slane %v4576, %v4617
        %v4619 = vlaneseq
        %v4620 = vshrl.u32 %v4619, 7
        %v4621 = vsub.s32 0, %v4620
        %v4622 = vrot.slane %v4577, %v4621
        %v4623 = vlaneseq
        %v4624 = vshrl.u32 %v4623, 7
        %v4625 = vsub.s32 0, %v4624
        %v4626 = vrot.slane %v4578, %v4625
        %v4627 = vlaneseq
        %v4628 = vshrl.u32 %v4627, 7
        %v4629 = vsub.s32 0, %v4628
        %v4630 = vrot.slane %v4579, %v4629
        %v4631 = vlaneseq
        %v4632 = vshrl.u32 %v4631, 7
        %v4633 = vsub.s32 0, %v4632
        %v4634 = vrot.slane %v4580, %v4633
        %v4635 = vlaneseq
        %v4636 = vshrl.u32 %v4635, 7
        %v4637 = vsub.s32 0, %v4636
        %v4638 = vrot.slane %v4581, %v4637
        %v4639 = vlaneseq
        %v4640 = vshrl.u32 %v4639, 7
        %v4641 = vsub.s32 0, %v4640
        %v4642 = vrot.slane %v4582, %v4641
        %v4643 = vlaneseq
        %v4644 = vshrl.u32 %v4643, 7
        %v4645 = vsub.s32 0, %v4644
        %v4646 = vrot.slane %v4583, %v4645
        %v4647 = vlaneseq
        %v4648 = vshrl.u32 %v4647, 7
        %v4649 = vsub.s32 0, %v4648
        %v4650 = vrot.slane %v4584, %v4649
        %v4651 = vlaneseq
        %v4652 = vshrl.u32 %v4651, 7
        %v4653 = vsub.s32 0, %v4652
        %v4654 = vrot.slane %v4585, %v4653
        %v4655 = vlaneseq
        %v4656 = vshrl.u32 %v4655, 7
        %v4657 = vsub.s32 0, %v4656
        %v4658 = vrot.slane %v4586, %v4657
        %v4659 = vlaneseq
        %v4660 = vshrl.u32 %v4659, 7
        %v4661 = vsub.s32 0, %v4660
        %v4662 = vrot.slane %v4587, %v4661
        %v4663 = vlaneseq
        %v4664 = vshrl.u32 %v4663, 7
        %v4665 = vsub.s32 0, %v4664
        %v4666 = vrot.slane %v4588, %v4665
        %v4667 = vlaneseq
        %v4668 = vshrl.u32 %v4667, 7
        %v4669 = vsub.s32 0, %v4668
        %v4670 = vrot.slane %v4589, %v4669
        %v4671 = vlaneseq
        %v4672 = vshrl.u32 %v4671, 7
        %v4673 = vsub.s32 0, %v4672
        %v4674 = vrot.slane %v4590, %v4673
        %v4675 = vlaneseq
        %v4676 = vshrl.u32 %v4675, 7
        %v4677 = vsub.s32 0, %v4676
        %v4678 = vrot.slane %v4591, %v4677
        %v4679 = vsel %vm3711, %v4622, %v4618
        %v4680 = vsel %vm3713, %v4626, %v4679
        %v4681 = vsel %vm3715, %v4630, %v4680
        %v4682 = vsel %vm3711, %v4638, %v4634
        %v4683 = vsel %vm3713, %v4642, %v4682
        %v4684 = vsel %vm3715, %v4646, %v4683
        %v4685 = vsel %vm3711, %v4654, %v4650
        %v4686 = vsel %vm3713, %v4658, %v4685
        %v4687 = vsel %vm3715, %v4662, %v4686
        %v4688 = vsel %vm3711, %v4670, %v4666
        %v4689 = vsel %vm3713, %v4674, %v4688
        %v4690 = vsel %vm3715, %v4678, %v4689
        %s4695 = scalar_lea.vmem [#allocation4], 8
        %vm4696 = vcmask 257024
        %4697 = vst.msk [vmem:[%s4695 + $0x1] sm:$0xf] %vm4696, %v4681
        %4698 = vst.msk [vmem:[%s4695 + $0x9] sm:$0xf] %vm4696, %v4684
        %4699 = vst.msk [vmem:[%s4695 + $0x11] sm:$0xf] %vm4696, %v4687
        %4700 = vst.msk [vmem:[%s4695 + $0x19] sm:$0xf] %vm4696, %v4690
        %v4701 = vld [vmem:[#allocation4] sm:$0x3f]
        %v4702 = vld [vmem:[#allocation4 + $0x8] sm:$0x3f]
        %v4703 = vld [vmem:[#allocation4 + $0x10] sm:$0x3f]
        %v4704 = vld [vmem:[#allocation4 + $0x18] sm:$0x3f]
        %v4705 = vld [vmem:[#allocation4 + $0x20] sm:$0x3f]
        %v4706 = vld [vmem:[#allocation4 + $0x28] sm:$0x3f]
        %v4711 = vcombine.high %v4701, %v4701
        %v4712 = vcombine.high %v4702, %v4702
        %v4713 = vcombine.high %v4703, %v4703
        %v4714 = vcombine.high %v4704, %v4704
        %vm4715 = vcmask 1042432
        %vm4716 = vcmask 1046532
        %vm4717 = vmor %vm4715, %vm4716
        %v4718 = vrot.slane %v4701, 5
        %v4719 = vrot.slane %v4718, 4
        %v4720 = vrot.slane %v4711, 5
        %v4721 = vsel %vm4717, %v4719, %v4720
        %v4722 = vrot.slane %v4702, 5
        %v4723 = vrot.slane %v4722, 4
        %v4724 = vrot.slane %v4712, 5
        %v4725 = vsel %vm4717, %v4723, %v4724
        %v4726 = vrot.slane %v4703, 5
        %v4727 = vrot.slane %v4726, 4
        %v4728 = vrot.slane %v4713, 5
        %v4729 = vsel %vm4717, %v4727, %v4728
        %v4730 = vrot.slane %v4704, 5
        %v4731 = vrot.slane %v4730, 4
        %v4732 = vrot.slane %v4714, 5
        %v4733 = vsel %vm4717, %v4731, %v4732
        %vm4734 = vcmask 1041408
        %vm4735 = vcmask 1045508
        %vm4736 = vmor %vm4734, %vm4735
        %v4737 = vrot.slane %v4701, 6
        %v4738 = vrot.slane %v4737, 4
        %v4739 = vrot.slane %v4711, 6
        %v4740 = vsel %vm4736, %v4738, %v4739
        %v4741 = vrot.slane %v4702, 6
        %v4742 = vrot.slane %v4741, 4
        %v4743 = vrot.slane %v4712, 6
        %v4744 = vsel %vm4736, %v4742, %v4743
        %v4745 = vrot.slane %v4703, 6
        %v4746 = vrot.slane %v4745, 4
        %v4747 = vrot.slane %v4713, 6
        %v4748 = vsel %vm4736, %v4746, %v4747
        %v4749 = vrot.slane %v4704, 6
        %v4750 = vrot.slane %v4749, 4
        %v4751 = vrot.slane %v4714, 6
        %v4752 = vsel %vm4736, %v4750, %v4751
        %v4754 = vcombine.high %v4705, %v4705
        %v4755 = vrot.slane %v4705, 5
        %v4756 = vrot.slane %v4755, 4
        %v4757 = vrot.slane %v4754, 5
        %v4758 = vsel %vm4717, %v4756, %v4757
        %v4759 = vrot.slane %v4705, 6
        %v4760 = vrot.slane %v4759, 4
        %v4761 = vrot.slane %v4754, 6
        %v4762 = vsel %vm4736, %v4760, %v4761
        %v4764 = vcombine.high %v4706, %v4706
        %v4765 = vrot.slane %v4706, 5
        %v4766 = vrot.slane %v4765, 4
        %v4767 = vrot.slane %v4764, 5
        %v4768 = vsel %vm4717, %v4766, %v4767
        %v4769 = vrot.slane %v4706, 6
        %v4770 = vrot.slane %v4769, 4
        %v4771 = vrot.slane %v4764, 6
        %v4772 = vsel %vm4736, %v4770, %v4771
        %v4773 = vcombine.low %v4701, %v4702
        %v4774 = vcombine.low %v4703, %v4704
        %v4777 = vcombine.low %v4721, %v4725
        %v4778 = vcombine.low %v4729, %v4733
        %4779 = vrot.lane.b32.xlu0 %v4777, 32
        %v4780 = vpop.permute.xlu0 %4779
        %4781 = vrot.lane.b32.xlu0 %v4778, 32
        %v4782 = vpop.permute.xlu0 %4781
        %v4785 = vcombine.low %v4740, %v4744
        %v4786 = vcombine.low %v4748, %v4752
        %4787 = vrot.lane.b32.xlu0 %v4785, 64
        %v4788 = vpop.permute.xlu0 %4787
        %4789 = vrot.lane.b32.xlu0 %v4786, 64
        %v4790 = vpop.permute.xlu0 %4789
        %v4793 = vcombine.low %v4702, %v4703
        %v4794 = vcombine.low %v4704, %v4705
        %4795 = vrot.lane.b32.xlu0 %v4793, 96
        %v4796 = vpop.permute.xlu0 %4795
        %4797 = vrot.lane.b32.xlu0 %v4794, 96
        %v4798 = vpop.permute.xlu0 %4797
        %v4801 = vcombine.low %v4725, %v4729
        %v4802 = vcombine.low %v4733, %v4758
        %v4805 = vcombine.low %v4744, %v4748
        %v4806 = vcombine.low %v4752, %v4762
        %4807 = vrot.lane.b32.xlu0 %v4805, 32
        %v4808 = vpop.permute.xlu0 %4807
        %4809 = vrot.lane.b32.xlu0 %v4806, 32
        %v4810 = vpop.permute.xlu0 %4809
        %v4813 = vcombine.low %v4705, %v4706
        %4814 = vrot.lane.b32.xlu0 %v4774, 64
        %v4815 = vpop.permute.xlu0 %4814
        %4816 = vrot.lane.b32.xlu0 %v4813, 64
        %v4817 = vpop.permute.xlu0 %4816
        %v4820 = vcombine.low %v4758, %v4768
        %4821 = vrot.lane.b32.xlu0 %v4778, 96
        %v4822 = vpop.permute.xlu0 %4821
        %4823 = vrot.lane.b32.xlu0 %v4820, 96
        %v4824 = vpop.permute.xlu0 %4823
        %v4827 = vcombine.low %v4762, %v4772
        %v4828 = vsel %vm1555, %v4773, %v4780
        %v4829 = vsel %vm1555, %v4774, %v4782
        %v4830 = vsel %vm1687, %v4828, %v4788
        %v4831 = vsel %vm1687, %v4829, %v4790
        %v4832 = vsel %vm4100, %v4830, %v4796
        %v4833 = vsel %vm4100, %v4831, %v4798
        %v4834 = vsel %vm1555, %v4801, %v4808
        %v4835 = vsel %vm1555, %v4802, %v4810
        %v4836 = vsel %vm1687, %v4834, %v4815
        %v4837 = vsel %vm1687, %v4835, %v4817
        %v4838 = vsel %vm4100, %v4836, %v4822
        %v4839 = vsel %vm4100, %v4837, %v4824
        %v4840 = vld [vmem:[%s5] sm:$0xff]
        %v4841 = vld [vmem:[%s5 + $0x8] sm:$0xff]
        %v4842 = vld [vmem:[%s5 + $0x10] sm:$0xff]
        %v4843 = vld [vmem:[%s5 + $0x18] sm:$0xff]
        %v4844 = vld [vmem:[%s5 + $0x20] sm:$0xff]
        %v4845 = vld [vmem:[%s5 + $0x28] sm:$0xff]
        %v4846 = vld [vmem:[%s5 + $0x30] sm:$0xff]
        %v4847 = vld [vmem:[%s5 + $0x38] sm:$0xff]
        %v4848 = vld [vmem:[%s5 + $0x40] sm:$0xff]
        %v4849 = vld [vmem:[%s5 + $0x48] sm:$0xff]
        %v4850 = vld [vmem:[%s5 + $0x50] sm:$0xff]
        %v4851 = vld [vmem:[%s5 + $0x58] sm:$0xff]
        %v4852 = vld [vmem:[%s5 + $0x60] sm:$0xff]
        %v4853 = vld [vmem:[%s5 + $0x68] sm:$0xff]
        %v4854 = vld [vmem:[%s5 + $0x70] sm:$0xff]
        %v4855 = vld [vmem:[%s5 + $0x78] sm:$0xff]
        %v4856 = vld [vmem:[%s5 + $0x80] sm:$0xff]
        %v4857 = vld [vmem:[%s5 + $0x88] sm:$0xff]
        %v4858 = vld [vmem:[%s5 + $0x90] sm:$0xff]
        %v4859 = vld [vmem:[%s5 + $0x98] sm:$0xff]
        %v4860 = vld [vmem:[%s5 + $0xa0] sm:$0xff]
        %v4861 = vld [vmem:[%s5 + $0xa8] sm:$0xff]
        %v4862 = vld [vmem:[%s5 + $0xb0] sm:$0xff]
        %v4863 = vld [vmem:[%s5 + $0xb8] sm:$0xff]
        %v4864 = vld [vmem:[%s5 + $0xc0] sm:$0xff]
        %v4865 = vld [vmem:[%s5 + $0xc8] sm:$0xff]
        %v4866 = vld [vmem:[%s5 + $0xd0] sm:$0xff]
        %v4867 = vld [vmem:[%s5 + $0xd8] sm:$0xff]
        %v4868 = vld [vmem:[%s5 + $0xe0] sm:$0xff]
        %v4869 = vld [vmem:[%s5 + $0xe8] sm:$0xff]
        %v4870 = vld [vmem:[%s5 + $0xf0] sm:$0xff]
        %v4871 = vld [vmem:[%s5 + $0xf8] sm:$0xff]
        %v4872 = vld [vmem:[%s5 + $0x100] sm:$0xff]
        %v4873 = vld [vmem:[%s5 + $0x108] sm:$0xff]
        %v4874 = vld [vmem:[%s5 + $0x110] sm:$0xff]
        %v4875 = vld [vmem:[%s5 + $0x118] sm:$0xff]
        %v4876 = vld [vmem:[%s6] sm:$0x1]
        %v4878 = vlaneseq
        %v4879 = vshrl.u32 %v4878, 7
        %v4880 = vsub.s32 0, %v4879
        %v4881 = vrot.slane %v4876, %v4880
        %v4883 = vsel %vm1555, %v4786, 0
        %v4885 = vsel %vm1555, %v4827, 0
        %4887 = vmatprep.subr.mxu0 0.0
        %4888 = vmatpush1.msra.mxu0 %v4855
        %4889 = vmatprep.subr.mxu0 0.0
        %4890 = vmatpush1.msra.mxu0 %v4854
        %4891 = vmatprep.subr.mxu0 0.0
        %4892 = vmatpush1.msra.mxu0 %v4853
        %4893 = vmatprep.subr.mxu0 0.0
        %4894 = vmatpush1.msra.mxu0 %v4852
        %4895 = vmatprep.subr.mxu0 0.0
        %4896 = vmatpush1.msra.mxu0 %v4851
        %4897 = vmatprep.subr.mxu0 0.0
        %4898 = vmatpush1.msra.mxu0 %v4850
        %4899 = vmatprep.subr.mxu0 0.0
        %4900 = vmatpush1.msra.mxu0 %v4849
        %4901 = vmatprep.subr.mxu0 0.0
        %4902 = vmatpush1.msra.mxu0 %v4848
        %4903 = vmatprep.subr.mxu0 0.0
        %4904 = vmatpush1.msra.mxu0 %v4847
        %4905 = vmatprep.subr.mxu0 0.0
        %4906 = vmatpush1.msra.mxu0 %v4846
        %4907 = vmatprep.subr.mxu0 0.0
        %4908 = vmatpush1.msra.mxu0 %v4845
        %4909 = vmatprep.subr.mxu0 0.0
        %4910 = vmatpush1.msra.mxu0 %v4844
        %4911 = vmatprep.subr.mxu0 0.0
        %4912 = vmatpush1.msra.mxu0 %v4843
        %4913 = vmatprep.subr.mxu0 0.0
        %4914 = vmatpush1.msra.mxu0 %v4842
        %4915 = vmatprep.subr.mxu0 0.0
        %4916 = vmatpush1.msra.mxu0 %v4841
        %4917 = vmatprep.subr.mxu0 0.0
        %4918 = vmatpush1.msra.mxu0 %v4840
        %4919 = vmatprep.subr.mxu0 0.0
        %4920 = vmatpush2.msra.mxu0 %v4871
        %4921 = vmatprep.subr.mxu0 0.0
        %4922 = vmatpush2.msra.mxu0 %v4870
        %4923 = vmatprep.subr.mxu0 0.0
        %4924 = vmatpush2.msra.mxu0 %v4869
        %4925 = vmatprep.subr.mxu0 0.0
        %4926 = vmatpush2.msra.mxu0 %v4868
        %4927 = vmatprep.subr.mxu0 0.0
        %4928 = vmatpush2.msra.mxu0 %v4867
        %4929 = vmatprep.subr.mxu0 0.0
        %4930 = vmatpush2.msra.mxu0 %v4866
        %4931 = vmatprep.subr.mxu0 0.0
        %4932 = vmatpush2.msra.mxu0 %v4865
        %4933 = vmatprep.subr.mxu0 0.0
        %4934 = vmatpush2.msra.mxu0 %v4864
        %4935 = vmatprep.subr.mxu0 0.0
        %4936 = vmatpush2.msra.mxu0 %v4863
        %4937 = vmatprep.subr.mxu0 0.0
        %4938 = vmatpush2.msra.mxu0 %v4862
        %4939 = vmatprep.subr.mxu0 0.0
        %4940 = vmatpush2.msra.mxu0 %v4861
        %4941 = vmatprep.subr.mxu0 0.0
        %4942 = vmatpush2.msra.mxu0 %v4860
        %4943 = vmatprep.subr.mxu0 0.0
        %4944 = vmatpush2.msra.mxu0 %v4859
        %4945 = vmatprep.subr.mxu0 0.0
        %4946 = vmatpush2.msra.mxu0 %v4858
        %4947 = vmatprep.subr.mxu0 0.0
        %4948 = vmatpush2.msra.mxu0 %v4857
        %4949 = vmatprep.subr.mxu0 0.0
        %4950 = vmatpush2.msra.mxu0 %v4856
        %4951 = vmatprep.mubr.f32.mxu0 %v4838
        %4952 = vmatmul.mubr.f32.gmra.mxu0 %v4832
        %v4953 = vpop.f32.mrf.mxu0
        %v4954 = vadd.f32 %v4881, %v4953
        %v4955 = vpop.f32.mrf.mxu0
        %4956 = vmatprep.mubr.f32.mxu0 %v4839
        %4957 = vmatmul.mubr.f32.gmra.mxu0 %v4833
        %v4958 = vpop.f32.mrf.mxu0
        %v4959 = vadd.f32 %v4881, %v4958
        %v4960 = vpop.f32.mrf.mxu0
        %4961 = vdwg.mxu0
        %4962 = vmatprep.subr.mxu0 0.0
        %4963 = vmatpush1.msra.mxu0 0.0
        %4964 = vmatprep.subr.mxu0 0.0
        %4965 = vmatpush1.msra.mxu0 0.0
        %4966 = vmatprep.subr.mxu0 0.0
        %4967 = vmatpush1.msra.mxu0 0.0
        %4968 = vmatprep.subr.mxu0 0.0
        %4969 = vmatpush1.msra.mxu0 0.0
        %4970 = vmatprep.subr.mxu0 0.0
        %4971 = vmatpush1.msra.mxu0 0.0
        %4972 = vmatprep.subr.mxu0 0.0
        %4973 = vmatpush1.msra.mxu0 0.0
        %4974 = vmatprep.subr.mxu0 0.0
        %4975 = vmatpush1.msra.mxu0 0.0
        %4976 = vmatprep.subr.mxu0 0.0
        %4977 = vmatpush1.msra.mxu0 0.0
        %4978 = vmatprep.subr.mxu0 0.0
        %4979 = vmatpush1.msra.mxu0 0.0
        %4980 = vmatprep.subr.mxu0 0.0
        %4981 = vmatpush1.msra.mxu0 0.0
        %4982 = vmatprep.subr.mxu0 0.0
        %4983 = vmatpush1.msra.mxu0 0.0
        %4984 = vmatprep.subr.mxu0 0.0
        %4985 = vmatpush1.msra.mxu0 0.0
        %4986 = vmatprep.subr.mxu0 0.0
        %4987 = vmatpush1.msra.mxu0 %v4875
        %4988 = vmatprep.subr.mxu0 0.0
        %4989 = vmatpush1.msra.mxu0 %v4874
        %4990 = vmatprep.subr.mxu0 0.0
        %4991 = vmatpush1.msra.mxu0 %v4873
        %4992 = vmatprep.subr.mxu0 0.0
        %4993 = vmatpush1.msra.mxu0 %v4872
        %4994 = vmatprep.subr.mxu0 0.0
        %4995 = vmatpush2.msra.mxu0 0.0
        %4996 = vmatprep.subr.mxu0 0.0
        %4997 = vmatpush2.msra.mxu0 0.0
        %4998 = vmatprep.subr.mxu0 0.0
        %4999 = vmatpush2.msra.mxu0 0.0
        %5000 = vmatprep.subr.mxu0 0.0
        %5001 = vmatpush2.msra.mxu0 0.0
        %5002 = vmatprep.subr.mxu0 0.0
        %5003 = vmatpush2.msra.mxu0 0.0
        %5004 = vmatprep.subr.mxu0 0.0
        %5005 = vmatpush2.msra.mxu0 0.0
        %5006 = vmatprep.subr.mxu0 0.0
        %5007 = vmatpush2.msra.mxu0 0.0
        %5008 = vmatprep.subr.mxu0 0.0
        %5009 = vmatpush2.msra.mxu0 0.0
        %5010 = vmatprep.subr.mxu0 0.0
        %5011 = vmatpush2.msra.mxu0 0.0
        %5012 = vmatprep.subr.mxu0 0.0
        %5013 = vmatpush2.msra.mxu0 0.0
        %5014 = vmatprep.subr.mxu0 0.0
        %5015 = vmatpush2.msra.mxu0 0.0
        %5016 = vmatprep.subr.mxu0 0.0
        %5017 = vmatpush2.msra.mxu0 0.0
        %5018 = vmatprep.subr.mxu0 0.0
        %5019 = vmatpush2.msra.mxu0 0.0
        %5020 = vmatprep.subr.mxu0 0.0
        %5021 = vmatpush2.msra.mxu0 0.0
        %5022 = vmatprep.subr.mxu0 0.0
        %5023 = vmatpush2.msra.mxu0 0.0
        %5024 = vmatprep.subr.mxu0 0.0
        %5025 = vmatpush2.msra.mxu0 0.0
        %5026 = vmatprep.mubr.f32.mxu0 0.0
        %5027 = vmatmul.mubr.f32.gmra.mxu0 %v4883
        %v5028 = vpop.f32.mrf.mxu0
        %v5029 = vadd.f32 %v4954, %v5028
        %v5030 = vpop.f32.mrf.mxu0
        %5031 = vmatprep.mubr.f32.mxu0 0.0
        %5032 = vmatmul.mubr.f32.gmra.mxu0 %v4885
        %v5033 = vpop.f32.mrf.mxu0
        %v5034 = vadd.f32 %v4959, %v5033
        %v5035 = vpop.f32.mrf.mxu0
        %5036 = vdwg.mxu0
        %v5037 = vmax.f32 %v5029, 0.0
        %v5038 = vmax.f32 %v5034, 0.0
        %5039 = vst [vmem:[%s271] sm:$0xff] %v5037
        %5040 = vst [vmem:[%s271 + $0x8] sm:$0xff] %v5038
        %s5041 = sand.u32 %s181, 1
        %s5042 = scalar_lea.sflag [#allocation6], %s5041
        %s5043 = sand.u32 %s181, 1
        %s5044 = smul.addr %s5043, 16
        %s5045 = scalar_lea.vmem [#allocation5], %s5044
        // Predicated region
        $region49: #{tpu_custom_call.1} parent=47 // pred_check
          %p5046 = pneg %p191
        $region50: #{tpu_custom_call.1} parent=47 // pred_check_branch
          %5048 = sbr.rel (%p5046) target = $region52
        $region51: #{tpu_custom_call.1} parent=47 // pred_region
          %s5050 = ssub.s32 256, 256
          %5051 = vsyncadd %s5042, %s5050
          %s5052 = smul.addr %s21, 2
          %s5053 = smul.addr %s5052, 128
          %s5054 = scalar_lea.hbm %s7, %s5053
          %s5055 = sshll.u32 %s5045, 4
          %s5056 = int_to_ptr.vmem [resolvable:$true] %s5055
          %5061 = dma.vmem_to_hbm [thread:$0]  %s5056, 256, %s5054, %s5042, 128, 128, 8
        $region52: #{tpu_custom_call.1} parent=47 // pred_fallthru
          _
      $region48: #{tpu_custom_call.1} parent=5 // pred_fallthru
        _
      %p5062 = scmp.le.s32.totalorder 2, %s16
      // Predicated region
      $region53: #{tpu_custom_call.1} parent=5 // pred_check
        %p5063 = pneg %p5062
      $region54: #{tpu_custom_call.1} parent=5 // pred_check_branch
        %5065 = sbr.rel (%p5063) target = $region56
      $region55: #{tpu_custom_call.1} parent=5 // pred_region
        %s5066 = ssub.s32 %s16, 2
        // Predicated region
        $region57: #{tpu_custom_call.1} parent=55 // pred_check
          %p5067 = pneg %p197
        $region58: #{tpu_custom_call.1} parent=55 // pred_check_branch
          %5069 = sbr.rel (%p5067) target = $region60
        $region59: #{tpu_custom_call.1} parent=55 // pred_region
          %s5070 = sand.u32 %s182, 1
          %s5071 = scalar_lea.sflag [#allocation6], %s5070
          %s5072 = sand.u32 %s182, 1
          %s5073 = smul.addr %s5072, 16
          %s5074 = scalar_lea.vmem [#allocation5], %s5073
          %5075 = dma.done %s5071, 256
        $region60: #{tpu_custom_call.1} parent=55 // pred_fallthru
          _
      $region56: #{tpu_custom_call.1} parent=5 // pred_fallthru
        _
    $region6: #{tpu_custom_call.1} parent=1 // loop_footer
      %s20 = sadd.s32 1, %s16
    $region7: #{tpu_custom_call.1} parent=1 // loop_footer_branch
      %15 = sbr.rel target = $region3
    $region8: #{tpu_custom_call.1} parent=1 // loop_exit
      _
    %5076 = vsyncpa [#allocation6], 1
    %s5077 = scalar_lea.sflag [#allocation6], 1
    %5078 = vsyncpa %s5077, 1

</llo_original>
